<compile_context>
chip_gen: v7x
topology: tpu7x:2x2x1
jax: 0.10.0
libtpu: 0.0.40
codegen_flags: <defaults>
</compile_context>

<pallas_src>
import jax
import jax.numpy as jnp
from jax import lax
from jax.experimental import pallas as pl
from jax.experimental.pallas import tpu as pltpu

HIDDEN_SIZE = 128
INPUT_SIZE = 3
NUM_LAYERS = 2
OUTPUT_SIZE = 3

LANE = 128      # lane-padded FC output width
IN_PAD = 8      # input feature dim padded to one sublane group
BATCH_PAD = 8   # batch padded to full sublanes (unmasked tiles / stores)


def _lstm_kernel(x_ref,      # (Bp, T, IN_PAD)  f32   zero-padded input
                 wih0_ref,   # (IN_PAD, 4H)     f32   layer-0 input weights (transposed, padded)
                 b0_ref,     # (1, 4H)          f32   layer-0 bias (b_ih + b_hh)
                 whh0_ref,   # (H, 4H)          bf16  layer-0 recurrent weights (transposed)
                 w1cat_ref,  # (2H, 4H)         bf16  layer-1 fused [W_ih^T ; W_hh^T]
                 b1_ref,     # (1, 4H)          f32   layer-1 bias (b_ih + b_hh)
                 fcw_ref,    # (H, LANE)        bf16  fc weight (transposed, zero-padded)
                 fcb_ref,    # (1, LANE)        f32   fc bias (zero-padded)
                 out_ref):   # (Bp, LANE)       f32   padded output
    Bp = x_ref.shape[0]
    T = x_ref.shape[1]
    H = whh0_ref.shape[0]

    def gates_to_hc(gates, c_prev):
        # PyTorch gate layout along the 4H axis: [i | f | g | o]
        # i and f share one sigmoid call on the contiguous first 2H lanes.
        sif = jax.nn.sigmoid(gates[:, :2 * H])
        i = sif[:, :H]
        f = sif[:, H:]
        g = jnp.tanh(gates[:, 2 * H:3 * H])
        o = jax.nn.sigmoid(gates[:, 3 * H:])
        c_new = f * c_prev + i * g
        h_new = o * jnp.tanh(c_new)
        return h_new, c_new

    zeros = jnp.zeros((Bp, H), jnp.float32)   # PyTorch default h0/c0 = 0
    h0, c0, h1, c1 = zeros, zeros, zeros, zeros

    # T is static and tiny -> fully unrolled; state lives in vregs.
    # Weights / biases are read from their refs at point of use (no hoisted live ranges).
    for t in range(T):
        x_t = x_ref[:, t, :]                                          # (Bp, IN_PAD) f32
        # layer 0: tiny K=8 input projection (f32) + K=128 recurrent matmul (bf16 weights)
        gates0 = (jnp.dot(x_t, wih0_ref[...],
                          preferred_element_type=jnp.float32)
                  + jnp.dot(h0.astype(jnp.bfloat16), whh0_ref[...],
                            preferred_element_type=jnp.float32)
                  + b0_ref[...])
        h0, c0 = gates_to_hc(gates0, c0)

        # dropout(p=0.2) between layers is identity at inference time

        # layer 1: single fused K=2H=256 contraction over [h0 | h1]
        hcat = jnp.concatenate([h0, h1], axis=-1).astype(jnp.bfloat16)  # (Bp, 2H)
        gates1 = (jnp.dot(hcat, w1cat_ref[...],
                          preferred_element_type=jnp.float32)
                  + b1_ref[...])
        h1, c1 = gates_to_hc(gates1, c1)

    # fc head on the last timestep's top-layer hidden state; (Bp, 128) unmasked store
    out_ref[...] = (jnp.dot(h1.astype(jnp.bfloat16), fcw_ref[...],
                            preferred_element_type=jnp.float32)
                    + fcb_ref[...]).astype(out_ref.dtype)


def pack_params(params):
    """One-time weight packing (keep OUT of the per-inference path)."""
    H, I, O = HIDDEN_SIZE, INPUT_SIZE, OUTPUT_SIZE
    wih0 = jnp.zeros((IN_PAD, 4 * H), jnp.float32).at[:I, :].set(params["w_ih_l0"].T)
    b0 = (params["b_ih_l0"] + params["b_hh_l0"]).reshape(1, 4 * H).astype(jnp.float32)
    whh0 = params["w_hh_l0"].T.astype(jnp.bfloat16)                     # (H, 4H)
    # layer-1 fused weight: gates1 = [h0 | h1] @ [W_ih^T ; W_hh^T] + b1
    w1cat = jnp.concatenate([params["w_ih_l1"].T, params["w_hh_l1"].T],
                            axis=0).astype(jnp.bfloat16)                # (2H, 4H)
    b1 = (params["b_ih_l1"] + params["b_hh_l1"]).reshape(1, 4 * H).astype(jnp.float32)
    fcw = (jnp.zeros((H, LANE), jnp.float32)
           .at[:, :O].set(params["fc_w"].T)).astype(jnp.bfloat16)       # (H, LANE)
    fcb = jnp.zeros((1, LANE), jnp.float32).at[:, :O].set(params["fc_b"].reshape(1, O))
    return {"wih0": wih0, "b0": b0, "whh0": whh0, "w1cat": w1cat,
            "b1": b1, "fcw": fcw, "fcb": fcb}


@jax.jit
def lstm_model_forward(x, packed):
    """x: (batch, seq, input_size) float32 -> (batch, output_size) float32."""
    B, T, I = x.shape
    Bp = max(BATCH_PAD, ((B + 7) // 8) * 8)

    # Only per-call prep: zero-pad batch/feature dims to full (8, 8)-aligned tiles.
    x_pad = jnp.zeros((Bp, T, IN_PAD), jnp.float32).at[:B, :, :I].set(x)

    vmem = pl.BlockSpec(memory_space=pltpu.MemorySpace.VMEM)
    out_pad = pl.pallas_call(
        _lstm_kernel,
        out_shape=jax.ShapeDtypeStruct((Bp, LANE), jnp.float32),
        in_specs=[vmem] * 8,
        out_specs=vmem,
    )(x_pad, packed["wih0"], packed["b0"], packed["whh0"], packed["w1cat"],
      packed["b1"], packed["fcw"], packed["fcb"])
    return out_pad[:B, :OUTPUT_SIZE]


def _reference_forward(x, params):
    """Pure-JAX f32 reference matching torch.nn.LSTM + Linear semantics."""
    B, T, I = x.shape
    H = HIDDEN_SIZE

    def run_layer(inp_seq, w_ih, w_hh, b_ih, b_hh):
        h = jnp.zeros((B, H), jnp.float32)
        c = jnp.zeros((B, H), jnp.float32)

        def step(carry, x_t):
            h, c = carry
            gates = x_t @ w_ih.T + b_ih + h @ w_hh.T + b_hh
            i = jax.nn.sigmoid(gates[:, 0 * H:1 * H])
            f = jax.nn.sigmoid(gates[:, 1 * H:2 * H])
            g = jnp.tanh(gates[:, 2 * H:3 * H])
            o = jax.nn.sigmoid(gates[:, 3 * H:4 * H])
            c = f * c + i * g
            h = o * jnp.tanh(c)
            return (h, c), h

        (_, _), hs = lax.scan(step, (h, c), jnp.transpose(inp_seq, (1, 0, 2)))
        return jnp.transpose(hs, (1, 0, 2))  # (B, T, H)

    out0 = run_layer(x, params["w_ih_l0"], params["w_hh_l0"],
                     params["b_ih_l0"], params["b_hh_l0"])
    out1 = run_layer(out0, params["w_ih_l1"], params["w_hh_l1"],
                     params["b_ih_l1"], params["b_hh_l1"])
    return out1[:, -1, :] @ params["fc_w"].T + params["fc_b"]


def _init_params(key):
    """Deterministic init, same shapes as torch.nn.LSTM / nn.Linear defaults."""
    H, I, O = HIDDEN_SIZE, INPUT_SIZE, OUTPUT_SIZE
    k = 1.0 / jnp.sqrt(jnp.float32(H))
    keys = jax.random.split(key, 10)
    u = lambda kk, shape: jax.random.uniform(kk, shape, jnp.float32, -k, k)
    return {
        "w_ih_l0": u(keys[0], (4 * H, I)),
        "w_hh_l0": u(keys[1], (4 * H, H)),
        "b_ih_l0": u(keys[2], (4 * H,)),
        "b_hh_l0": u(keys[3], (4 * H,)),
        "w_ih_l1": u(keys[4], (4 * H, H)),
        "w_hh_l1": u(keys[5], (4 * H, H)),
        "b_ih_l1": u(keys[6], (4 * H,)),
        "b_hh_l1": u(keys[7], (4 * H,)),
        "fc_w": u(keys[8], (O, H)),
        "fc_b": u(keys[9], (O,)),
    }


if __name__ == "__main__":
    key = jax.random.PRNGKey(0)
    pkey, xkey = jax.random.split(key)
    params = _init_params(pkey)
    packed = jax.tree_util.tree_map(jax.block_until_ready, pack_params(params))

    batch, seq = 2, 8
    x = jax.random.normal(xkey, (batch, seq, INPUT_SIZE), jnp.float32)

    out = lstm_model_forward(x, packed)
    out = jax.block_until_ready(out)

    ref = _reference_forward(x, params)
    assert out.shape == (batch, OUTPUT_SIZE), out.shape
    # bf16 recurrent weights -> relaxed tolerance vs. the f32 reference
    assert jnp.allclose(out, ref, rtol=1e-2, atol=1e-2), (out, ref)

    print("KERNEL_OK")
</pallas_src>

<mosaic_0001>
module attributes {stable_mosaic.version = 11 : i64} {
  func.func @_lstm_kernel(%arg0: memref<8x8x8xf32, #tpu.memory_space<vmem>>, %arg1: memref<8x512xf32, #tpu.memory_space<vmem>>, %arg2: memref<1x512xf32, #tpu.memory_space<vmem>>, %arg3: memref<128x512xbf16, #tpu.memory_space<vmem>>, %arg4: memref<256x512xbf16, #tpu.memory_space<vmem>>, %arg5: memref<1x512xf32, #tpu.memory_space<vmem>>, %arg6: memref<128x128xbf16, #tpu.memory_space<vmem>>, %arg7: memref<1x128xf32, #tpu.memory_space<vmem>>, %arg8: memref<8x128xf32, #tpu.memory_space<vmem>>) attributes {dimension_semantics = [], scalar_prefetch = 0 : i64, scratch_operands = 0 : i64, tpu.core_type = #tpu.core_type<tc>} {
    %cst = arith.constant 0.000000e+00 : f32
    %0 = vector.broadcast %cst : f32 to vector<8x128xf32>
    %c0 = arith.constant 0 : index
    %c0_0 = arith.constant 0 : index
    %c0_1 = arith.constant 0 : index
    %1 = vector.load %arg0[%c0, %c0_0, %c0_1] : memref<8x8x8xf32, #tpu.memory_space<vmem>>, vector<8x1x8xf32>
    %2 = vector.shape_cast %1 : vector<8x1x8xf32> to vector<8x8xf32>
    %c0_2 = arith.constant 0 : index
    %c0_3 = arith.constant 0 : index
    %3 = vector.load %arg1[%c0_2, %c0_3] : memref<8x512xf32, #tpu.memory_space<vmem>>, vector<8x512xf32>
    %cst_4 = arith.constant dense<0.000000e+00> : vector<8x512xf32>
    %4 = tpu.matmul %2, %3, %cst_4 {dimension_numbers = #tpu.dot_dimension_numbers<[1], [0], [0], [1], [0, 0, 1, 1], [], []>} : vector<8x8xf32>, vector<8x512xf32>, vector<8x512xf32> -> vector<8x512xf32>
    %5 = arith.truncf %0 : vector<8x128xf32> to vector<8x128xbf16>
    %c0_5 = arith.constant 0 : index
    %c0_6 = arith.constant 0 : index
    %6 = vector.load %arg3[%c0_5, %c0_6] : memref<128x512xbf16, #tpu.memory_space<vmem>>, vector<128x512xbf16>
    %cst_7 = arith.constant dense<0.000000e+00> : vector<8x512xf32>
    %7 = tpu.matmul %5, %6, %cst_7 {dimension_numbers = #tpu.dot_dimension_numbers<[1], [0], [0], [1], [0, 0, 1, 1], [], []>} : vector<8x128xbf16>, vector<128x512xbf16>, vector<8x512xf32> -> vector<8x512xf32>
    %8 = arith.addf %4, %7 : vector<8x512xf32>
    %c0_8 = arith.constant 0 : index
    %c0_9 = arith.constant 0 : index
    %9 = vector.load %arg2[%c0_8, %c0_9] : memref<1x512xf32, #tpu.memory_space<vmem>>, vector<1x512xf32>
    %10 = vector.broadcast %9 : vector<1x512xf32> to vector<8x512xf32>
    %11 = arith.addf %8, %10 : vector<8x512xf32>
    %12 = vector.extract_strided_slice %11 {offsets = [0, 0], sizes = [8, 256], strides = [1, 1]} : vector<8x512xf32> to vector<8x256xf32>
    %13 = arith.negf %12 : vector<8x256xf32>
    %14 = math.exp %13 : vector<8x256xf32>
    %cst_10 = arith.constant 1.000000e+00 : f32
    %15 = vector.broadcast %cst_10 : f32 to vector<8x256xf32>
    %16 = arith.addf %15, %14 : vector<8x256xf32>
    %17 = arith.divf %15, %16 : vector<8x256xf32>
    %18 = vector.extract_strided_slice %17 {offsets = [0, 0], sizes = [8, 128], strides = [1, 1]} : vector<8x256xf32> to vector<8x128xf32>
    %19 = vector.extract_strided_slice %17 {offsets = [0, 128], sizes = [8, 128], strides = [1, 1]} : vector<8x256xf32> to vector<8x128xf32>
    %20 = vector.extract_strided_slice %11 {offsets = [0, 256], sizes = [8, 128], strides = [1, 1]} : vector<8x512xf32> to vector<8x128xf32>
    %21 = math.tanh %20 : vector<8x128xf32>
    %22 = vector.extract_strided_slice %11 {offsets = [0, 384], sizes = [8, 128], strides = [1, 1]} : vector<8x512xf32> to vector<8x128xf32>
    %23 = arith.negf %22 : vector<8x128xf32>
    %24 = math.exp %23 : vector<8x128xf32>
    %cst_11 = arith.constant 1.000000e+00 : f32
    %25 = vector.broadcast %cst_11 : f32 to vector<8x128xf32>
    %26 = arith.addf %25, %24 : vector<8x128xf32>
    %27 = arith.divf %25, %26 : vector<8x128xf32>
    %28 = arith.mulf %19, %0 : vector<8x128xf32>
    %29 = arith.mulf %18, %21 : vector<8x128xf32>
    %30 = arith.addf %28, %29 : vector<8x128xf32>
    %31 = math.tanh %30 : vector<8x128xf32>
    %32 = arith.mulf %27, %31 : vector<8x128xf32>
    %33 = tpu.concatenate %32, %0 in 1 : vector<8x128xf32>, vector<8x128xf32> -> vector<8x256xf32>
    %34 = arith.truncf %33 : vector<8x256xf32> to vector<8x256xbf16>
    %c0_12 = arith.constant 0 : index
    %c0_13 = arith.constant 0 : index
    %35 = vector.load %arg4[%c0_12, %c0_13] : memref<256x512xbf16, #tpu.memory_space<vmem>>, vector<256x512xbf16>
    %cst_14 = arith.constant dense<0.000000e+00> : vector<8x512xf32>
    %36 = tpu.matmul %34, %35, %cst_14 {dimension_numbers = #tpu.dot_dimension_numbers<[1], [0], [0], [1], [0, 0, 1, 1], [], []>} : vector<8x256xbf16>, vector<256x512xbf16>, vector<8x512xf32> -> vector<8x512xf32>
    %c0_15 = arith.constant 0 : index
    %c0_16 = arith.constant 0 : index
    %37 = vector.load %arg5[%c0_15, %c0_16] : memref<1x512xf32, #tpu.memory_space<vmem>>, vector<1x512xf32>
    %38 = vector.broadcast %37 : vector<1x512xf32> to vector<8x512xf32>
    %39 = arith.addf %36, %38 : vector<8x512xf32>
    %40 = vector.extract_strided_slice %39 {offsets = [0, 0], sizes = [8, 256], strides = [1, 1]} : vector<8x512xf32> to vector<8x256xf32>
    %41 = arith.negf %40 : vector<8x256xf32>
    %42 = math.exp %41 : vector<8x256xf32>
    %cst_17 = arith.constant 1.000000e+00 : f32
    %43 = vector.broadcast %cst_17 : f32 to vector<8x256xf32>
    %44 = arith.addf %43, %42 : vector<8x256xf32>
    %45 = arith.divf %43, %44 : vector<8x256xf32>
    %46 = vector.extract_strided_slice %45 {offsets = [0, 0], sizes = [8, 128], strides = [1, 1]} : vector<8x256xf32> to vector<8x128xf32>
    %47 = vector.extract_strided_slice %45 {offsets = [0, 128], sizes = [8, 128], strides = [1, 1]} : vector<8x256xf32> to vector<8x128xf32>
    %48 = vector.extract_strided_slice %39 {offsets = [0, 256], sizes = [8, 128], strides = [1, 1]} : vector<8x512xf32> to vector<8x128xf32>
    %49 = math.tanh %48 : vector<8x128xf32>
    %50 = vector.extract_strided_slice %39 {offsets = [0, 384], sizes = [8, 128], strides = [1, 1]} : vector<8x512xf32> to vector<8x128xf32>
    %51 = arith.negf %50 : vector<8x128xf32>
    %52 = math.exp %51 : vector<8x128xf32>
    %cst_18 = arith.constant 1.000000e+00 : f32
    %53 = vector.broadcast %cst_18 : f32 to vector<8x128xf32>
    %54 = arith.addf %53, %52 : vector<8x128xf32>
    %55 = arith.divf %53, %54 : vector<8x128xf32>
    %56 = arith.mulf %47, %0 : vector<8x128xf32>
    %57 = arith.mulf %46, %49 : vector<8x128xf32>
    %58 = arith.addf %56, %57 : vector<8x128xf32>
    %59 = math.tanh %58 : vector<8x128xf32>
    %60 = arith.mulf %55, %59 : vector<8x128xf32>
    %c0_19 = arith.constant 0 : index
    %c1 = arith.constant 1 : index
    %c0_20 = arith.constant 0 : index
    %61 = vector.load %arg0[%c0_19, %c1, %c0_20] : memref<8x8x8xf32, #tpu.memory_space<vmem>>, vector<8x1x8xf32>
    %62 = vector.shape_cast %61 : vector<8x1x8xf32> to vector<8x8xf32>
    %c0_21 = arith.constant 0 : index
    %c0_22 = arith.constant 0 : index
    %63 = vector.load %arg1[%c0_21, %c0_22] : memref<8x512xf32, #tpu.memory_space<vmem>>, vector<8x512xf32>
    %cst_23 = arith.constant dense<0.000000e+00> : vector<8x512xf32>
    %64 = tpu.matmul %62, %63, %cst_23 {dimension_numbers = #tpu.dot_dimension_numbers<[1], [0], [0], [1], [0, 0, 1, 1], [], []>} : vector<8x8xf32>, vector<8x512xf32>, vector<8x512xf32> -> vector<8x512xf32>
    %65 = arith.truncf %32 : vector<8x128xf32> to vector<8x128xbf16>
    %c0_24 = arith.constant 0 : index
    %c0_25 = arith.constant 0 : index
    %66 = vector.load %arg3[%c0_24, %c0_25] : memref<128x512xbf16, #tpu.memory_space<vmem>>, vector<128x512xbf16>
    %cst_26 = arith.constant dense<0.000000e+00> : vector<8x512xf32>
    %67 = tpu.matmul %65, %66, %cst_26 {dimension_numbers = #tpu.dot_dimension_numbers<[1], [0], [0], [1], [0, 0, 1, 1], [], []>} : vector<8x128xbf16>, vector<128x512xbf16>, vector<8x512xf32> -> vector<8x512xf32>
    %68 = arith.addf %64, %67 : vector<8x512xf32>
    %c0_27 = arith.constant 0 : index
    %c0_28 = arith.constant 0 : index
    %69 = vector.load %arg2[%c0_27, %c0_28] : memref<1x512xf32, #tpu.memory_space<vmem>>, vector<1x512xf32>
    %70 = vector.broadcast %69 : vector<1x512xf32> to vector<8x512xf32>
    %71 = arith.addf %68, %70 : vector<8x512xf32>
    %72 = vector.extract_strided_slice %71 {offsets = [0, 0], sizes = [8, 256], strides = [1, 1]} : vector<8x512xf32> to vector<8x256xf32>
    %73 = arith.negf %72 : vector<8x256xf32>
    %74 = math.exp %73 : vector<8x256xf32>
    %cst_29 = arith.constant 1.000000e+00 : f32
    %75 = vector.broadcast %cst_29 : f32 to vector<8x256xf32>
    %76 = arith.addf %75, %74 : vector<8x256xf32>
    %77 = arith.divf %75, %76 : vector<8x256xf32>
    %78 = vector.extract_strided_slice %77 {offsets = [0, 0], sizes = [8, 128], strides = [1, 1]} : vector<8x256xf32> to vector<8x128xf32>
    %79 = vector.extract_strided_slice %77 {offsets = [0, 128], sizes = [8, 128], strides = [1, 1]} : vector<8x256xf32> to vector<8x128xf32>
    %80 = vector.extract_strided_slice %71 {offsets = [0, 256], sizes = [8, 128], strides = [1, 1]} : vector<8x512xf32> to vector<8x128xf32>
    %81 = math.tanh %80 : vector<8x128xf32>
    %82 = vector.extract_strided_slice %71 {offsets = [0, 384], sizes = [8, 128], strides = [1, 1]} : vector<8x512xf32> to vector<8x128xf32>
    %83 = arith.negf %82 : vector<8x128xf32>
    %84 = math.exp %83 : vector<8x128xf32>
    %cst_30 = arith.constant 1.000000e+00 : f32
    %85 = vector.broadcast %cst_30 : f32 to vector<8x128xf32>
    %86 = arith.addf %85, %84 : vector<8x128xf32>
    %87 = arith.divf %85, %86 : vector<8x128xf32>
    %88 = arith.mulf %79, %30 : vector<8x128xf32>
    %89 = arith.mulf %78, %81 : vector<8x128xf32>
    %90 = arith.addf %88, %89 : vector<8x128xf32>
    %91 = math.tanh %90 : vector<8x128xf32>
    %92 = arith.mulf %87, %91 : vector<8x128xf32>
    %93 = tpu.concatenate %92, %60 in 1 : vector<8x128xf32>, vector<8x128xf32> -> vector<8x256xf32>
    %94 = arith.truncf %93 : vector<8x256xf32> to vector<8x256xbf16>
    %c0_31 = arith.constant 0 : index
    %c0_32 = arith.constant 0 : index
    %95 = vector.load %arg4[%c0_31, %c0_32] : memref<256x512xbf16, #tpu.memory_space<vmem>>, vector<256x512xbf16>
    %cst_33 = arith.constant dense<0.000000e+00> : vector<8x512xf32>
    %96 = tpu.matmul %94, %95, %cst_33 {dimension_numbers = #tpu.dot_dimension_numbers<[1], [0], [0], [1], [0, 0, 1, 1], [], []>} : vector<8x256xbf16>, vector<256x512xbf16>, vector<8x512xf32> -> vector<8x512xf32>
    %c0_34 = arith.constant 0 : index
    %c0_35 = arith.constant 0 : index
    %97 = vector.load %arg5[%c0_34, %c0_35] : memref<1x512xf32, #tpu.memory_space<vmem>>, vector<1x512xf32>
    %98 = vector.broadcast %97 : vector<1x512xf32> to vector<8x512xf32>
    %99 = arith.addf %96, %98 : vector<8x512xf32>
    %100 = vector.extract_strided_slice %99 {offsets = [0, 0], sizes = [8, 256], strides = [1, 1]} : vector<8x512xf32> to vector<8x256xf32>
    %101 = arith.negf %100 : vector<8x256xf32>
    %102 = math.exp %101 : vector<8x256xf32>
    %cst_36 = arith.constant 1.000000e+00 : f32
    %103 = vector.broadcast %cst_36 : f32 to vector<8x256xf32>
    %104 = arith.addf %103, %102 : vector<8x256xf32>
    %105 = arith.divf %103, %104 : vector<8x256xf32>
    %106 = vector.extract_strided_slice %105 {offsets = [0, 0], sizes = [8, 128], strides = [1, 1]} : vector<8x256xf32> to vector<8x128xf32>
    %107 = vector.extract_strided_slice %105 {offsets = [0, 128], sizes = [8, 128], strides = [1, 1]} : vector<8x256xf32> to vector<8x128xf32>
    %108 = vector.extract_strided_slice %99 {offsets = [0, 256], sizes = [8, 128], strides = [1, 1]} : vector<8x512xf32> to vector<8x128xf32>
    %109 = math.tanh %108 : vector<8x128xf32>
    %110 = vector.extract_strided_slice %99 {offsets = [0, 384], sizes = [8, 128], strides = [1, 1]} : vector<8x512xf32> to vector<8x128xf32>
    %111 = arith.negf %110 : vector<8x128xf32>
    %112 = math.exp %111 : vector<8x128xf32>
    %cst_37 = arith.constant 1.000000e+00 : f32
    %113 = vector.broadcast %cst_37 : f32 to vector<8x128xf32>
    %114 = arith.addf %113, %112 : vector<8x128xf32>
    %115 = arith.divf %113, %114 : vector<8x128xf32>
    %116 = arith.mulf %107, %58 : vector<8x128xf32>
    %117 = arith.mulf %106, %109 : vector<8x128xf32>
    %118 = arith.addf %116, %117 : vector<8x128xf32>
    %119 = math.tanh %118 : vector<8x128xf32>
    %120 = arith.mulf %115, %119 : vector<8x128xf32>
    %c0_38 = arith.constant 0 : index
    %c2 = arith.constant 2 : index
    %c0_39 = arith.constant 0 : index
    %121 = vector.load %arg0[%c0_38, %c2, %c0_39] : memref<8x8x8xf32, #tpu.memory_space<vmem>>, vector<8x1x8xf32>
    %122 = vector.shape_cast %121 : vector<8x1x8xf32> to vector<8x8xf32>
    %c0_40 = arith.constant 0 : index
    %c0_41 = arith.constant 0 : index
    %123 = vector.load %arg1[%c0_40, %c0_41] : memref<8x512xf32, #tpu.memory_space<vmem>>, vector<8x512xf32>
    %cst_42 = arith.constant dense<0.000000e+00> : vector<8x512xf32>
    %124 = tpu.matmul %122, %123, %cst_42 {dimension_numbers = #tpu.dot_dimension_numbers<[1], [0], [0], [1], [0, 0, 1, 1], [], []>} : vector<8x8xf32>, vector<8x512xf32>, vector<8x512xf32> -> vector<8x512xf32>
    %125 = arith.truncf %92 : vector<8x128xf32> to vector<8x128xbf16>
    %c0_43 = arith.constant 0 : index
    %c0_44 = arith.constant 0 : index
    %126 = vector.load %arg3[%c0_43, %c0_44] : memref<128x512xbf16, #tpu.memory_space<vmem>>, vector<128x512xbf16>
    %cst_45 = arith.constant dense<0.000000e+00> : vector<8x512xf32>
    %127 = tpu.matmul %125, %126, %cst_45 {dimension_numbers = #tpu.dot_dimension_numbers<[1], [0], [0], [1], [0, 0, 1, 1], [], []>} : vector<8x128xbf16>, vector<128x512xbf16>, vector<8x512xf32> -> vector<8x512xf32>
    %128 = arith.addf %124, %127 : vector<8x512xf32>
    %c0_46 = arith.constant 0 : index
    %c0_47 = arith.constant 0 : index
    %129 = vector.load %arg2[%c0_46, %c0_47] : memref<1x512xf32, #tpu.memory_space<vmem>>, vector<1x512xf32>
    %130 = vector.broadcast %129 : vector<1x512xf32> to vector<8x512xf32>
    %131 = arith.addf %128, %130 : vector<8x512xf32>
    %132 = vector.extract_strided_slice %131 {offsets = [0, 0], sizes = [8, 256], strides = [1, 1]} : vector<8x512xf32> to vector<8x256xf32>
    %133 = arith.negf %132 : vector<8x256xf32>
    %134 = math.exp %133 : vector<8x256xf32>
    %cst_48 = arith.constant 1.000000e+00 : f32
    %135 = vector.broadcast %cst_48 : f32 to vector<8x256xf32>
    %136 = arith.addf %135, %134 : vector<8x256xf32>
    %137 = arith.divf %135, %136 : vector<8x256xf32>
    %138 = vector.extract_strided_slice %137 {offsets = [0, 0], sizes = [8, 128], strides = [1, 1]} : vector<8x256xf32> to vector<8x128xf32>
    %139 = vector.extract_strided_slice %137 {offsets = [0, 128], sizes = [8, 128], strides = [1, 1]} : vector<8x256xf32> to vector<8x128xf32>
    %140 = vector.extract_strided_slice %131 {offsets = [0, 256], sizes = [8, 128], strides = [1, 1]} : vector<8x512xf32> to vector<8x128xf32>
    %141 = math.tanh %140 : vector<8x128xf32>
    %142 = vector.extract_strided_slice %131 {offsets = [0, 384], sizes = [8, 128], strides = [1, 1]} : vector<8x512xf32> to vector<8x128xf32>
    %143 = arith.negf %142 : vector<8x128xf32>
    %144 = math.exp %143 : vector<8x128xf32>
    %cst_49 = arith.constant 1.000000e+00 : f32
    %145 = vector.broadcast %cst_49 : f32 to vector<8x128xf32>
    %146 = arith.addf %145, %144 : vector<8x128xf32>
    %147 = arith.divf %145, %146 : vector<8x128xf32>
    %148 = arith.mulf %139, %90 : vector<8x128xf32>
    %149 = arith.mulf %138, %141 : vector<8x128xf32>
    %150 = arith.addf %148, %149 : vector<8x128xf32>
    %151 = math.tanh %150 : vector<8x128xf32>
    %152 = arith.mulf %147, %151 : vector<8x128xf32>
    %153 = tpu.concatenate %152, %120 in 1 : vector<8x128xf32>, vector<8x128xf32> -> vector<8x256xf32>
    %154 = arith.truncf %153 : vector<8x256xf32> to vector<8x256xbf16>
    %c0_50 = arith.constant 0 : index
    %c0_51 = arith.constant 0 : index
    %155 = vector.load %arg4[%c0_50, %c0_51] : memref<256x512xbf16, #tpu.memory_space<vmem>>, vector<256x512xbf16>
    %cst_52 = arith.constant dense<0.000000e+00> : vector<8x512xf32>
    %156 = tpu.matmul %154, %155, %cst_52 {dimension_numbers = #tpu.dot_dimension_numbers<[1], [0], [0], [1], [0, 0, 1, 1], [], []>} : vector<8x256xbf16>, vector<256x512xbf16>, vector<8x512xf32> -> vector<8x512xf32>
    %c0_53 = arith.constant 0 : index
    %c0_54 = arith.constant 0 : index
    %157 = vector.load %arg5[%c0_53, %c0_54] : memref<1x512xf32, #tpu.memory_space<vmem>>, vector<1x512xf32>
    %158 = vector.broadcast %157 : vector<1x512xf32> to vector<8x512xf32>
    %159 = arith.addf %156, %158 : vector<8x512xf32>
    %160 = vector.extract_strided_slice %159 {offsets = [0, 0], sizes = [8, 256], strides = [1, 1]} : vector<8x512xf32> to vector<8x256xf32>
    %161 = arith.negf %160 : vector<8x256xf32>
    %162 = math.exp %161 : vector<8x256xf32>
    %cst_55 = arith.constant 1.000000e+00 : f32
    %163 = vector.broadcast %cst_55 : f32 to vector<8x256xf32>
    %164 = arith.addf %163, %162 : vector<8x256xf32>
    %165 = arith.divf %163, %164 : vector<8x256xf32>
    %166 = vector.extract_strided_slice %165 {offsets = [0, 0], sizes = [8, 128], strides = [1, 1]} : vector<8x256xf32> to vector<8x128xf32>
    %167 = vector.extract_strided_slice %165 {offsets = [0, 128], sizes = [8, 128], strides = [1, 1]} : vector<8x256xf32> to vector<8x128xf32>
    %168 = vector.extract_strided_slice %159 {offsets = [0, 256], sizes = [8, 128], strides = [1, 1]} : vector<8x512xf32> to vector<8x128xf32>
    %169 = math.tanh %168 : vector<8x128xf32>
    %170 = vector.extract_strided_slice %159 {offsets = [0, 384], sizes = [8, 128], strides = [1, 1]} : vector<8x512xf32> to vector<8x128xf32>
    %171 = arith.negf %170 : vector<8x128xf32>
    %172 = math.exp %171 : vector<8x128xf32>
    %cst_56 = arith.constant 1.000000e+00 : f32
    %173 = vector.broadcast %cst_56 : f32 to vector<8x128xf32>
    %174 = arith.addf %173, %172 : vector<8x128xf32>
    %175 = arith.divf %173, %174 : vector<8x128xf32>
    %176 = arith.mulf %167, %118 : vector<8x128xf32>
    %177 = arith.mulf %166, %169 : vector<8x128xf32>
    %178 = arith.addf %176, %177 : vector<8x128xf32>
    %179 = math.tanh %178 : vector<8x128xf32>
    %180 = arith.mulf %175, %179 : vector<8x128xf32>
    %c0_57 = arith.constant 0 : index
    %c3 = arith.constant 3 : index
    %c0_58 = arith.constant 0 : index
    %181 = vector.load %arg0[%c0_57, %c3, %c0_58] : memref<8x8x8xf32, #tpu.memory_space<vmem>>, vector<8x1x8xf32>
    %182 = vector.shape_cast %181 : vector<8x1x8xf32> to vector<8x8xf32>
    %c0_59 = arith.constant 0 : index
    %c0_60 = arith.constant 0 : index
    %183 = vector.load %arg1[%c0_59, %c0_60] : memref<8x512xf32, #tpu.memory_space<vmem>>, vector<8x512xf32>
    %cst_61 = arith.constant dense<0.000000e+00> : vector<8x512xf32>
    %184 = tpu.matmul %182, %183, %cst_61 {dimension_numbers = #tpu.dot_dimension_numbers<[1], [0], [0], [1], [0, 0, 1, 1], [], []>} : vector<8x8xf32>, vector<8x512xf32>, vector<8x512xf32> -> vector<8x512xf32>
    %185 = arith.truncf %152 : vector<8x128xf32> to vector<8x128xbf16>
    %c0_62 = arith.constant 0 : index
    %c0_63 = arith.constant 0 : index
    %186 = vector.load %arg3[%c0_62, %c0_63] : memref<128x512xbf16, #tpu.memory_space<vmem>>, vector<128x512xbf16>
    %cst_64 = arith.constant dense<0.000000e+00> : vector<8x512xf32>
    %187 = tpu.matmul %185, %186, %cst_64 {dimension_numbers = #tpu.dot_dimension_numbers<[1], [0], [0], [1], [0, 0, 1, 1], [], []>} : vector<8x128xbf16>, vector<128x512xbf16>, vector<8x512xf32> -> vector<8x512xf32>
    %188 = arith.addf %184, %187 : vector<8x512xf32>
    %c0_65 = arith.constant 0 : index
    %c0_66 = arith.constant 0 : index
    %189 = vector.load %arg2[%c0_65, %c0_66] : memref<1x512xf32, #tpu.memory_space<vmem>>, vector<1x512xf32>
    %190 = vector.broadcast %189 : vector<1x512xf32> to vector<8x512xf32>
    %191 = arith.addf %188, %190 : vector<8x512xf32>
    %192 = vector.extract_strided_slice %191 {offsets = [0, 0], sizes = [8, 256], strides = [1, 1]} : vector<8x512xf32> to vector<8x256xf32>
    %193 = arith.negf %192 : vector<8x256xf32>
    %194 = math.exp %193 : vector<8x256xf32>
    %cst_67 = arith.constant 1.000000e+00 : f32
    %195 = vector.broadcast %cst_67 : f32 to vector<8x256xf32>
    %196 = arith.addf %195, %194 : vector<8x256xf32>
    %197 = arith.divf %195, %196 : vector<8x256xf32>
    %198 = vector.extract_strided_slice %197 {offsets = [0, 0], sizes = [8, 128], strides = [1, 1]} : vector<8x256xf32> to vector<8x128xf32>
    %199 = vector.extract_strided_slice %197 {offsets = [0, 128], sizes = [8, 128], strides = [1, 1]} : vector<8x256xf32> to vector<8x128xf32>
    %200 = vector.extract_strided_slice %191 {offsets = [0, 256], sizes = [8, 128], strides = [1, 1]} : vector<8x512xf32> to vector<8x128xf32>
    %201 = math.tanh %200 : vector<8x128xf32>
    %202 = vector.extract_strided_slice %191 {offsets = [0, 384], sizes = [8, 128], strides = [1, 1]} : vector<8x512xf32> to vector<8x128xf32>
    %203 = arith.negf %202 : vector<8x128xf32>
    %204 = math.exp %203 : vector<8x128xf32>
    %cst_68 = arith.constant 1.000000e+00 : f32
    %205 = vector.broadcast %cst_68 : f32 to vector<8x128xf32>
    %206 = arith.addf %205, %204 : vector<8x128xf32>
    %207 = arith.divf %205, %206 : vector<8x128xf32>
    %208 = arith.mulf %199, %150 : vector<8x128xf32>
    %209 = arith.mulf %198, %201 : vector<8x128xf32>
    %210 = arith.addf %208, %209 : vector<8x128xf32>
    %211 = math.tanh %210 : vector<8x128xf32>
    %212 = arith.mulf %207, %211 : vector<8x128xf32>
    %213 = tpu.concatenate %212, %180 in 1 : vector<8x128xf32>, vector<8x128xf32> -> vector<8x256xf32>
    %214 = arith.truncf %213 : vector<8x256xf32> to vector<8x256xbf16>
    %c0_69 = arith.constant 0 : index
    %c0_70 = arith.constant 0 : index
    %215 = vector.load %arg4[%c0_69, %c0_70] : memref<256x512xbf16, #tpu.memory_space<vmem>>, vector<256x512xbf16>
    %cst_71 = arith.constant dense<0.000000e+00> : vector<8x512xf32>
    %216 = tpu.matmul %214, %215, %cst_71 {dimension_numbers = #tpu.dot_dimension_numbers<[1], [0], [0], [1], [0, 0, 1, 1], [], []>} : vector<8x256xbf16>, vector<256x512xbf16>, vector<8x512xf32> -> vector<8x512xf32>
    %c0_72 = arith.constant 0 : index
    %c0_73 = arith.constant 0 : index
    %217 = vector.load %arg5[%c0_72, %c0_73] : memref<1x512xf32, #tpu.memory_space<vmem>>, vector<1x512xf32>
    %218 = vector.broadcast %217 : vector<1x512xf32> to vector<8x512xf32>
    %219 = arith.addf %216, %218 : vector<8x512xf32>
    %220 = vector.extract_strided_slice %219 {offsets = [0, 0], sizes = [8, 256], strides = [1, 1]} : vector<8x512xf32> to vector<8x256xf32>
    %221 = arith.negf %220 : vector<8x256xf32>
    %222 = math.exp %221 : vector<8x256xf32>
    %cst_74 = arith.constant 1.000000e+00 : f32
    %223 = vector.broadcast %cst_74 : f32 to vector<8x256xf32>
    %224 = arith.addf %223, %222 : vector<8x256xf32>
    %225 = arith.divf %223, %224 : vector<8x256xf32>
    %226 = vector.extract_strided_slice %225 {offsets = [0, 0], sizes = [8, 128], strides = [1, 1]} : vector<8x256xf32> to vector<8x128xf32>
    %227 = vector.extract_strided_slice %225 {offsets = [0, 128], sizes = [8, 128], strides = [1, 1]} : vector<8x256xf32> to vector<8x128xf32>
    %228 = vector.extract_strided_slice %219 {offsets = [0, 256], sizes = [8, 128], strides = [1, 1]} : vector<8x512xf32> to vector<8x128xf32>
    %229 = math.tanh %228 : vector<8x128xf32>
    %230 = vector.extract_strided_slice %219 {offsets = [0, 384], sizes = [8, 128], strides = [1, 1]} : vector<8x512xf32> to vector<8x128xf32>
    %231 = arith.negf %230 : vector<8x128xf32>
    %232 = math.exp %231 : vector<8x128xf32>
    %cst_75 = arith.constant 1.000000e+00 : f32
    %233 = vector.broadcast %cst_75 : f32 to vector<8x128xf32>
    %234 = arith.addf %233, %232 : vector<8x128xf32>
    %235 = arith.divf %233, %234 : vector<8x128xf32>
    %236 = arith.mulf %227, %178 : vector<8x128xf32>
    %237 = arith.mulf %226, %229 : vector<8x128xf32>
    %238 = arith.addf %236, %237 : vector<8x128xf32>
    %239 = math.tanh %238 : vector<8x128xf32>
    %240 = arith.mulf %235, %239 : vector<8x128xf32>
    %c0_76 = arith.constant 0 : index
    %c4 = arith.constant 4 : index
    %c0_77 = arith.constant 0 : index
    %241 = vector.load %arg0[%c0_76, %c4, %c0_77] : memref<8x8x8xf32, #tpu.memory_space<vmem>>, vector<8x1x8xf32>
    %242 = vector.shape_cast %241 : vector<8x1x8xf32> to vector<8x8xf32>
    %c0_78 = arith.constant 0 : index
    %c0_79 = arith.constant 0 : index
    %243 = vector.load %arg1[%c0_78, %c0_79] : memref<8x512xf32, #tpu.memory_space<vmem>>, vector<8x512xf32>
    %cst_80 = arith.constant dense<0.000000e+00> : vector<8x512xf32>
    %244 = tpu.matmul %242, %243, %cst_80 {dimension_numbers = #tpu.dot_dimension_numbers<[1], [0], [0], [1], [0, 0, 1, 1], [], []>} : vector<8x8xf32>, vector<8x512xf32>, vector<8x512xf32> -> vector<8x512xf32>
    %245 = arith.truncf %212 : vector<8x128xf32> to vector<8x128xbf16>
    %c0_81 = arith.constant 0 : index
    %c0_82 = arith.constant 0 : index
    %246 = vector.load %arg3[%c0_81, %c0_82] : memref<128x512xbf16, #tpu.memory_space<vmem>>, vector<128x512xbf16>
    %cst_83 = arith.constant dense<0.000000e+00> : vector<8x512xf32>
    %247 = tpu.matmul %245, %246, %cst_83 {dimension_numbers = #tpu.dot_dimension_numbers<[1], [0], [0], [1], [0, 0, 1, 1], [], []>} : vector<8x128xbf16>, vector<128x512xbf16>, vector<8x512xf32> -> vector<8x512xf32>
    %248 = arith.addf %244, %247 : vector<8x512xf32>
    %c0_84 = arith.constant 0 : index
    %c0_85 = arith.constant 0 : index
    %249 = vector.load %arg2[%c0_84, %c0_85] : memref<1x512xf32, #tpu.memory_space<vmem>>, vector<1x512xf32>
    %250 = vector.broadcast %249 : vector<1x512xf32> to vector<8x512xf32>
    %251 = arith.addf %248, %250 : vector<8x512xf32>
    %252 = vector.extract_strided_slice %251 {offsets = [0, 0], sizes = [8, 256], strides = [1, 1]} : vector<8x512xf32> to vector<8x256xf32>
    %253 = arith.negf %252 : vector<8x256xf32>
    %254 = math.exp %253 : vector<8x256xf32>
    %cst_86 = arith.constant 1.000000e+00 : f32
    %255 = vector.broadcast %cst_86 : f32 to vector<8x256xf32>
    %256 = arith.addf %255, %254 : vector<8x256xf32>
    %257 = arith.divf %255, %256 : vector<8x256xf32>
    %258 = vector.extract_strided_slice %257 {offsets = [0, 0], sizes = [8, 128], strides = [1, 1]} : vector<8x256xf32> to vector<8x128xf32>
    %259 = vector.extract_strided_slice %257 {offsets = [0, 128], sizes = [8, 128], strides = [1, 1]} : vector<8x256xf32> to vector<8x128xf32>
    %260 = vector.extract_strided_slice %251 {offsets = [0, 256], sizes = [8, 128], strides = [1, 1]} : vector<8x512xf32> to vector<8x128xf32>
    %261 = math.tanh %260 : vector<8x128xf32>
    %262 = vector.extract_strided_slice %251 {offsets = [0, 384], sizes = [8, 128], strides = [1, 1]} : vector<8x512xf32> to vector<8x128xf32>
    %263 = arith.negf %262 : vector<8x128xf32>
    %264 = math.exp %263 : vector<8x128xf32>
    %cst_87 = arith.constant 1.000000e+00 : f32
    %265 = vector.broadcast %cst_87 : f32 to vector<8x128xf32>
    %266 = arith.addf %265, %264 : vector<8x128xf32>
    %267 = arith.divf %265, %266 : vector<8x128xf32>
    %268 = arith.mulf %259, %210 : vector<8x128xf32>
    %269 = arith.mulf %258, %261 : vector<8x128xf32>
    %270 = arith.addf %268, %269 : vector<8x128xf32>
    %271 = math.tanh %270 : vector<8x128xf32>
    %272 = arith.mulf %267, %271 : vector<8x128xf32>
    %273 = tpu.concatenate %272, %240 in 1 : vector<8x128xf32>, vector<8x128xf32> -> vector<8x256xf32>
    %274 = arith.truncf %273 : vector<8x256xf32> to vector<8x256xbf16>
    %c0_88 = arith.constant 0 : index
    %c0_89 = arith.constant 0 : index
    %275 = vector.load %arg4[%c0_88, %c0_89] : memref<256x512xbf16, #tpu.memory_space<vmem>>, vector<256x512xbf16>
    %cst_90 = arith.constant dense<0.000000e+00> : vector<8x512xf32>
    %276 = tpu.matmul %274, %275, %cst_90 {dimension_numbers = #tpu.dot_dimension_numbers<[1], [0], [0], [1], [0, 0, 1, 1], [], []>} : vector<8x256xbf16>, vector<256x512xbf16>, vector<8x512xf32> -> vector<8x512xf32>
    %c0_91 = arith.constant 0 : index
    %c0_92 = arith.constant 0 : index
    %277 = vector.load %arg5[%c0_91, %c0_92] : memref<1x512xf32, #tpu.memory_space<vmem>>, vector<1x512xf32>
    %278 = vector.broadcast %277 : vector<1x512xf32> to vector<8x512xf32>
    %279 = arith.addf %276, %278 : vector<8x512xf32>
    %280 = vector.extract_strided_slice %279 {offsets = [0, 0], sizes = [8, 256], strides = [1, 1]} : vector<8x512xf32> to vector<8x256xf32>
    %281 = arith.negf %280 : vector<8x256xf32>
    %282 = math.exp %281 : vector<8x256xf32>
    %cst_93 = arith.constant 1.000000e+00 : f32
    %283 = vector.broadcast %cst_93 : f32 to vector<8x256xf32>
    %284 = arith.addf %283, %282 : vector<8x256xf32>
    %285 = arith.divf %283, %284 : vector<8x256xf32>
    %286 = vector.extract_strided_slice %285 {offsets = [0, 0], sizes = [8, 128], strides = [1, 1]} : vector<8x256xf32> to vector<8x128xf32>
    %287 = vector.extract_strided_slice %285 {offsets = [0, 128], sizes = [8, 128], strides = [1, 1]} : vector<8x256xf32> to vector<8x128xf32>
    %288 = vector.extract_strided_slice %279 {offsets = [0, 256], sizes = [8, 128], strides = [1, 1]} : vector<8x512xf32> to vector<8x128xf32>
    %289 = math.tanh %288 : vector<8x128xf32>
    %290 = vector.extract_strided_slice %279 {offsets = [0, 384], sizes = [8, 128], strides = [1, 1]} : vector<8x512xf32> to vector<8x128xf32>
    %291 = arith.negf %290 : vector<8x128xf32>
    %292 = math.exp %291 : vector<8x128xf32>
    %cst_94 = arith.constant 1.000000e+00 : f32
    %293 = vector.broadcast %cst_94 : f32 to vector<8x128xf32>
    %294 = arith.addf %293, %292 : vector<8x128xf32>
    %295 = arith.divf %293, %294 : vector<8x128xf32>
    %296 = arith.mulf %287, %238 : vector<8x128xf32>
    %297 = arith.mulf %286, %289 : vector<8x128xf32>
    %298 = arith.addf %296, %297 : vector<8x128xf32>
    %299 = math.tanh %298 : vector<8x128xf32>
    %300 = arith.mulf %295, %299 : vector<8x128xf32>
    %c0_95 = arith.constant 0 : index
    %c5 = arith.constant 5 : index
    %c0_96 = arith.constant 0 : index
    %301 = vector.load %arg0[%c0_95, %c5, %c0_96] : memref<8x8x8xf32, #tpu.memory_space<vmem>>, vector<8x1x8xf32>
    %302 = vector.shape_cast %301 : vector<8x1x8xf32> to vector<8x8xf32>
    %c0_97 = arith.constant 0 : index
    %c0_98 = arith.constant 0 : index
    %303 = vector.load %arg1[%c0_97, %c0_98] : memref<8x512xf32, #tpu.memory_space<vmem>>, vector<8x512xf32>
    %cst_99 = arith.constant dense<0.000000e+00> : vector<8x512xf32>
    %304 = tpu.matmul %302, %303, %cst_99 {dimension_numbers = #tpu.dot_dimension_numbers<[1], [0], [0], [1], [0, 0, 1, 1], [], []>} : vector<8x8xf32>, vector<8x512xf32>, vector<8x512xf32> -> vector<8x512xf32>
    %305 = arith.truncf %272 : vector<8x128xf32> to vector<8x128xbf16>
    %c0_100 = arith.constant 0 : index
    %c0_101 = arith.constant 0 : index
    %306 = vector.load %arg3[%c0_100, %c0_101] : memref<128x512xbf16, #tpu.memory_space<vmem>>, vector<128x512xbf16>
    %cst_102 = arith.constant dense<0.000000e+00> : vector<8x512xf32>
    %307 = tpu.matmul %305, %306, %cst_102 {dimension_numbers = #tpu.dot_dimension_numbers<[1], [0], [0], [1], [0, 0, 1, 1], [], []>} : vector<8x128xbf16>, vector<128x512xbf16>, vector<8x512xf32> -> vector<8x512xf32>
    %308 = arith.addf %304, %307 : vector<8x512xf32>
    %c0_103 = arith.constant 0 : index
    %c0_104 = arith.constant 0 : index
    %309 = vector.load %arg2[%c0_103, %c0_104] : memref<1x512xf32, #tpu.memory_space<vmem>>, vector<1x512xf32>
    %310 = vector.broadcast %309 : vector<1x512xf32> to vector<8x512xf32>
    %311 = arith.addf %308, %310 : vector<8x512xf32>
    %312 = vector.extract_strided_slice %311 {offsets = [0, 0], sizes = [8, 256], strides = [1, 1]} : vector<8x512xf32> to vector<8x256xf32>
    %313 = arith.negf %312 : vector<8x256xf32>
    %314 = math.exp %313 : vector<8x256xf32>
    %cst_105 = arith.constant 1.000000e+00 : f32
    %315 = vector.broadcast %cst_105 : f32 to vector<8x256xf32>
    %316 = arith.addf %315, %314 : vector<8x256xf32>
    %317 = arith.divf %315, %316 : vector<8x256xf32>
    %318 = vector.extract_strided_slice %317 {offsets = [0, 0], sizes = [8, 128], strides = [1, 1]} : vector<8x256xf32> to vector<8x128xf32>
    %319 = vector.extract_strided_slice %317 {offsets = [0, 128], sizes = [8, 128], strides = [1, 1]} : vector<8x256xf32> to vector<8x128xf32>
    %320 = vector.extract_strided_slice %311 {offsets = [0, 256], sizes = [8, 128], strides = [1, 1]} : vector<8x512xf32> to vector<8x128xf32>
    %321 = math.tanh %320 : vector<8x128xf32>
    %322 = vector.extract_strided_slice %311 {offsets = [0, 384], sizes = [8, 128], strides = [1, 1]} : vector<8x512xf32> to vector<8x128xf32>
    %323 = arith.negf %322 : vector<8x128xf32>
    %324 = math.exp %323 : vector<8x128xf32>
    %cst_106 = arith.constant 1.000000e+00 : f32
    %325 = vector.broadcast %cst_106 : f32 to vector<8x128xf32>
    %326 = arith.addf %325, %324 : vector<8x128xf32>
    %327 = arith.divf %325, %326 : vector<8x128xf32>
    %328 = arith.mulf %319, %270 : vector<8x128xf32>
    %329 = arith.mulf %318, %321 : vector<8x128xf32>
    %330 = arith.addf %328, %329 : vector<8x128xf32>
    %331 = math.tanh %330 : vector<8x128xf32>
    %332 = arith.mulf %327, %331 : vector<8x128xf32>
    %333 = tpu.concatenate %332, %300 in 1 : vector<8x128xf32>, vector<8x128xf32> -> vector<8x256xf32>
    %334 = arith.truncf %333 : vector<8x256xf32> to vector<8x256xbf16>
    %c0_107 = arith.constant 0 : index
    %c0_108 = arith.constant 0 : index
    %335 = vector.load %arg4[%c0_107, %c0_108] : memref<256x512xbf16, #tpu.memory_space<vmem>>, vector<256x512xbf16>
    %cst_109 = arith.constant dense<0.000000e+00> : vector<8x512xf32>
    %336 = tpu.matmul %334, %335, %cst_109 {dimension_numbers = #tpu.dot_dimension_numbers<[1], [0], [0], [1], [0, 0, 1, 1], [], []>} : vector<8x256xbf16>, vector<256x512xbf16>, vector<8x512xf32> -> vector<8x512xf32>
    %c0_110 = arith.constant 0 : index
    %c0_111 = arith.constant 0 : index
    %337 = vector.load %arg5[%c0_110, %c0_111] : memref<1x512xf32, #tpu.memory_space<vmem>>, vector<1x512xf32>
    %338 = vector.broadcast %337 : vector<1x512xf32> to vector<8x512xf32>
    %339 = arith.addf %336, %338 : vector<8x512xf32>
    %340 = vector.extract_strided_slice %339 {offsets = [0, 0], sizes = [8, 256], strides = [1, 1]} : vector<8x512xf32> to vector<8x256xf32>
    %341 = arith.negf %340 : vector<8x256xf32>
    %342 = math.exp %341 : vector<8x256xf32>
    %cst_112 = arith.constant 1.000000e+00 : f32
    %343 = vector.broadcast %cst_112 : f32 to vector<8x256xf32>
    %344 = arith.addf %343, %342 : vector<8x256xf32>
    %345 = arith.divf %343, %344 : vector<8x256xf32>
    %346 = vector.extract_strided_slice %345 {offsets = [0, 0], sizes = [8, 128], strides = [1, 1]} : vector<8x256xf32> to vector<8x128xf32>
    %347 = vector.extract_strided_slice %345 {offsets = [0, 128], sizes = [8, 128], strides = [1, 1]} : vector<8x256xf32> to vector<8x128xf32>
    %348 = vector.extract_strided_slice %339 {offsets = [0, 256], sizes = [8, 128], strides = [1, 1]} : vector<8x512xf32> to vector<8x128xf32>
    %349 = math.tanh %348 : vector<8x128xf32>
    %350 = vector.extract_strided_slice %339 {offsets = [0, 384], sizes = [8, 128], strides = [1, 1]} : vector<8x512xf32> to vector<8x128xf32>
    %351 = arith.negf %350 : vector<8x128xf32>
    %352 = math.exp %351 : vector<8x128xf32>
    %cst_113 = arith.constant 1.000000e+00 : f32
    %353 = vector.broadcast %cst_113 : f32 to vector<8x128xf32>
    %354 = arith.addf %353, %352 : vector<8x128xf32>
    %355 = arith.divf %353, %354 : vector<8x128xf32>
    %356 = arith.mulf %347, %298 : vector<8x128xf32>
    %357 = arith.mulf %346, %349 : vector<8x128xf32>
    %358 = arith.addf %356, %357 : vector<8x128xf32>
    %359 = math.tanh %358 : vector<8x128xf32>
    %360 = arith.mulf %355, %359 : vector<8x128xf32>
    %c0_114 = arith.constant 0 : index
    %c6 = arith.constant 6 : index
    %c0_115 = arith.constant 0 : index
    %361 = vector.load %arg0[%c0_114, %c6, %c0_115] : memref<8x8x8xf32, #tpu.memory_space<vmem>>, vector<8x1x8xf32>
    %362 = vector.shape_cast %361 : vector<8x1x8xf32> to vector<8x8xf32>
    %c0_116 = arith.constant 0 : index
    %c0_117 = arith.constant 0 : index
    %363 = vector.load %arg1[%c0_116, %c0_117] : memref<8x512xf32, #tpu.memory_space<vmem>>, vector<8x512xf32>
    %cst_118 = arith.constant dense<0.000000e+00> : vector<8x512xf32>
    %364 = tpu.matmul %362, %363, %cst_118 {dimension_numbers = #tpu.dot_dimension_numbers<[1], [0], [0], [1], [0, 0, 1, 1], [], []>} : vector<8x8xf32>, vector<8x512xf32>, vector<8x512xf32> -> vector<8x512xf32>
    %365 = arith.truncf %332 : vector<8x128xf32> to vector<8x128xbf16>
    %c0_119 = arith.constant 0 : index
    %c0_120 = arith.constant 0 : index
    %366 = vector.load %arg3[%c0_119, %c0_120] : memref<128x512xbf16, #tpu.memory_space<vmem>>, vector<128x512xbf16>
    %cst_121 = arith.constant dense<0.000000e+00> : vector<8x512xf32>
    %367 = tpu.matmul %365, %366, %cst_121 {dimension_numbers = #tpu.dot_dimension_numbers<[1], [0], [0], [1], [0, 0, 1, 1], [], []>} : vector<8x128xbf16>, vector<128x512xbf16>, vector<8x512xf32> -> vector<8x512xf32>
    %368 = arith.addf %364, %367 : vector<8x512xf32>
    %c0_122 = arith.constant 0 : index
    %c0_123 = arith.constant 0 : index
    %369 = vector.load %arg2[%c0_122, %c0_123] : memref<1x512xf32, #tpu.memory_space<vmem>>, vector<1x512xf32>
    %370 = vector.broadcast %369 : vector<1x512xf32> to vector<8x512xf32>
    %371 = arith.addf %368, %370 : vector<8x512xf32>
    %372 = vector.extract_strided_slice %371 {offsets = [0, 0], sizes = [8, 256], strides = [1, 1]} : vector<8x512xf32> to vector<8x256xf32>
    %373 = arith.negf %372 : vector<8x256xf32>
    %374 = math.exp %373 : vector<8x256xf32>
    %cst_124 = arith.constant 1.000000e+00 : f32
    %375 = vector.broadcast %cst_124 : f32 to vector<8x256xf32>
    %376 = arith.addf %375, %374 : vector<8x256xf32>
    %377 = arith.divf %375, %376 : vector<8x256xf32>
    %378 = vector.extract_strided_slice %377 {offsets = [0, 0], sizes = [8, 128], strides = [1, 1]} : vector<8x256xf32> to vector<8x128xf32>
    %379 = vector.extract_strided_slice %377 {offsets = [0, 128], sizes = [8, 128], strides = [1, 1]} : vector<8x256xf32> to vector<8x128xf32>
    %380 = vector.extract_strided_slice %371 {offsets = [0, 256], sizes = [8, 128], strides = [1, 1]} : vector<8x512xf32> to vector<8x128xf32>
    %381 = math.tanh %380 : vector<8x128xf32>
    %382 = vector.extract_strided_slice %371 {offsets = [0, 384], sizes = [8, 128], strides = [1, 1]} : vector<8x512xf32> to vector<8x128xf32>
    %383 = arith.negf %382 : vector<8x128xf32>
    %384 = math.exp %383 : vector<8x128xf32>
    %cst_125 = arith.constant 1.000000e+00 : f32
    %385 = vector.broadcast %cst_125 : f32 to vector<8x128xf32>
    %386 = arith.addf %385, %384 : vector<8x128xf32>
    %387 = arith.divf %385, %386 : vector<8x128xf32>
    %388 = arith.mulf %379, %330 : vector<8x128xf32>
    %389 = arith.mulf %378, %381 : vector<8x128xf32>
    %390 = arith.addf %388, %389 : vector<8x128xf32>
    %391 = math.tanh %390 : vector<8x128xf32>
    %392 = arith.mulf %387, %391 : vector<8x128xf32>
    %393 = tpu.concatenate %392, %360 in 1 : vector<8x128xf32>, vector<8x128xf32> -> vector<8x256xf32>
    %394 = arith.truncf %393 : vector<8x256xf32> to vector<8x256xbf16>
    %c0_126 = arith.constant 0 : index
    %c0_127 = arith.constant 0 : index
    %395 = vector.load %arg4[%c0_126, %c0_127] : memref<256x512xbf16, #tpu.memory_space<vmem>>, vector<256x512xbf16>
    %cst_128 = arith.constant dense<0.000000e+00> : vector<8x512xf32>
    %396 = tpu.matmul %394, %395, %cst_128 {dimension_numbers = #tpu.dot_dimension_numbers<[1], [0], [0], [1], [0, 0, 1, 1], [], []>} : vector<8x256xbf16>, vector<256x512xbf16>, vector<8x512xf32> -> vector<8x512xf32>
    %c0_129 = arith.constant 0 : index
    %c0_130 = arith.constant 0 : index
    %397 = vector.load %arg5[%c0_129, %c0_130] : memref<1x512xf32, #tpu.memory_space<vmem>>, vector<1x512xf32>
    %398 = vector.broadcast %397 : vector<1x512xf32> to vector<8x512xf32>
    %399 = arith.addf %396, %398 : vector<8x512xf32>
    %400 = vector.extract_strided_slice %399 {offsets = [0, 0], sizes = [8, 256], strides = [1, 1]} : vector<8x512xf32> to vector<8x256xf32>
    %401 = arith.negf %400 : vector<8x256xf32>
    %402 = math.exp %401 : vector<8x256xf32>
    %cst_131 = arith.constant 1.000000e+00 : f32
    %403 = vector.broadcast %cst_131 : f32 to vector<8x256xf32>
    %404 = arith.addf %403, %402 : vector<8x256xf32>
    %405 = arith.divf %403, %404 : vector<8x256xf32>
    %406 = vector.extract_strided_slice %405 {offsets = [0, 0], sizes = [8, 128], strides = [1, 1]} : vector<8x256xf32> to vector<8x128xf32>
    %407 = vector.extract_strided_slice %405 {offsets = [0, 128], sizes = [8, 128], strides = [1, 1]} : vector<8x256xf32> to vector<8x128xf32>
    %408 = vector.extract_strided_slice %399 {offsets = [0, 256], sizes = [8, 128], strides = [1, 1]} : vector<8x512xf32> to vector<8x128xf32>
    %409 = math.tanh %408 : vector<8x128xf32>
    %410 = vector.extract_strided_slice %399 {offsets = [0, 384], sizes = [8, 128], strides = [1, 1]} : vector<8x512xf32> to vector<8x128xf32>
    %411 = arith.negf %410 : vector<8x128xf32>
    %412 = math.exp %411 : vector<8x128xf32>
    %cst_132 = arith.constant 1.000000e+00 : f32
    %413 = vector.broadcast %cst_132 : f32 to vector<8x128xf32>
    %414 = arith.addf %413, %412 : vector<8x128xf32>
    %415 = arith.divf %413, %414 : vector<8x128xf32>
    %416 = arith.mulf %407, %358 : vector<8x128xf32>
    %417 = arith.mulf %406, %409 : vector<8x128xf32>
    %418 = arith.addf %416, %417 : vector<8x128xf32>
    %419 = math.tanh %418 : vector<8x128xf32>
    %420 = arith.mulf %415, %419 : vector<8x128xf32>
    %c0_133 = arith.constant 0 : index
    %c7 = arith.constant 7 : index
    %c0_134 = arith.constant 0 : index
    %421 = vector.load %arg0[%c0_133, %c7, %c0_134] : memref<8x8x8xf32, #tpu.memory_space<vmem>>, vector<8x1x8xf32>
    %422 = vector.shape_cast %421 : vector<8x1x8xf32> to vector<8x8xf32>
    %c0_135 = arith.constant 0 : index
    %c0_136 = arith.constant 0 : index
    %423 = vector.load %arg1[%c0_135, %c0_136] : memref<8x512xf32, #tpu.memory_space<vmem>>, vector<8x512xf32>
    %cst_137 = arith.constant dense<0.000000e+00> : vector<8x512xf32>
    %424 = tpu.matmul %422, %423, %cst_137 {dimension_numbers = #tpu.dot_dimension_numbers<[1], [0], [0], [1], [0, 0, 1, 1], [], []>} : vector<8x8xf32>, vector<8x512xf32>, vector<8x512xf32> -> vector<8x512xf32>
    %425 = arith.truncf %392 : vector<8x128xf32> to vector<8x128xbf16>
    %c0_138 = arith.constant 0 : index
    %c0_139 = arith.constant 0 : index
    %426 = vector.load %arg3[%c0_138, %c0_139] : memref<128x512xbf16, #tpu.memory_space<vmem>>, vector<128x512xbf16>
    %cst_140 = arith.constant dense<0.000000e+00> : vector<8x512xf32>
    %427 = tpu.matmul %425, %426, %cst_140 {dimension_numbers = #tpu.dot_dimension_numbers<[1], [0], [0], [1], [0, 0, 1, 1], [], []>} : vector<8x128xbf16>, vector<128x512xbf16>, vector<8x512xf32> -> vector<8x512xf32>
    %428 = arith.addf %424, %427 : vector<8x512xf32>
    %c0_141 = arith.constant 0 : index
    %c0_142 = arith.constant 0 : index
    %429 = vector.load %arg2[%c0_141, %c0_142] : memref<1x512xf32, #tpu.memory_space<vmem>>, vector<1x512xf32>
    %430 = vector.broadcast %429 : vector<1x512xf32> to vector<8x512xf32>
    %431 = arith.addf %428, %430 : vector<8x512xf32>
    %432 = vector.extract_strided_slice %431 {offsets = [0, 0], sizes = [8, 256], strides = [1, 1]} : vector<8x512xf32> to vector<8x256xf32>
    %433 = arith.negf %432 : vector<8x256xf32>
    %434 = math.exp %433 : vector<8x256xf32>
    %cst_143 = arith.constant 1.000000e+00 : f32
    %435 = vector.broadcast %cst_143 : f32 to vector<8x256xf32>
    %436 = arith.addf %435, %434 : vector<8x256xf32>
    %437 = arith.divf %435, %436 : vector<8x256xf32>
    %438 = vector.extract_strided_slice %437 {offsets = [0, 0], sizes = [8, 128], strides = [1, 1]} : vector<8x256xf32> to vector<8x128xf32>
    %439 = vector.extract_strided_slice %437 {offsets = [0, 128], sizes = [8, 128], strides = [1, 1]} : vector<8x256xf32> to vector<8x128xf32>
    %440 = vector.extract_strided_slice %431 {offsets = [0, 256], sizes = [8, 128], strides = [1, 1]} : vector<8x512xf32> to vector<8x128xf32>
    %441 = math.tanh %440 : vector<8x128xf32>
    %442 = vector.extract_strided_slice %431 {offsets = [0, 384], sizes = [8, 128], strides = [1, 1]} : vector<8x512xf32> to vector<8x128xf32>
    %443 = arith.negf %442 : vector<8x128xf32>
    %444 = math.exp %443 : vector<8x128xf32>
    %cst_144 = arith.constant 1.000000e+00 : f32
    %445 = vector.broadcast %cst_144 : f32 to vector<8x128xf32>
    %446 = arith.addf %445, %444 : vector<8x128xf32>
    %447 = arith.divf %445, %446 : vector<8x128xf32>
    %448 = arith.mulf %439, %390 : vector<8x128xf32>
    %449 = arith.mulf %438, %441 : vector<8x128xf32>
    %450 = arith.addf %448, %449 : vector<8x128xf32>
    %451 = math.tanh %450 : vector<8x128xf32>
    %452 = arith.mulf %447, %451 : vector<8x128xf32>
    %453 = tpu.concatenate %452, %420 in 1 : vector<8x128xf32>, vector<8x128xf32> -> vector<8x256xf32>
    %454 = arith.truncf %453 : vector<8x256xf32> to vector<8x256xbf16>
    %c0_145 = arith.constant 0 : index
    %c0_146 = arith.constant 0 : index
    %455 = vector.load %arg4[%c0_145, %c0_146] : memref<256x512xbf16, #tpu.memory_space<vmem>>, vector<256x512xbf16>
    %cst_147 = arith.constant dense<0.000000e+00> : vector<8x512xf32>
    %456 = tpu.matmul %454, %455, %cst_147 {dimension_numbers = #tpu.dot_dimension_numbers<[1], [0], [0], [1], [0, 0, 1, 1], [], []>} : vector<8x256xbf16>, vector<256x512xbf16>, vector<8x512xf32> -> vector<8x512xf32>
    %c0_148 = arith.constant 0 : index
    %c0_149 = arith.constant 0 : index
    %457 = vector.load %arg5[%c0_148, %c0_149] : memref<1x512xf32, #tpu.memory_space<vmem>>, vector<1x512xf32>
    %458 = vector.broadcast %457 : vector<1x512xf32> to vector<8x512xf32>
    %459 = arith.addf %456, %458 : vector<8x512xf32>
    %460 = vector.extract_strided_slice %459 {offsets = [0, 0], sizes = [8, 256], strides = [1, 1]} : vector<8x512xf32> to vector<8x256xf32>
    %461 = arith.negf %460 : vector<8x256xf32>
    %462 = math.exp %461 : vector<8x256xf32>
    %cst_150 = arith.constant 1.000000e+00 : f32
    %463 = vector.broadcast %cst_150 : f32 to vector<8x256xf32>
    %464 = arith.addf %463, %462 : vector<8x256xf32>
    %465 = arith.divf %463, %464 : vector<8x256xf32>
    %466 = vector.extract_strided_slice %465 {offsets = [0, 0], sizes = [8, 128], strides = [1, 1]} : vector<8x256xf32> to vector<8x128xf32>
    %467 = vector.extract_strided_slice %465 {offsets = [0, 128], sizes = [8, 128], strides = [1, 1]} : vector<8x256xf32> to vector<8x128xf32>
    %468 = vector.extract_strided_slice %459 {offsets = [0, 256], sizes = [8, 128], strides = [1, 1]} : vector<8x512xf32> to vector<8x128xf32>
    %469 = math.tanh %468 : vector<8x128xf32>
    %470 = vector.extract_strided_slice %459 {offsets = [0, 384], sizes = [8, 128], strides = [1, 1]} : vector<8x512xf32> to vector<8x128xf32>
    %471 = arith.negf %470 : vector<8x128xf32>
    %472 = math.exp %471 : vector<8x128xf32>
    %cst_151 = arith.constant 1.000000e+00 : f32
    %473 = vector.broadcast %cst_151 : f32 to vector<8x128xf32>
    %474 = arith.addf %473, %472 : vector<8x128xf32>
    %475 = arith.divf %473, %474 : vector<8x128xf32>
    %476 = arith.mulf %467, %418 : vector<8x128xf32>
    %477 = arith.mulf %466, %469 : vector<8x128xf32>
    %478 = arith.addf %476, %477 : vector<8x128xf32>
    %479 = math.tanh %478 : vector<8x128xf32>
    %480 = arith.mulf %475, %479 : vector<8x128xf32>
    %481 = arith.truncf %480 : vector<8x128xf32> to vector<8x128xbf16>
    %c0_152 = arith.constant 0 : index
    %c0_153 = arith.constant 0 : index
    %482 = vector.load %arg6[%c0_152, %c0_153] : memref<128x128xbf16, #tpu.memory_space<vmem>>, vector<128x128xbf16>
    %cst_154 = arith.constant dense<0.000000e+00> : vector<8x128xf32>
    %483 = tpu.matmul %481, %482, %cst_154 {dimension_numbers = #tpu.dot_dimension_numbers<[1], [0], [0], [1], [0, 0, 1, 1], [], []>} : vector<8x128xbf16>, vector<128x128xbf16>, vector<8x128xf32> -> vector<8x128xf32>
    %c0_155 = arith.constant 0 : index
    %c0_156 = arith.constant 0 : index
    %484 = vector.load %arg7[%c0_155, %c0_156] : memref<1x128xf32, #tpu.memory_space<vmem>>, vector<1x128xf32>
    %485 = vector.broadcast %484 : vector<1x128xf32> to vector<8x128xf32>
    %486 = arith.addf %483, %485 : vector<8x128xf32>
    %c0_157 = arith.constant 0 : index
    %c0_158 = arith.constant 0 : index
    %487 = vector.load %arg8[%c0_157, %c0_158] : memref<8x128xf32, #tpu.memory_space<vmem>>, vector<8x128xf32>
    tpu.vector_store %arg8[%c0_157, %c0_158], %486 {strides = array<i32>} : memref<8x128xf32, #tpu.memory_space<vmem>>, vector<8x128xf32>,
    return
  }
}

</mosaic_0001>

<llo_original>
// kernel: lstm_model_forward.1
$region0: #{lstm_model_forward.1}
  #allocation0 [shape = 'u32[]', space=smem, size = 0x4, offset = 0x4, fixed_abs, tag = 'smem constant byte address 0x4 - core index']
  #allocation1 [shape = 'u32[144,128]{1,0:T(1,128)}', space=vmem, size = 0x12000, scoped, tag = 'internal scratch']
  %s0 = inlined_call_operand.vmem [shape: f32[8,8,8], index: 0, kind: input, shape index: {}]
  %s1 = inlined_call_operand.vmem [shape: f32[8,512], index: 1, kind: input, shape index: {}]
  %s2 = inlined_call_operand.vmem [shape: f32[1,512], index: 2, kind: input, shape index: {}]
  %s3 = inlined_call_operand.hbm [shape: bf16[128,512], index: 3, kind: input, shape index: {}]
  %s4 = inlined_call_operand.hbm [shape: bf16[256,512], index: 4, kind: input, shape index: {}]
  %s5 = inlined_call_operand.vmem [shape: f32[1,512], index: 5, kind: input, shape index: {}]
  %s6 = inlined_call_operand.vmem [shape: bf16[128,128], index: 6, kind: input, shape index: {}]
  %s7 = inlined_call_operand.vmem [shape: f32[1,128], index: 7, kind: input, shape index: {}]
  %s8 = inlined_call_operand.vmem [shape: f32[8,128], index: 8, kind: output, shape index: {}]
  %s9 = sld [smem:[#allocation0]]
  $region50: #{lstm_model_forward.1} parent=0
    _
  %s11 = ssub.s32 1, %s9
  %s12 = scalar_select 0, %s11, %s9
  $region1: #{lstm_model_forward.1} parent=0
    #allocation2 [shape = 'u8[131072]{0}', space=vmem, size = 0x20000, scoped, tag = 'input window, operand 3, single buffered']
    #allocation3 [shape = 's32[1]{0}', space=sflag, size = 0x4, scoped, tag = 'scoped memory for lstm_model_forward.1']
    #allocation4 [shape = 'u8[262144]{0}', space=vmem, size = 0x40000, scoped, tag = 'input window, operand 4, single buffered']
    #allocation5 [shape = 's32[1]{0}', space=sflag, size = 0x4, scoped, tag = 'scoped memory for lstm_model_forward.1']
    %13 = vsyncpa [#allocation3], 0
    %14 = vsyncpa [#allocation5], 0
    // Predicated region
    $region2: #{lstm_model_forward.1} parent=1 // pred_check
      _
    $region3: #{lstm_model_forward.1} parent=1 // pred_check_branch
      %16 = sbr.rel (0) target = $region5
    $region4: #{lstm_model_forward.1} parent=1 // pred_region
      _
    $region5: #{lstm_model_forward.1} parent=1 // pred_fallthru
      _
    // Predicated region
    $region6: #{lstm_model_forward.1} parent=1 // pred_check
      _
    $region7: #{lstm_model_forward.1} parent=1 // pred_check_branch
      %18 = sbr.rel (0) target = $region9
    $region8: #{lstm_model_forward.1} parent=1 // pred_region
      _
    $region9: #{lstm_model_forward.1} parent=1 // pred_fallthru
      _
    // Predicated region
    $region10: #{lstm_model_forward.1} parent=1 // pred_check
      _
    $region11: #{lstm_model_forward.1} parent=1 // pred_check_branch
      %20 = sbr.rel (0) target = $region13
    $region12: #{lstm_model_forward.1} parent=1 // pred_region
      _
    $region13: #{lstm_model_forward.1} parent=1 // pred_fallthru
      _
    // Predicated region
    $region14: #{lstm_model_forward.1} parent=1 // pred_check
      _
    $region15: #{lstm_model_forward.1} parent=1 // pred_check_branch
      %22 = sbr.rel (0) target = $region17
    $region16: #{lstm_model_forward.1} parent=1 // pred_region
      %s24 = ssub.s32 4096, 4096
      %25 = vsyncadd [#allocation3], %s24
      %s26 = sshll.u32 [#allocation2], 4
      %s27 = int_to_ptr.vmem [resolvable:$true] %s26
      %32 = dma.hbm_to_vmem [thread:$0]  %s3, 4096, %s27, [#allocation3], 256, 256, 16
    $region17: #{lstm_model_forward.1} parent=1 // pred_fallthru
      _
    // Predicated region
    $region18: #{lstm_model_forward.1} parent=1 // pred_check
      _
    $region19: #{lstm_model_forward.1} parent=1 // pred_check_branch
      %34 = sbr.rel (0) target = $region21
    $region20: #{lstm_model_forward.1} parent=1 // pred_region
      %s36 = ssub.s32 8192, 8192
      %37 = vsyncadd [#allocation5], %s36
      %s38 = sshll.u32 [#allocation4], 4
      %s39 = int_to_ptr.vmem [resolvable:$true] %s38
      %44 = dma.hbm_to_vmem [thread:$0]  %s4, 8192, %s39, [#allocation5], 256, 256, 16
    $region21: #{lstm_model_forward.1} parent=1 // pred_fallthru
      _
    // Predicated region
    $region22: #{lstm_model_forward.1} parent=1 // pred_check
      _
    $region23: #{lstm_model_forward.1} parent=1 // pred_check_branch
      %46 = sbr.rel (0) target = $region25
    $region24: #{lstm_model_forward.1} parent=1 // pred_region
      _
    $region25: #{lstm_model_forward.1} parent=1 // pred_fallthru
      _
    // Predicated region
    $region26: #{lstm_model_forward.1} parent=1 // pred_check
      _
    $region27: #{lstm_model_forward.1} parent=1 // pred_check_branch
      %48 = sbr.rel (0) target = $region29
    $region28: #{lstm_model_forward.1} parent=1 // pred_region
      _
    $region29: #{lstm_model_forward.1} parent=1 // pred_fallthru
      _
    // Predicated region
    $region30: #{lstm_model_forward.1} parent=1 // pred_check
      _
    $region31: #{lstm_model_forward.1} parent=1 // pred_check_branch
      %50 = sbr.rel (0) target = $region33
    $region32: #{lstm_model_forward.1} parent=1 // pred_region
      _
    $region33: #{lstm_model_forward.1} parent=1 // pred_fallthru
      _
    // Predicated region
    $region34: #{lstm_model_forward.1} parent=1 // pred_check
      _
    $region35: #{lstm_model_forward.1} parent=1 // pred_check_branch
      %52 = sbr.rel (0) target = $region37
    $region36: #{lstm_model_forward.1} parent=1 // pred_region
      %53 = dma.done [#allocation3], 4096
    $region37: #{lstm_model_forward.1} parent=1 // pred_fallthru
      _
    // Predicated region
    $region38: #{lstm_model_forward.1} parent=1 // pred_check
      _
    $region39: #{lstm_model_forward.1} parent=1 // pred_check_branch
      %55 = sbr.rel (0) target = $region41
    $region40: #{lstm_model_forward.1} parent=1 // pred_region
      %56 = dma.done [#allocation5], 8192
    $region41: #{lstm_model_forward.1} parent=1 // pred_fallthru
      _
    %v58 = vld [vmem:[%s0] sm:$0x1]
    %v59 = vld [vmem:[%s0 + $0x8] sm:$0x1]
    %v60 = vld [vmem:[%s0 + $0x10] sm:$0x1]
    %v61 = vld [vmem:[%s0 + $0x18] sm:$0x1]
    %v62 = vld [vmem:[%s0 + $0x20] sm:$0x1]
    %v63 = vld [vmem:[%s0 + $0x28] sm:$0x1]
    %v64 = vld [vmem:[%s0 + $0x30] sm:$0x1]
    %v65 = vld [vmem:[%s0 + $0x38] sm:$0x1]
    %v66 = vld [vmem:[%s1] sm:$0xff]
    %v67 = vld [vmem:[%s1 + $0x8] sm:$0xff]
    %v68 = vld [vmem:[%s1 + $0x10] sm:$0xff]
    %v69 = vld [vmem:[%s1 + $0x18] sm:$0xff]
    %v70 = vld [vmem:[#allocation2] sm:$0xff]
    %v71 = vld [vmem:[#allocation2 + $0x8] sm:$0xff]
    %v72 = vld [vmem:[#allocation2 + $0x10] sm:$0xff]
    %v73 = vld [vmem:[#allocation2 + $0x18] sm:$0xff]
    %v74 = vld [vmem:[#allocation2 + $0x20] sm:$0xff]
    %v75 = vld [vmem:[#allocation2 + $0x28] sm:$0xff]
    %v76 = vld [vmem:[#allocation2 + $0x30] sm:$0xff]
    %v77 = vld [vmem:[#allocation2 + $0x38] sm:$0xff]
    %v78 = vld [vmem:[#allocation2 + $0x40] sm:$0xff]
    %v79 = vld [vmem:[#allocation2 + $0x48] sm:$0xff]
    %v80 = vld [vmem:[#allocation2 + $0x50] sm:$0xff]
    %v81 = vld [vmem:[#allocation2 + $0x58] sm:$0xff]
    %v82 = vld [vmem:[#allocation2 + $0x60] sm:$0xff]
    %v83 = vld [vmem:[#allocation2 + $0x68] sm:$0xff]
    %v84 = vld [vmem:[#allocation2 + $0x70] sm:$0xff]
    %v85 = vld [vmem:[#allocation2 + $0x78] sm:$0xff]
    %v86 = vld [vmem:[#allocation2 + $0x80] sm:$0xff]
    %v87 = vld [vmem:[#allocation2 + $0x88] sm:$0xff]
    %v88 = vld [vmem:[#allocation2 + $0x90] sm:$0xff]
    %v89 = vld [vmem:[#allocation2 + $0x98] sm:$0xff]
    %v90 = vld [vmem:[#allocation2 + $0xa0] sm:$0xff]
    %v91 = vld [vmem:[#allocation2 + $0xa8] sm:$0xff]
    %v92 = vld [vmem:[#allocation2 + $0xb0] sm:$0xff]
    %v93 = vld [vmem:[#allocation2 + $0xb8] sm:$0xff]
    %v94 = vld [vmem:[#allocation2 + $0xc0] sm:$0xff]
    %v95 = vld [vmem:[#allocation2 + $0xc8] sm:$0xff]
    %v96 = vld [vmem:[#allocation2 + $0xd0] sm:$0xff]
    %v97 = vld [vmem:[#allocation2 + $0xd8] sm:$0xff]
    %v98 = vld [vmem:[#allocation2 + $0xe0] sm:$0xff]
    %v99 = vld [vmem:[#allocation2 + $0xe8] sm:$0xff]
    %v100 = vld [vmem:[#allocation2 + $0xf0] sm:$0xff]
    %v101 = vld [vmem:[#allocation2 + $0xf8] sm:$0xff]
    %v134 = vunpack.c.l.b16 %v70
    %v135 = vunpack.c.h.b16 %v70
    %v136 = vunpack.c.l.b16 %v71
    %v137 = vunpack.c.h.b16 %v71
    %v138 = vunpack.c.l.b16 %v72
    %v139 = vunpack.c.h.b16 %v72
    %v140 = vunpack.c.l.b16 %v73
    %v141 = vunpack.c.h.b16 %v73
    %v142 = vunpack.c.l.b16 %v74
    %v143 = vunpack.c.h.b16 %v74
    %v144 = vunpack.c.l.b16 %v75
    %v145 = vunpack.c.h.b16 %v75
    %v146 = vunpack.c.l.b16 %v76
    %v147 = vunpack.c.h.b16 %v76
    %v148 = vunpack.c.l.b16 %v77
    %v149 = vunpack.c.h.b16 %v77
    %v150 = vunpack.c.l.b16 %v78
    %v151 = vunpack.c.h.b16 %v78
    %v152 = vunpack.c.l.b16 %v79
    %v153 = vunpack.c.h.b16 %v79
    %v154 = vunpack.c.l.b16 %v80
    %v155 = vunpack.c.h.b16 %v80
    %v156 = vunpack.c.l.b16 %v81
    %v157 = vunpack.c.h.b16 %v81
    %v158 = vunpack.c.l.b16 %v82
    %v159 = vunpack.c.h.b16 %v82
    %v160 = vunpack.c.l.b16 %v83
    %v161 = vunpack.c.h.b16 %v83
    %v162 = vunpack.c.l.b16 %v84
    %v163 = vunpack.c.h.b16 %v84
    %v164 = vunpack.c.l.b16 %v85
    %v165 = vunpack.c.h.b16 %v85
    %v166 = vunpack.c.l.b16 %v86
    %v167 = vunpack.c.h.b16 %v86
    %v168 = vunpack.c.l.b16 %v87
    %v169 = vunpack.c.h.b16 %v87
    %v170 = vunpack.c.l.b16 %v88
    %v171 = vunpack.c.h.b16 %v88
    %v172 = vunpack.c.l.b16 %v89
    %v173 = vunpack.c.h.b16 %v89
    %v174 = vunpack.c.l.b16 %v90
    %v175 = vunpack.c.h.b16 %v90
    %v176 = vunpack.c.l.b16 %v91
    %v177 = vunpack.c.h.b16 %v91
    %v178 = vunpack.c.l.b16 %v92
    %v179 = vunpack.c.h.b16 %v92
    %v180 = vunpack.c.l.b16 %v93
    %v181 = vunpack.c.h.b16 %v93
    %v182 = vunpack.c.l.b16 %v94
    %v183 = vunpack.c.h.b16 %v94
    %v184 = vunpack.c.l.b16 %v95
    %v185 = vunpack.c.h.b16 %v95
    %v186 = vunpack.c.l.b16 %v96
    %v187 = vunpack.c.h.b16 %v96
    %v188 = vunpack.c.l.b16 %v97
    %v189 = vunpack.c.h.b16 %v97
    %v190 = vunpack.c.l.b16 %v98
    %v191 = vunpack.c.h.b16 %v98
    %v192 = vunpack.c.l.b16 %v99
    %v193 = vunpack.c.h.b16 %v99
    %v194 = vunpack.c.l.b16 %v100
    %v195 = vunpack.c.h.b16 %v100
    %v196 = vunpack.c.l.b16 %v101
    %v197 = vunpack.c.h.b16 %v101
    %v198 = vpack.c.b16 %v138, %v134
    %v199 = vpack.c.b16 %v139, %v135
    %v200 = vpack.c.b16 %v140, %v136
    %v201 = vpack.c.b16 %v141, %v137
    %v202 = vpack.c.b16 %v146, %v142
    %v203 = vpack.c.b16 %v147, %v143
    %v204 = vpack.c.b16 %v148, %v144
    %v205 = vpack.c.b16 %v149, %v145
    %v206 = vpack.c.b16 %v154, %v150
    %v207 = vpack.c.b16 %v155, %v151
    %v208 = vpack.c.b16 %v156, %v152
    %v209 = vpack.c.b16 %v157, %v153
    %v210 = vpack.c.b16 %v162, %v158
    %v211 = vpack.c.b16 %v163, %v159
    %v212 = vpack.c.b16 %v164, %v160
    %v213 = vpack.c.b16 %v165, %v161
    %v214 = vpack.c.b16 %v170, %v166
    %v215 = vpack.c.b16 %v171, %v167
    %v216 = vpack.c.b16 %v172, %v168
    %v217 = vpack.c.b16 %v173, %v169
    %v218 = vpack.c.b16 %v178, %v174
    %v219 = vpack.c.b16 %v179, %v175
    %v220 = vpack.c.b16 %v180, %v176
    %v221 = vpack.c.b16 %v181, %v177
    %v222 = vpack.c.b16 %v186, %v182
    %v223 = vpack.c.b16 %v187, %v183
    %v224 = vpack.c.b16 %v188, %v184
    %v225 = vpack.c.b16 %v189, %v185
    %v226 = vpack.c.b16 %v194, %v190
    %v227 = vpack.c.b16 %v195, %v191
    %v228 = vpack.c.b16 %v196, %v192
    %v229 = vpack.c.b16 %v197, %v193
    %262 = vmatprep.subr.bf16.mxu0 %v199
    %263 = vmatpush1.bf16.msra.mxu0 %v198
    %264 = vmatprep.subr.bf16.mxu0 %v203
    %265 = vmatpush1.bf16.msra.mxu0 %v202
    %266 = vmatprep.subr.bf16.mxu0 %v207
    %267 = vmatpush1.bf16.msra.mxu0 %v206
    %268 = vmatprep.subr.bf16.mxu0 %v211
    %269 = vmatpush1.bf16.msra.mxu0 %v210
    %270 = vmatprep.subr.bf16.mxu0 %v215
    %271 = vmatpush1.bf16.msra.mxu0 %v214
    %272 = vmatprep.subr.bf16.mxu0 %v219
    %273 = vmatpush1.bf16.msra.mxu0 %v218
    %274 = vmatprep.subr.bf16.mxu0 %v223
    %275 = vmatpush1.bf16.msra.mxu0 %v222
    %276 = vmatprep.subr.bf16.mxu0 %v227
    %277 = vmatpush1.bf16.msra.mxu0 %v226
    %278 = vmatprep.subr.bf16.mxu0 0
    %279 = vmatpush1.bf16.msra.mxu0 0
    %280 = vmatprep.subr.bf16.mxu0 0
    %281 = vmatpush1.bf16.msra.mxu0 0
    %282 = vmatprep.subr.bf16.mxu0 0
    %283 = vmatpush1.bf16.msra.mxu0 0
    %284 = vmatprep.subr.bf16.mxu0 0
    %285 = vmatpush1.bf16.msra.mxu0 0
    %286 = vmatprep.subr.bf16.mxu0 0
    %287 = vmatpush1.bf16.msra.mxu0 0
    %288 = vmatprep.subr.bf16.mxu0 0
    %289 = vmatpush1.bf16.msra.mxu0 0
    %290 = vmatprep.subr.bf16.mxu0 0
    %291 = vmatpush1.bf16.msra.mxu0 0
    %292 = vmatprep.subr.bf16.mxu0 0
    %293 = vmatpush1.bf16.msra.mxu0 0
    %294 = vmatprep.mubr.bf16.mxu0 0
    %295 = vmatmul.mubr.bf16.gmra.mrb[0].mxu0 0
    %v296 = vpop.f32.mrb[0].mxu0
    %v297 = vadd.f32 0.0, %v296
    %v298 = vpop.f32.mrb[0].mxu0
    %v299 = vadd.f32 0.0, %v298
    %v300 = vpop.f32.mrb[0].mxu0
    %v301 = vpop.f32.mrb[0].mxu0
    %302 = vdwg.mxu0
    %303 = vmatprep.subr.bf16.mxu0 %v201
    %304 = vmatpush1.bf16.msra.mxu0 %v200
    %305 = vmatprep.subr.bf16.mxu0 %v205
    %306 = vmatpush1.bf16.msra.mxu0 %v204
    %307 = vmatprep.subr.bf16.mxu0 %v209
    %308 = vmatpush1.bf16.msra.mxu0 %v208
    %309 = vmatprep.subr.bf16.mxu0 %v213
    %310 = vmatpush1.bf16.msra.mxu0 %v212
    %311 = vmatprep.subr.bf16.mxu0 %v217
    %312 = vmatpush1.bf16.msra.mxu0 %v216
    %313 = vmatprep.subr.bf16.mxu0 %v221
    %314 = vmatpush1.bf16.msra.mxu0 %v220
    %315 = vmatprep.subr.bf16.mxu0 %v225
    %316 = vmatpush1.bf16.msra.mxu0 %v224
    %317 = vmatprep.subr.bf16.mxu0 %v229
    %318 = vmatpush1.bf16.msra.mxu0 %v228
    %319 = vmatprep.subr.bf16.mxu0 0
    %320 = vmatpush1.bf16.msra.mxu0 0
    %321 = vmatprep.subr.bf16.mxu0 0
    %322 = vmatpush1.bf16.msra.mxu0 0
    %323 = vmatprep.subr.bf16.mxu0 0
    %324 = vmatpush1.bf16.msra.mxu0 0
    %325 = vmatprep.subr.bf16.mxu0 0
    %326 = vmatpush1.bf16.msra.mxu0 0
    %327 = vmatprep.subr.bf16.mxu0 0
    %328 = vmatpush1.bf16.msra.mxu0 0
    %329 = vmatprep.subr.bf16.mxu0 0
    %330 = vmatpush1.bf16.msra.mxu0 0
    %331 = vmatprep.subr.bf16.mxu0 0
    %332 = vmatpush1.bf16.msra.mxu0 0
    %333 = vmatprep.subr.bf16.mxu0 0
    %334 = vmatpush1.bf16.msra.mxu0 0
    %335 = vmatprep.mubr.bf16.mxu0 0
    %336 = vmatmul.mubr.bf16.gmra.mrb[0].mxu0 0
    %v337 = vpop.f32.mrb[0].mxu0
    %v338 = vadd.f32 0.0, %v337
    %v339 = vpop.f32.mrb[0].mxu0
    %v340 = vadd.f32 0.0, %v339
    %v341 = vpop.f32.mrb[0].mxu0
    %v342 = vpop.f32.mrb[0].mxu0
    %343 = vdwg.mxu0
    %v352 = vrot.slane %v59, 7
    %vm353 = vcmask 1041409
    %v354 = vsel %vm353, %v352, %v58
    %v355 = vrot.slane %v60, 6
    %vm356 = vcmask 1042434
    %v357 = vsel %vm356, %v355, %v354
    %v358 = vrot.slane %v61, 5
    %vm359 = vcmask 1043459
    %v360 = vsel %vm359, %v358, %v357
    %v361 = vrot.slane %v62, 4
    %vm362 = vcmask 1044484
    %v363 = vsel %vm362, %v361, %v360
    %v364 = vrot.slane %v63, 3
    %vm365 = vcmask 1045509
    %v366 = vsel %vm365, %v364, %v363
    %v367 = vrot.slane %v64, 2
    %vm368 = vcmask 1046534
    %v369 = vsel %vm368, %v367, %v366
    %v370 = vrot.slane %v65, 1
    %vm371 = vcmask 1047559
    %v372 = vsel %vm371, %v370, %v369
    %vm373 = vcmask 64512
    %v374 = vsel %vm373, %v372, 0
    %376 = vmatprep.subr.mxu0 %v67
    %377 = vmatpush1.msra.mxu0 %v66
    %378 = vmatprep.subr.mxu0 0.0
    %379 = vmatpush1.msra.mxu0 0.0
    %380 = vmatprep.subr.mxu0 0.0
    %381 = vmatpush1.msra.mxu0 0.0
    %382 = vmatprep.subr.mxu0 0.0
    %383 = vmatpush1.msra.mxu0 0.0
    %384 = vmatprep.subr.mxu0 0.0
    %385 = vmatpush1.msra.mxu0 0.0
    %386 = vmatprep.subr.mxu0 0.0
    %387 = vmatpush1.msra.mxu0 0.0
    %388 = vmatprep.subr.mxu0 0.0
    %389 = vmatpush1.msra.mxu0 0.0
    %390 = vmatprep.subr.mxu0 0.0
    %391 = vmatpush1.msra.mxu0 0.0
    %392 = vmatprep.subr.mxu0 0.0
    %393 = vmatpush1.msra.mxu0 0.0
    %394 = vmatprep.subr.mxu0 0.0
    %395 = vmatpush1.msra.mxu0 0.0
    %396 = vmatprep.subr.mxu0 0.0
    %397 = vmatpush1.msra.mxu0 0.0
    %398 = vmatprep.subr.mxu0 0.0
    %399 = vmatpush1.msra.mxu0 0.0
    %400 = vmatprep.subr.mxu0 0.0
    %401 = vmatpush1.msra.mxu0 0.0
    %402 = vmatprep.subr.mxu0 0.0
    %403 = vmatpush1.msra.mxu0 0.0
    %404 = vmatprep.subr.mxu0 0.0
    %405 = vmatpush1.msra.mxu0 0.0
    %406 = vmatprep.subr.mxu0 0.0
    %407 = vmatpush1.msra.mxu0 0.0
    %408 = vmatprep.subr.mxu0 0.0
    %409 = vmatpush1.msra.mxu0 0.0
    %410 = vmatprep.subr.mxu0 0.0
    %411 = vmatpush1.msra.mxu0 0.0
    %412 = vmatprep.subr.mxu0 0.0
    %413 = vmatpush1.msra.mxu0 0.0
    %414 = vmatprep.subr.mxu0 0.0
    %415 = vmatpush1.msra.mxu0 0.0
    %416 = vmatprep.subr.mxu0 0.0
    %417 = vmatpush1.msra.mxu0 0.0
    %418 = vmatprep.subr.mxu0 0.0
    %419 = vmatpush1.msra.mxu0 0.0
    %420 = vmatprep.subr.mxu0 0.0
    %421 = vmatpush1.msra.mxu0 0.0
    %422 = vmatprep.subr.mxu0 0.0
    %423 = vmatpush1.msra.mxu0 0.0
    %424 = vmatprep.subr.mxu0 0.0
    %425 = vmatpush1.msra.mxu0 0.0
    %426 = vmatprep.subr.mxu0 0.0
    %427 = vmatpush1.msra.mxu0 0.0
    %428 = vmatprep.subr.mxu0 0.0
    %429 = vmatpush1.msra.mxu0 0.0
    %430 = vmatprep.subr.mxu0 0.0
    %431 = vmatpush1.msra.mxu0 0.0
    %432 = vmatprep.subr.mxu0 0.0
    %433 = vmatpush1.msra.mxu0 0.0
    %434 = vmatprep.subr.mxu0 0.0
    %435 = vmatpush1.msra.mxu0 0.0
    %436 = vmatprep.subr.mxu0 0.0
    %437 = vmatpush1.msra.mxu0 0.0
    %438 = vmatprep.subr.mxu0 0.0
    %439 = vmatpush1.msra.mxu0 0.0
    %440 = vmatprep.mubr.f32.mxu0 0.0
    %441 = vmatmul.mubr.f32.gmra.mrb[0].mxu0 %v374
    %v442 = vpop.f32.mrb[0].mxu0
    %v443 = vadd.f32 %v297, %v442
    %v444 = vpop.f32.mrb[0].mxu0
    %v445 = vadd.f32 %v299, %v444
    %446 = vdwg.mxu0
    %447 = vmatprep.subr.mxu0 %v69
    %448 = vmatpush1.msra.mxu0 %v68
    %449 = vmatprep.subr.mxu0 0.0
    %450 = vmatpush1.msra.mxu0 0.0
    %451 = vmatprep.subr.mxu0 0.0
    %452 = vmatpush1.msra.mxu0 0.0
    %453 = vmatprep.subr.mxu0 0.0
    %454 = vmatpush1.msra.mxu0 0.0
    %455 = vmatprep.subr.mxu0 0.0
    %456 = vmatpush1.msra.mxu0 0.0
    %457 = vmatprep.subr.mxu0 0.0
    %458 = vmatpush1.msra.mxu0 0.0
    %459 = vmatprep.subr.mxu0 0.0
    %460 = vmatpush1.msra.mxu0 0.0
    %461 = vmatprep.subr.mxu0 0.0
    %462 = vmatpush1.msra.mxu0 0.0
    %463 = vmatprep.subr.mxu0 0.0
    %464 = vmatpush1.msra.mxu0 0.0
    %465 = vmatprep.subr.mxu0 0.0
    %466 = vmatpush1.msra.mxu0 0.0
    %467 = vmatprep.subr.mxu0 0.0
    %468 = vmatpush1.msra.mxu0 0.0
    %469 = vmatprep.subr.mxu0 0.0
    %470 = vmatpush1.msra.mxu0 0.0
    %471 = vmatprep.subr.mxu0 0.0
    %472 = vmatpush1.msra.mxu0 0.0
    %473 = vmatprep.subr.mxu0 0.0
    %474 = vmatpush1.msra.mxu0 0.0
    %475 = vmatprep.subr.mxu0 0.0
    %476 = vmatpush1.msra.mxu0 0.0
    %477 = vmatprep.subr.mxu0 0.0
    %478 = vmatpush1.msra.mxu0 0.0
    %479 = vmatprep.subr.mxu0 0.0
    %480 = vmatpush1.msra.mxu0 0.0
    %481 = vmatprep.subr.mxu0 0.0
    %482 = vmatpush1.msra.mxu0 0.0
    %483 = vmatprep.subr.mxu0 0.0
    %484 = vmatpush1.msra.mxu0 0.0
    %485 = vmatprep.subr.mxu0 0.0
    %486 = vmatpush1.msra.mxu0 0.0
    %487 = vmatprep.subr.mxu0 0.0
    %488 = vmatpush1.msra.mxu0 0.0
    %489 = vmatprep.subr.mxu0 0.0
    %490 = vmatpush1.msra.mxu0 0.0
    %491 = vmatprep.subr.mxu0 0.0
    %492 = vmatpush1.msra.mxu0 0.0
    %493 = vmatprep.subr.mxu0 0.0
    %494 = vmatpush1.msra.mxu0 0.0
    %495 = vmatprep.subr.mxu0 0.0
    %496 = vmatpush1.msra.mxu0 0.0
    %497 = vmatprep.subr.mxu0 0.0
    %498 = vmatpush1.msra.mxu0 0.0
    %499 = vmatprep.subr.mxu0 0.0
    %500 = vmatpush1.msra.mxu0 0.0
    %501 = vmatprep.subr.mxu0 0.0
    %502 = vmatpush1.msra.mxu0 0.0
    %503 = vmatprep.subr.mxu0 0.0
    %504 = vmatpush1.msra.mxu0 0.0
    %505 = vmatprep.subr.mxu0 0.0
    %506 = vmatpush1.msra.mxu0 0.0
    %507 = vmatprep.subr.mxu0 0.0
    %508 = vmatpush1.msra.mxu0 0.0
    %509 = vmatprep.subr.mxu0 0.0
    %510 = vmatpush1.msra.mxu0 0.0
    %511 = vmatprep.mubr.f32.mxu0 0.0
    %512 = vmatmul.mubr.f32.gmra.mrb[0].mxu0 %v374
    %v513 = vpop.f32.mrb[0].mxu0
    %v514 = vadd.f32 %v338, %v513
    %v515 = vpop.f32.mrb[0].mxu0
    %v516 = vadd.f32 %v340, %v515
    %517 = vdwg.mxu0
    %v518 = vld [vmem:[%s2] sm:$0xf]
    %v520 = vlaneseq
    %v521 = vshrl.u32 %v520, 7
    %v522 = vsub.s32 0, %v521
    %v523 = vrot.slane %v518, %v522
    %v524 = vlaneseq
    %v525 = vshrl.u32 %v524, 7
    %v526 = vsub.s32 1, %v525
    %v527 = vrot.slane %v518, %v526
    %v528 = vlaneseq
    %v529 = vshrl.u32 %v528, 7
    %v530 = vsub.s32 2, %v529
    %v531 = vrot.slane %v518, %v530
    %v532 = vlaneseq
    %v533 = vshrl.u32 %v532, 7
    %v534 = vsub.s32 3, %v533
    %v535 = vrot.slane %v518, %v534
    %v540 = vadd.f32 %v443, %v523
    %v541 = vadd.f32 %v445, %v527
    %v542 = vadd.f32 %v514, %v531
    %v543 = vadd.f32 %v516, %v535
    %v544 = vxor.u32 %v540, 2147483648
    %v545 = vxor.u32 %v541, 2147483648
    %v546 = vmul.f32 %v544, 1.442695
    %v547 = vpow.pop %v546
    %v548 = vmul.f32 %v545, 1.442695
    %v549 = vpow.pop %v548
    %v550 = vadd.f32 %v547, 1.0
    %v551 = vadd.f32 %v549, 1.0
    %v552 = vrcp.pop %v550
    %v553 = vmul.f32 1.0, %v552
    %v554 = vrcp.pop %v551
    %v555 = vmul.f32 1.0, %v554
    %v556 = vtanh.pop %v542
    %v557 = vxor.u32 %v543, 2147483648
    %v558 = vmul.f32 %v557, 1.442695
    %v559 = vpow.pop %v558
    %v560 = vadd.f32 %v559, 1.0
    %v561 = vrcp.pop %v560
    %v562 = vmul.f32 1.0, %v561
    %v563 = vmul.f32 %v555, 0.0
    %v564 = vmul.f32 %v553, %v556
    %v565 = vadd.f32 %v563, %v564
    %v566 = vtanh.pop %v565
    %v567 = vmul.f32 %v562, %v566
    %v568 = vpack.c.bf16 %v567, %v567
    %v569 = vpack.c.bf16 0.0, 0.0
    %v570 = vld [vmem:[#allocation4] sm:$0xff]
    %v571 = vld [vmem:[#allocation4 + $0x8] sm:$0xff]
    %v572 = vld [vmem:[#allocation4 + $0x10] sm:$0xff]
    %v573 = vld [vmem:[#allocation4 + $0x18] sm:$0xff]
    %v574 = vld [vmem:[#allocation4 + $0x20] sm:$0xff]
    %v575 = vld [vmem:[#allocation4 + $0x28] sm:$0xff]
    %v576 = vld [vmem:[#allocation4 + $0x30] sm:$0xff]
    %v577 = vld [vmem:[#allocation4 + $0x38] sm:$0xff]
    %v578 = vld [vmem:[#allocation4 + $0x40] sm:$0xff]
    %v579 = vld [vmem:[#allocation4 + $0x48] sm:$0xff]
    %v580 = vld [vmem:[#allocation4 + $0x50] sm:$0xff]
    %v581 = vld [vmem:[#allocation4 + $0x58] sm:$0xff]
    %v582 = vld [vmem:[#allocation4 + $0x60] sm:$0xff]
    %v583 = vld [vmem:[#allocation4 + $0x68] sm:$0xff]
    %v584 = vld [vmem:[#allocation4 + $0x70] sm:$0xff]
    %v585 = vld [vmem:[#allocation4 + $0x78] sm:$0xff]
    %v586 = vld [vmem:[#allocation4 + $0x80] sm:$0xff]
    %v587 = vld [vmem:[#allocation4 + $0x88] sm:$0xff]
    %v588 = vld [vmem:[#allocation4 + $0x90] sm:$0xff]
    %v589 = vld [vmem:[#allocation4 + $0x98] sm:$0xff]
    %v590 = vld [vmem:[#allocation4 + $0xa0] sm:$0xff]
    %v591 = vld [vmem:[#allocation4 + $0xa8] sm:$0xff]
    %v592 = vld [vmem:[#allocation4 + $0xb0] sm:$0xff]
    %v593 = vld [vmem:[#allocation4 + $0xb8] sm:$0xff]
    %v594 = vld [vmem:[#allocation4 + $0xc0] sm:$0xff]
    %v595 = vld [vmem:[#allocation4 + $0xc8] sm:$0xff]
    %v596 = vld [vmem:[#allocation4 + $0xd0] sm:$0xff]
    %v597 = vld [vmem:[#allocation4 + $0xd8] sm:$0xff]
    %v598 = vld [vmem:[#allocation4 + $0xe0] sm:$0xff]
    %v599 = vld [vmem:[#allocation4 + $0xe8] sm:$0xff]
    %v600 = vld [vmem:[#allocation4 + $0xf0] sm:$0xff]
    %v601 = vld [vmem:[#allocation4 + $0xf8] sm:$0xff]
    %v602 = vld [vmem:[#allocation4 + $0x100] sm:$0xff]
    %v603 = vld [vmem:[#allocation4 + $0x108] sm:$0xff]
    %v604 = vld [vmem:[#allocation4 + $0x110] sm:$0xff]
    %v605 = vld [vmem:[#allocation4 + $0x118] sm:$0xff]
    %v606 = vld [vmem:[#allocation4 + $0x120] sm:$0xff]
    %v607 = vld [vmem:[#allocation4 + $0x128] sm:$0xff]
    %v608 = vld [vmem:[#allocation4 + $0x130] sm:$0xff]
    %v609 = vld [vmem:[#allocation4 + $0x138] sm:$0xff]
    %v610 = vld [vmem:[#allocation4 + $0x140] sm:$0xff]
    %v611 = vld [vmem:[#allocation4 + $0x148] sm:$0xff]
    %v612 = vld [vmem:[#allocation4 + $0x150] sm:$0xff]
    %v613 = vld [vmem:[#allocation4 + $0x158] sm:$0xff]
    %v614 = vld [vmem:[#allocation4 + $0x160] sm:$0xff]
    %v615 = vld [vmem:[#allocation4 + $0x168] sm:$0xff]
    %v616 = vld [vmem:[#allocation4 + $0x170] sm:$0xff]
    %v617 = vld [vmem:[#allocation4 + $0x178] sm:$0xff]
    %v618 = vld [vmem:[#allocation4 + $0x180] sm:$0xff]
    %v619 = vld [vmem:[#allocation4 + $0x188] sm:$0xff]
    %v620 = vld [vmem:[#allocation4 + $0x190] sm:$0xff]
    %v621 = vld [vmem:[#allocation4 + $0x198] sm:$0xff]
    %v622 = vld [vmem:[#allocation4 + $0x1a0] sm:$0xff]
    %v623 = vld [vmem:[#allocation4 + $0x1a8] sm:$0xff]
    %v624 = vld [vmem:[#allocation4 + $0x1b0] sm:$0xff]
    %v625 = vld [vmem:[#allocation4 + $0x1b8] sm:$0xff]
    %v626 = vld [vmem:[#allocation4 + $0x1c0] sm:$0xff]
    %v627 = vld [vmem:[#allocation4 + $0x1c8] sm:$0xff]
    %v628 = vld [vmem:[#allocation4 + $0x1d0] sm:$0xff]
    %v629 = vld [vmem:[#allocation4 + $0x1d8] sm:$0xff]
    %v630 = vld [vmem:[#allocation4 + $0x1e0] sm:$0xff]
    %v631 = vld [vmem:[#allocation4 + $0x1e8] sm:$0xff]
    %v632 = vld [vmem:[#allocation4 + $0x1f0] sm:$0xff]
    %v633 = vld [vmem:[#allocation4 + $0x1f8] sm:$0xff]
    %v634 = vld [vmem:[%s5] sm:$0xf]
    %v636 = vlaneseq
    %v637 = vshrl.u32 %v636, 7
    %v638 = vsub.s32 0, %v637
    %v639 = vrot.slane %v634, %v638
    %v640 = vlaneseq
    %v641 = vshrl.u32 %v640, 7
    %v642 = vsub.s32 1, %v641
    %v643 = vrot.slane %v634, %v642
    %v644 = vlaneseq
    %v645 = vshrl.u32 %v644, 7
    %v646 = vsub.s32 2, %v645
    %v647 = vrot.slane %v634, %v646
    %v648 = vlaneseq
    %v649 = vshrl.u32 %v648, 7
    %v650 = vsub.s32 3, %v649
    %v651 = vrot.slane %v634, %v650
    %v720 = vunpack.c.l.b16 %v570
    %v721 = vunpack.c.h.b16 %v570
    %v722 = vunpack.c.l.b16 %v571
    %v723 = vunpack.c.h.b16 %v571
    %v724 = vunpack.c.l.b16 %v572
    %v725 = vunpack.c.h.b16 %v572
    %v726 = vunpack.c.l.b16 %v573
    %v727 = vunpack.c.h.b16 %v573
    %v728 = vunpack.c.l.b16 %v574
    %v729 = vunpack.c.h.b16 %v574
    %v730 = vunpack.c.l.b16 %v575
    %v731 = vunpack.c.h.b16 %v575
    %v732 = vunpack.c.l.b16 %v576
    %v733 = vunpack.c.h.b16 %v576
    %v734 = vunpack.c.l.b16 %v577
    %v735 = vunpack.c.h.b16 %v577
    %v736 = vunpack.c.l.b16 %v578
    %v737 = vunpack.c.h.b16 %v578
    %v738 = vunpack.c.l.b16 %v579
    %v739 = vunpack.c.h.b16 %v579
    %v740 = vunpack.c.l.b16 %v580
    %v741 = vunpack.c.h.b16 %v580
    %v742 = vunpack.c.l.b16 %v581
    %v743 = vunpack.c.h.b16 %v581
    %v744 = vunpack.c.l.b16 %v582
    %v745 = vunpack.c.h.b16 %v582
    %v746 = vunpack.c.l.b16 %v583
    %v747 = vunpack.c.h.b16 %v583
    %v748 = vunpack.c.l.b16 %v584
    %v749 = vunpack.c.h.b16 %v584
    %v750 = vunpack.c.l.b16 %v585
    %v751 = vunpack.c.h.b16 %v585
    %v752 = vunpack.c.l.b16 %v586
    %v753 = vunpack.c.h.b16 %v586
    %v754 = vunpack.c.l.b16 %v587
    %v755 = vunpack.c.h.b16 %v587
    %v756 = vunpack.c.l.b16 %v588
    %v757 = vunpack.c.h.b16 %v588
    %v758 = vunpack.c.l.b16 %v589
    %v759 = vunpack.c.h.b16 %v589
    %v760 = vunpack.c.l.b16 %v590
    %v761 = vunpack.c.h.b16 %v590
    %v762 = vunpack.c.l.b16 %v591
    %v763 = vunpack.c.h.b16 %v591
    %v764 = vunpack.c.l.b16 %v592
    %v765 = vunpack.c.h.b16 %v592
    %v766 = vunpack.c.l.b16 %v593
    %v767 = vunpack.c.h.b16 %v593
    %v768 = vunpack.c.l.b16 %v594
    %v769 = vunpack.c.h.b16 %v594
    %v770 = vunpack.c.l.b16 %v595
    %v771 = vunpack.c.h.b16 %v595
    %v772 = vunpack.c.l.b16 %v596
    %v773 = vunpack.c.h.b16 %v596
    %v774 = vunpack.c.l.b16 %v597
    %v775 = vunpack.c.h.b16 %v597
    %v776 = vunpack.c.l.b16 %v598
    %v777 = vunpack.c.h.b16 %v598
    %v778 = vunpack.c.l.b16 %v599
    %v779 = vunpack.c.h.b16 %v599
    %v780 = vunpack.c.l.b16 %v600
    %v781 = vunpack.c.h.b16 %v600
    %v782 = vunpack.c.l.b16 %v601
    %v783 = vunpack.c.h.b16 %v601
    %v784 = vunpack.c.l.b16 %v602
    %v785 = vunpack.c.h.b16 %v602
    %v786 = vunpack.c.l.b16 %v603
    %v787 = vunpack.c.h.b16 %v603
    %v788 = vunpack.c.l.b16 %v604
    %v789 = vunpack.c.h.b16 %v604
    %v790 = vunpack.c.l.b16 %v605
    %v791 = vunpack.c.h.b16 %v605
    %v792 = vunpack.c.l.b16 %v606
    %v793 = vunpack.c.h.b16 %v606
    %v794 = vunpack.c.l.b16 %v607
    %v795 = vunpack.c.h.b16 %v607
    %v796 = vunpack.c.l.b16 %v608
    %v797 = vunpack.c.h.b16 %v608
    %v798 = vunpack.c.l.b16 %v609
    %v799 = vunpack.c.h.b16 %v609
    %v800 = vunpack.c.l.b16 %v610
    %v801 = vunpack.c.h.b16 %v610
    %v802 = vunpack.c.l.b16 %v611
    %v803 = vunpack.c.h.b16 %v611
    %v804 = vunpack.c.l.b16 %v612
    %v805 = vunpack.c.h.b16 %v612
    %v806 = vunpack.c.l.b16 %v613
    %v807 = vunpack.c.h.b16 %v613
    %v808 = vunpack.c.l.b16 %v614
    %v809 = vunpack.c.h.b16 %v614
    %v810 = vunpack.c.l.b16 %v615
    %v811 = vunpack.c.h.b16 %v615
    %v812 = vunpack.c.l.b16 %v616
    %v813 = vunpack.c.h.b16 %v616
    %v814 = vunpack.c.l.b16 %v617
    %v815 = vunpack.c.h.b16 %v617
    %v816 = vunpack.c.l.b16 %v618
    %v817 = vunpack.c.h.b16 %v618
    %v818 = vunpack.c.l.b16 %v619
    %v819 = vunpack.c.h.b16 %v619
    %v820 = vunpack.c.l.b16 %v620
    %v821 = vunpack.c.h.b16 %v620
    %v822 = vunpack.c.l.b16 %v621
    %v823 = vunpack.c.h.b16 %v621
    %v824 = vunpack.c.l.b16 %v622
    %v825 = vunpack.c.h.b16 %v622
    %v826 = vunpack.c.l.b16 %v623
    %v827 = vunpack.c.h.b16 %v623
    %v828 = vunpack.c.l.b16 %v624
    %v829 = vunpack.c.h.b16 %v624
    %v830 = vunpack.c.l.b16 %v625
    %v831 = vunpack.c.h.b16 %v625
    %v832 = vunpack.c.l.b16 %v626
    %v833 = vunpack.c.h.b16 %v626
    %v834 = vunpack.c.l.b16 %v627
    %v835 = vunpack.c.h.b16 %v627
    %v836 = vunpack.c.l.b16 %v628
    %v837 = vunpack.c.h.b16 %v628
    %v838 = vunpack.c.l.b16 %v629
    %v839 = vunpack.c.h.b16 %v629
    %v840 = vunpack.c.l.b16 %v630
    %v841 = vunpack.c.h.b16 %v630
    %v842 = vunpack.c.l.b16 %v631
    %v843 = vunpack.c.h.b16 %v631
    %v844 = vunpack.c.l.b16 %v632
    %v845 = vunpack.c.h.b16 %v632
    %v846 = vunpack.c.l.b16 %v633
    %v847 = vunpack.c.h.b16 %v633
    %v848 = vpack.c.b16 %v724, %v720
    %v849 = vpack.c.b16 %v725, %v721
    %v850 = vpack.c.b16 %v726, %v722
    %v851 = vpack.c.b16 %v727, %v723
    %v852 = vpack.c.b16 %v732, %v728
    %v853 = vpack.c.b16 %v733, %v729
    %v854 = vpack.c.b16 %v734, %v730
    %v855 = vpack.c.b16 %v735, %v731
    %v856 = vpack.c.b16 %v740, %v736
    %v857 = vpack.c.b16 %v741, %v737
    %v858 = vpack.c.b16 %v742, %v738
    %v859 = vpack.c.b16 %v743, %v739
    %v860 = vpack.c.b16 %v748, %v744
    %v861 = vpack.c.b16 %v749, %v745
    %v862 = vpack.c.b16 %v750, %v746
    %v863 = vpack.c.b16 %v751, %v747
    %v864 = vpack.c.b16 %v756, %v752
    %v865 = vpack.c.b16 %v757, %v753
    %v866 = vpack.c.b16 %v758, %v754
    %v867 = vpack.c.b16 %v759, %v755
    %v868 = vpack.c.b16 %v764, %v760
    %v869 = vpack.c.b16 %v765, %v761
    %v870 = vpack.c.b16 %v766, %v762
    %v871 = vpack.c.b16 %v767, %v763
    %v872 = vpack.c.b16 %v772, %v768
    %v873 = vpack.c.b16 %v773, %v769
    %v874 = vpack.c.b16 %v774, %v770
    %v875 = vpack.c.b16 %v775, %v771
    %v876 = vpack.c.b16 %v780, %v776
    %v877 = vpack.c.b16 %v781, %v777
    %v878 = vpack.c.b16 %v782, %v778
    %v879 = vpack.c.b16 %v783, %v779
    %v880 = vpack.c.b16 %v788, %v784
    %v881 = vpack.c.b16 %v789, %v785
    %v882 = vpack.c.b16 %v790, %v786
    %v883 = vpack.c.b16 %v791, %v787
    %v884 = vpack.c.b16 %v796, %v792
    %v885 = vpack.c.b16 %v797, %v793
    %v886 = vpack.c.b16 %v798, %v794
    %v887 = vpack.c.b16 %v799, %v795
    %v888 = vpack.c.b16 %v804, %v800
    %v889 = vpack.c.b16 %v805, %v801
    %v890 = vpack.c.b16 %v806, %v802
    %v891 = vpack.c.b16 %v807, %v803
    %v892 = vpack.c.b16 %v812, %v808
    %v893 = vpack.c.b16 %v813, %v809
    %v894 = vpack.c.b16 %v814, %v810
    %v895 = vpack.c.b16 %v815, %v811
    %v896 = vpack.c.b16 %v820, %v816
    %v897 = vpack.c.b16 %v821, %v817
    %v898 = vpack.c.b16 %v822, %v818
    %v899 = vpack.c.b16 %v823, %v819
    %v900 = vpack.c.b16 %v828, %v824
    %v901 = vpack.c.b16 %v829, %v825
    %v902 = vpack.c.b16 %v830, %v826
    %v903 = vpack.c.b16 %v831, %v827
    %v904 = vpack.c.b16 %v836, %v832
    %v905 = vpack.c.b16 %v837, %v833
    %v906 = vpack.c.b16 %v838, %v834
    %v907 = vpack.c.b16 %v839, %v835
    %v908 = vpack.c.b16 %v844, %v840
    %v909 = vpack.c.b16 %v845, %v841
    %v910 = vpack.c.b16 %v846, %v842
    %v911 = vpack.c.b16 %v847, %v843
    %976 = vmatprep.subr.bf16.mxu0 %v849
    %977 = vmatpush1.bf16.msra.mxu0 %v848
    %978 = vmatprep.subr.bf16.mxu0 %v853
    %979 = vmatpush1.bf16.msra.mxu0 %v852
    %980 = vmatprep.subr.bf16.mxu0 %v857
    %981 = vmatpush1.bf16.msra.mxu0 %v856
    %982 = vmatprep.subr.bf16.mxu0 %v861
    %983 = vmatpush1.bf16.msra.mxu0 %v860
    %984 = vmatprep.subr.bf16.mxu0 %v865
    %985 = vmatpush1.bf16.msra.mxu0 %v864
    %986 = vmatprep.subr.bf16.mxu0 %v869
    %987 = vmatpush1.bf16.msra.mxu0 %v868
    %988 = vmatprep.subr.bf16.mxu0 %v873
    %989 = vmatpush1.bf16.msra.mxu0 %v872
    %990 = vmatprep.subr.bf16.mxu0 %v877
    %991 = vmatpush1.bf16.msra.mxu0 %v876
    %992 = vmatprep.subr.bf16.mxu0 %v881
    %993 = vmatpush1.bf16.msra.mxu0 %v880
    %994 = vmatprep.subr.bf16.mxu0 %v885
    %995 = vmatpush1.bf16.msra.mxu0 %v884
    %996 = vmatprep.subr.bf16.mxu0 %v889
    %997 = vmatpush1.bf16.msra.mxu0 %v888
    %998 = vmatprep.subr.bf16.mxu0 %v893
    %999 = vmatpush1.bf16.msra.mxu0 %v892
    %1000 = vmatprep.subr.bf16.mxu0 %v897
    %1001 = vmatpush1.bf16.msra.mxu0 %v896
    %1002 = vmatprep.subr.bf16.mxu0 %v901
    %1003 = vmatpush1.bf16.msra.mxu0 %v900
    %1004 = vmatprep.subr.bf16.mxu0 %v905
    %1005 = vmatpush1.bf16.msra.mxu0 %v904
    %1006 = vmatprep.subr.bf16.mxu0 %v909
    %1007 = vmatpush1.bf16.msra.mxu0 %v908
    %1008 = vmatprep.mubr.bf16.mxu0 %v569
    %1009 = vmatmul.mubr.bf16.gmra.mrb[0].mxu0 %v568
    %v1010 = vpop.f32.mrb[0].mxu0
    %v1011 = vadd.f32 %v639, %v1010
    %v1012 = vpop.f32.mrb[0].mxu0
    %v1013 = vadd.f32 %v643, %v1012
    %v1014 = vpop.f32.mrb[0].mxu0
    %v1015 = vpop.f32.mrb[0].mxu0
    %1016 = vdwg.mxu0
    %1017 = vmatprep.subr.bf16.mxu0 %v851
    %1018 = vmatpush1.bf16.msra.mxu0 %v850
    %1019 = vmatprep.subr.bf16.mxu0 %v855
    %1020 = vmatpush1.bf16.msra.mxu0 %v854
    %1021 = vmatprep.subr.bf16.mxu0 %v859
    %1022 = vmatpush1.bf16.msra.mxu0 %v858
    %1023 = vmatprep.subr.bf16.mxu0 %v863
    %1024 = vmatpush1.bf16.msra.mxu0 %v862
    %1025 = vmatprep.subr.bf16.mxu0 %v867
    %1026 = vmatpush1.bf16.msra.mxu0 %v866
    %1027 = vmatprep.subr.bf16.mxu0 %v871
    %1028 = vmatpush1.bf16.msra.mxu0 %v870
    %1029 = vmatprep.subr.bf16.mxu0 %v875
    %1030 = vmatpush1.bf16.msra.mxu0 %v874
    %1031 = vmatprep.subr.bf16.mxu0 %v879
    %1032 = vmatpush1.bf16.msra.mxu0 %v878
    %1033 = vmatprep.subr.bf16.mxu0 %v883
    %1034 = vmatpush1.bf16.msra.mxu0 %v882
    %1035 = vmatprep.subr.bf16.mxu0 %v887
    %1036 = vmatpush1.bf16.msra.mxu0 %v886
    %1037 = vmatprep.subr.bf16.mxu0 %v891
    %1038 = vmatpush1.bf16.msra.mxu0 %v890
    %1039 = vmatprep.subr.bf16.mxu0 %v895
    %1040 = vmatpush1.bf16.msra.mxu0 %v894
    %1041 = vmatprep.subr.bf16.mxu0 %v899
    %1042 = vmatpush1.bf16.msra.mxu0 %v898
    %1043 = vmatprep.subr.bf16.mxu0 %v903
    %1044 = vmatpush1.bf16.msra.mxu0 %v902
    %1045 = vmatprep.subr.bf16.mxu0 %v907
    %1046 = vmatpush1.bf16.msra.mxu0 %v906
    %1047 = vmatprep.subr.bf16.mxu0 %v911
    %1048 = vmatpush1.bf16.msra.mxu0 %v910
    %1049 = vmatprep.mubr.bf16.mxu0 %v569
    %1050 = vmatmul.mubr.bf16.gmra.mrb[0].mxu0 %v568
    %v1051 = vpop.f32.mrb[0].mxu0
    %v1052 = vadd.f32 %v647, %v1051
    %v1053 = vpop.f32.mrb[0].mxu0
    %v1054 = vadd.f32 %v651, %v1053
    %v1055 = vpop.f32.mrb[0].mxu0
    %v1056 = vpop.f32.mrb[0].mxu0
    %1057 = vdwg.mxu0
    %v1058 = vxor.u32 %v1011, 2147483648
    %v1059 = vxor.u32 %v1013, 2147483648
    %v1060 = vmul.f32 %v1058, 1.442695
    %v1061 = vpow.pop %v1060
    %v1062 = vmul.f32 %v1059, 1.442695
    %v1063 = vpow.pop %v1062
    %v1064 = vadd.f32 %v1061, 1.0
    %v1065 = vadd.f32 %v1063, 1.0
    %v1066 = vrcp.pop %v1064
    %v1067 = vmul.f32 1.0, %v1066
    %v1068 = vrcp.pop %v1065
    %v1069 = vmul.f32 1.0, %v1068
    %v1070 = vtanh.pop %v1052
    %v1071 = vxor.u32 %v1054, 2147483648
    %v1072 = vmul.f32 %v1071, 1.442695
    %v1073 = vpow.pop %v1072
    %v1074 = vadd.f32 %v1073, 1.0
    %v1075 = vrcp.pop %v1074
    %v1076 = vmul.f32 1.0, %v1075
    %v1077 = vmul.f32 %v1069, 0.0
    %v1078 = vmul.f32 %v1067, %v1070
    %v1079 = vadd.f32 %v1077, %v1078
    %v1080 = vtanh.pop %v1079
    %v1081 = vmul.f32 %v1076, %v1080
    %v1082 = vld [vmem:[%s0 + $0x1] sm:$0x1]
    %v1083 = vld [vmem:[%s0 + $0x9] sm:$0x1]
    %v1084 = vld [vmem:[%s0 + $0x11] sm:$0x1]
    %v1085 = vld [vmem:[%s0 + $0x19] sm:$0x1]
    %v1086 = vld [vmem:[%s0 + $0x21] sm:$0x1]
    %v1087 = vld [vmem:[%s0 + $0x29] sm:$0x1]
    %v1088 = vld [vmem:[%s0 + $0x31] sm:$0x1]
    %v1089 = vld [vmem:[%s0 + $0x39] sm:$0x1]
    %1090 = vmatprep.subr.bf16.mxu0 %v199
    %1091 = vmatpush1.bf16.msra.mxu0 %v198
    %1092 = vmatprep.subr.bf16.mxu0 %v203
    %1093 = vmatpush1.bf16.msra.mxu0 %v202
    %1094 = vmatprep.subr.bf16.mxu0 %v207
    %1095 = vmatpush1.bf16.msra.mxu0 %v206
    %1096 = vmatprep.subr.bf16.mxu0 %v211
    %1097 = vmatpush1.bf16.msra.mxu0 %v210
    %1098 = vmatprep.subr.bf16.mxu0 %v215
    %1099 = vmatpush1.bf16.msra.mxu0 %v214
    %1100 = vmatprep.subr.bf16.mxu0 %v219
    %1101 = vmatpush1.bf16.msra.mxu0 %v218
    %1102 = vmatprep.subr.bf16.mxu0 %v223
    %1103 = vmatpush1.bf16.msra.mxu0 %v222
    %1104 = vmatprep.subr.bf16.mxu0 %v227
    %1105 = vmatpush1.bf16.msra.mxu0 %v226
    %1106 = vmatprep.subr.bf16.mxu0 0
    %1107 = vmatpush1.bf16.msra.mxu0 0
    %1108 = vmatprep.subr.bf16.mxu0 0
    %1109 = vmatpush1.bf16.msra.mxu0 0
    %1110 = vmatprep.subr.bf16.mxu0 0
    %1111 = vmatpush1.bf16.msra.mxu0 0
    %1112 = vmatprep.subr.bf16.mxu0 0
    %1113 = vmatpush1.bf16.msra.mxu0 0
    %1114 = vmatprep.subr.bf16.mxu0 0
    %1115 = vmatpush1.bf16.msra.mxu0 0
    %1116 = vmatprep.subr.bf16.mxu0 0
    %1117 = vmatpush1.bf16.msra.mxu0 0
    %1118 = vmatprep.subr.bf16.mxu0 0
    %1119 = vmatpush1.bf16.msra.mxu0 0
    %1120 = vmatprep.subr.bf16.mxu0 0
    %1121 = vmatpush1.bf16.msra.mxu0 0
    %1122 = vmatprep.mubr.bf16.mxu0 0
    %1123 = vmatmul.mubr.bf16.gmra.mrb[0].mxu0 %v568
    %v1124 = vpop.f32.mrb[0].mxu0
    %v1125 = vadd.f32 0.0, %v1124
    %v1126 = vpop.f32.mrb[0].mxu0
    %v1127 = vadd.f32 0.0, %v1126
    %v1128 = vpop.f32.mrb[0].mxu0
    %v1129 = vpop.f32.mrb[0].mxu0
    %1130 = vdwg.mxu0
    %1131 = vmatprep.subr.bf16.mxu0 %v201
    %1132 = vmatpush1.bf16.msra.mxu0 %v200
    %1133 = vmatprep.subr.bf16.mxu0 %v205
    %1134 = vmatpush1.bf16.msra.mxu0 %v204
    %1135 = vmatprep.subr.bf16.mxu0 %v209
    %1136 = vmatpush1.bf16.msra.mxu0 %v208
    %1137 = vmatprep.subr.bf16.mxu0 %v213
    %1138 = vmatpush1.bf16.msra.mxu0 %v212
    %1139 = vmatprep.subr.bf16.mxu0 %v217
    %1140 = vmatpush1.bf16.msra.mxu0 %v216
    %1141 = vmatprep.subr.bf16.mxu0 %v221
    %1142 = vmatpush1.bf16.msra.mxu0 %v220
    %1143 = vmatprep.subr.bf16.mxu0 %v225
    %1144 = vmatpush1.bf16.msra.mxu0 %v224
    %1145 = vmatprep.subr.bf16.mxu0 %v229
    %1146 = vmatpush1.bf16.msra.mxu0 %v228
    %1147 = vmatprep.subr.bf16.mxu0 0
    %1148 = vmatpush1.bf16.msra.mxu0 0
    %1149 = vmatprep.subr.bf16.mxu0 0
    %1150 = vmatpush1.bf16.msra.mxu0 0
    %1151 = vmatprep.subr.bf16.mxu0 0
    %1152 = vmatpush1.bf16.msra.mxu0 0
    %1153 = vmatprep.subr.bf16.mxu0 0
    %1154 = vmatpush1.bf16.msra.mxu0 0
    %1155 = vmatprep.subr.bf16.mxu0 0
    %1156 = vmatpush1.bf16.msra.mxu0 0
    %1157 = vmatprep.subr.bf16.mxu0 0
    %1158 = vmatpush1.bf16.msra.mxu0 0
    %1159 = vmatprep.subr.bf16.mxu0 0
    %1160 = vmatpush1.bf16.msra.mxu0 0
    %1161 = vmatprep.subr.bf16.mxu0 0
    %1162 = vmatpush1.bf16.msra.mxu0 0
    %1163 = vmatprep.mubr.bf16.mxu0 0
    %1164 = vmatmul.mubr.bf16.gmra.mrb[0].mxu0 %v568
    %v1165 = vpop.f32.mrb[0].mxu0
    %v1166 = vadd.f32 0.0, %v1165
    %v1167 = vpop.f32.mrb[0].mxu0
    %v1168 = vadd.f32 0.0, %v1167
    %v1169 = vpop.f32.mrb[0].mxu0
    %v1170 = vpop.f32.mrb[0].mxu0
    %1171 = vdwg.mxu0
    %v1180 = vrot.slane %v1083, 7
    %v1181 = vsel %vm353, %v1180, %v1082
    %v1182 = vrot.slane %v1084, 6
    %v1183 = vsel %vm356, %v1182, %v1181
    %v1184 = vrot.slane %v1085, 5
    %v1185 = vsel %vm359, %v1184, %v1183
    %v1186 = vrot.slane %v1086, 4
    %v1187 = vsel %vm362, %v1186, %v1185
    %v1188 = vrot.slane %v1087, 3
    %v1189 = vsel %vm365, %v1188, %v1187
    %v1190 = vrot.slane %v1088, 2
    %v1191 = vsel %vm368, %v1190, %v1189
    %v1192 = vrot.slane %v1089, 1
    %v1193 = vsel %vm371, %v1192, %v1191
    %v1194 = vsel %vm373, %v1193, 0
    %1196 = vmatprep.subr.mxu0 %v67
    %1197 = vmatpush1.msra.mxu0 %v66
    %1198 = vmatprep.subr.mxu0 0.0
    %1199 = vmatpush1.msra.mxu0 0.0
    %1200 = vmatprep.subr.mxu0 0.0
    %1201 = vmatpush1.msra.mxu0 0.0
    %1202 = vmatprep.subr.mxu0 0.0
    %1203 = vmatpush1.msra.mxu0 0.0
    %1204 = vmatprep.subr.mxu0 0.0
    %1205 = vmatpush1.msra.mxu0 0.0
    %1206 = vmatprep.subr.mxu0 0.0
    %1207 = vmatpush1.msra.mxu0 0.0
    %1208 = vmatprep.subr.mxu0 0.0
    %1209 = vmatpush1.msra.mxu0 0.0
    %1210 = vmatprep.subr.mxu0 0.0
    %1211 = vmatpush1.msra.mxu0 0.0
    %1212 = vmatprep.subr.mxu0 0.0
    %1213 = vmatpush1.msra.mxu0 0.0
    %1214 = vmatprep.subr.mxu0 0.0
    %1215 = vmatpush1.msra.mxu0 0.0
    %1216 = vmatprep.subr.mxu0 0.0
    %1217 = vmatpush1.msra.mxu0 0.0
    %1218 = vmatprep.subr.mxu0 0.0
    %1219 = vmatpush1.msra.mxu0 0.0
    %1220 = vmatprep.subr.mxu0 0.0
    %1221 = vmatpush1.msra.mxu0 0.0
    %1222 = vmatprep.subr.mxu0 0.0
    %1223 = vmatpush1.msra.mxu0 0.0
    %1224 = vmatprep.subr.mxu0 0.0
    %1225 = vmatpush1.msra.mxu0 0.0
    %1226 = vmatprep.subr.mxu0 0.0
    %1227 = vmatpush1.msra.mxu0 0.0
    %1228 = vmatprep.subr.mxu0 0.0
    %1229 = vmatpush1.msra.mxu0 0.0
    %1230 = vmatprep.subr.mxu0 0.0
    %1231 = vmatpush1.msra.mxu0 0.0
    %1232 = vmatprep.subr.mxu0 0.0
    %1233 = vmatpush1.msra.mxu0 0.0
    %1234 = vmatprep.subr.mxu0 0.0
    %1235 = vmatpush1.msra.mxu0 0.0
    %1236 = vmatprep.subr.mxu0 0.0
    %1237 = vmatpush1.msra.mxu0 0.0
    %1238 = vmatprep.subr.mxu0 0.0
    %1239 = vmatpush1.msra.mxu0 0.0
    %1240 = vmatprep.subr.mxu0 0.0
    %1241 = vmatpush1.msra.mxu0 0.0
    %1242 = vmatprep.subr.mxu0 0.0
    %1243 = vmatpush1.msra.mxu0 0.0
    %1244 = vmatprep.subr.mxu0 0.0
    %1245 = vmatpush1.msra.mxu0 0.0
    %1246 = vmatprep.subr.mxu0 0.0
    %1247 = vmatpush1.msra.mxu0 0.0
    %1248 = vmatprep.subr.mxu0 0.0
    %1249 = vmatpush1.msra.mxu0 0.0
    %1250 = vmatprep.subr.mxu0 0.0
    %1251 = vmatpush1.msra.mxu0 0.0
    %1252 = vmatprep.subr.mxu0 0.0
    %1253 = vmatpush1.msra.mxu0 0.0
    %1254 = vmatprep.subr.mxu0 0.0
    %1255 = vmatpush1.msra.mxu0 0.0
    %1256 = vmatprep.subr.mxu0 0.0
    %1257 = vmatpush1.msra.mxu0 0.0
    %1258 = vmatprep.subr.mxu0 0.0
    %1259 = vmatpush1.msra.mxu0 0.0
    %1260 = vmatprep.mubr.f32.mxu0 0.0
    %1261 = vmatmul.mubr.f32.gmra.mrb[0].mxu0 %v1194
    %v1262 = vpop.f32.mrb[0].mxu0
    %v1263 = vadd.f32 %v1125, %v1262
    %v1264 = vpop.f32.mrb[0].mxu0
    %v1265 = vadd.f32 %v1127, %v1264
    %1266 = vdwg.mxu0
    %1267 = vmatprep.subr.mxu0 %v69
    %1268 = vmatpush1.msra.mxu0 %v68
    %1269 = vmatprep.subr.mxu0 0.0
    %1270 = vmatpush1.msra.mxu0 0.0
    %1271 = vmatprep.subr.mxu0 0.0
    %1272 = vmatpush1.msra.mxu0 0.0
    %1273 = vmatprep.subr.mxu0 0.0
    %1274 = vmatpush1.msra.mxu0 0.0
    %1275 = vmatprep.subr.mxu0 0.0
    %1276 = vmatpush1.msra.mxu0 0.0
    %1277 = vmatprep.subr.mxu0 0.0
    %1278 = vmatpush1.msra.mxu0 0.0
    %1279 = vmatprep.subr.mxu0 0.0
    %1280 = vmatpush1.msra.mxu0 0.0
    %1281 = vmatprep.subr.mxu0 0.0
    %1282 = vmatpush1.msra.mxu0 0.0
    %1283 = vmatprep.subr.mxu0 0.0
    %1284 = vmatpush1.msra.mxu0 0.0
    %1285 = vmatprep.subr.mxu0 0.0
    %1286 = vmatpush1.msra.mxu0 0.0
    %1287 = vmatprep.subr.mxu0 0.0
    %1288 = vmatpush1.msra.mxu0 0.0
    %1289 = vmatprep.subr.mxu0 0.0
    %1290 = vmatpush1.msra.mxu0 0.0
    %1291 = vmatprep.subr.mxu0 0.0
    %1292 = vmatpush1.msra.mxu0 0.0
    %1293 = vmatprep.subr.mxu0 0.0
    %1294 = vmatpush1.msra.mxu0 0.0
    %1295 = vmatprep.subr.mxu0 0.0
    %1296 = vmatpush1.msra.mxu0 0.0
    %1297 = vmatprep.subr.mxu0 0.0
    %1298 = vmatpush1.msra.mxu0 0.0
    %1299 = vmatprep.subr.mxu0 0.0
    %1300 = vmatpush1.msra.mxu0 0.0
    %1301 = vmatprep.subr.mxu0 0.0
    %1302 = vmatpush1.msra.mxu0 0.0
    %1303 = vmatprep.subr.mxu0 0.0
    %1304 = vmatpush1.msra.mxu0 0.0
    %1305 = vmatprep.subr.mxu0 0.0
    %1306 = vmatpush1.msra.mxu0 0.0
    %1307 = vmatprep.subr.mxu0 0.0
    %1308 = vmatpush1.msra.mxu0 0.0
    %1309 = vmatprep.subr.mxu0 0.0
    %1310 = vmatpush1.msra.mxu0 0.0
    %1311 = vmatprep.subr.mxu0 0.0
    %1312 = vmatpush1.msra.mxu0 0.0
    %1313 = vmatprep.subr.mxu0 0.0
    %1314 = vmatpush1.msra.mxu0 0.0
    %1315 = vmatprep.subr.mxu0 0.0
    %1316 = vmatpush1.msra.mxu0 0.0
    %1317 = vmatprep.subr.mxu0 0.0
    %1318 = vmatpush1.msra.mxu0 0.0
    %1319 = vmatprep.subr.mxu0 0.0
    %1320 = vmatpush1.msra.mxu0 0.0
    %1321 = vmatprep.subr.mxu0 0.0
    %1322 = vmatpush1.msra.mxu0 0.0
    %1323 = vmatprep.subr.mxu0 0.0
    %1324 = vmatpush1.msra.mxu0 0.0
    %1325 = vmatprep.subr.mxu0 0.0
    %1326 = vmatpush1.msra.mxu0 0.0
    %1327 = vmatprep.subr.mxu0 0.0
    %1328 = vmatpush1.msra.mxu0 0.0
    %1329 = vmatprep.subr.mxu0 0.0
    %1330 = vmatpush1.msra.mxu0 0.0
    %1331 = vmatprep.mubr.f32.mxu0 0.0
    %1332 = vmatmul.mubr.f32.gmra.mrb[0].mxu0 %v1194
    %v1333 = vpop.f32.mrb[0].mxu0
    %v1334 = vadd.f32 %v1166, %v1333
    %v1335 = vpop.f32.mrb[0].mxu0
    %v1336 = vadd.f32 %v1168, %v1335
    %1337 = vdwg.mxu0
    %v1338 = vadd.f32 %v1263, %v523
    %v1339 = vadd.f32 %v1265, %v527
    %v1340 = vadd.f32 %v1334, %v531
    %v1341 = vadd.f32 %v1336, %v535
    %v1342 = vxor.u32 %v1338, 2147483648
    %v1343 = vxor.u32 %v1339, 2147483648
    %v1344 = vmul.f32 %v1342, 1.442695
    %v1345 = vpow.pop %v1344
    %v1346 = vmul.f32 %v1343, 1.442695
    %v1347 = vpow.pop %v1346
    %v1348 = vadd.f32 %v1345, 1.0
    %v1349 = vadd.f32 %v1347, 1.0
    %v1350 = vrcp.pop %v1348
    %v1351 = vmul.f32 1.0, %v1350
    %v1352 = vrcp.pop %v1349
    %v1353 = vmul.f32 1.0, %v1352
    %v1354 = vtanh.pop %v1340
    %v1355 = vxor.u32 %v1341, 2147483648
    %v1356 = vmul.f32 %v1355, 1.442695
    %v1357 = vpow.pop %v1356
    %v1358 = vadd.f32 %v1357, 1.0
    %v1359 = vrcp.pop %v1358
    %v1360 = vmul.f32 1.0, %v1359
    %v1361 = vmul.f32 %v1353, %v565
    %v1362 = vmul.f32 %v1351, %v1354
    %v1363 = vadd.f32 %v1361, %v1362
    %v1364 = vtanh.pop %v1363
    %v1365 = vmul.f32 %v1360, %v1364
    %v1366 = vpack.c.bf16 %v1365, %v1365
    %v1367 = vpack.c.bf16 %v1081, %v1081
    %1368 = vmatprep.subr.bf16.mxu0 %v849
    %1369 = vmatpush1.bf16.msra.mxu0 %v848
    %1370 = vmatprep.subr.bf16.mxu0 %v853
    %1371 = vmatpush1.bf16.msra.mxu0 %v852
    %1372 = vmatprep.subr.bf16.mxu0 %v857
    %1373 = vmatpush1.bf16.msra.mxu0 %v856
    %1374 = vmatprep.subr.bf16.mxu0 %v861
    %1375 = vmatpush1.bf16.msra.mxu0 %v860
    %1376 = vmatprep.subr.bf16.mxu0 %v865
    %1377 = vmatpush1.bf16.msra.mxu0 %v864
    %1378 = vmatprep.subr.bf16.mxu0 %v869
    %1379 = vmatpush1.bf16.msra.mxu0 %v868
    %1380 = vmatprep.subr.bf16.mxu0 %v873
    %1381 = vmatpush1.bf16.msra.mxu0 %v872
    %1382 = vmatprep.subr.bf16.mxu0 %v877
    %1383 = vmatpush1.bf16.msra.mxu0 %v876
    %1384 = vmatprep.subr.bf16.mxu0 %v881
    %1385 = vmatpush1.bf16.msra.mxu0 %v880
    %1386 = vmatprep.subr.bf16.mxu0 %v885
    %1387 = vmatpush1.bf16.msra.mxu0 %v884
    %1388 = vmatprep.subr.bf16.mxu0 %v889
    %1389 = vmatpush1.bf16.msra.mxu0 %v888
    %1390 = vmatprep.subr.bf16.mxu0 %v893
    %1391 = vmatpush1.bf16.msra.mxu0 %v892
    %1392 = vmatprep.subr.bf16.mxu0 %v897
    %1393 = vmatpush1.bf16.msra.mxu0 %v896
    %1394 = vmatprep.subr.bf16.mxu0 %v901
    %1395 = vmatpush1.bf16.msra.mxu0 %v900
    %1396 = vmatprep.subr.bf16.mxu0 %v905
    %1397 = vmatpush1.bf16.msra.mxu0 %v904
    %1398 = vmatprep.subr.bf16.mxu0 %v909
    %1399 = vmatpush1.bf16.msra.mxu0 %v908
    %1400 = vmatprep.mubr.bf16.mxu0 %v1367
    %1401 = vmatmul.mubr.bf16.gmra.mrb[0].mxu0 %v1366
    %v1402 = vpop.f32.mrb[0].mxu0
    %v1403 = vadd.f32 %v639, %v1402
    %v1404 = vpop.f32.mrb[0].mxu0
    %v1405 = vadd.f32 %v643, %v1404
    %v1406 = vpop.f32.mrb[0].mxu0
    %v1407 = vpop.f32.mrb[0].mxu0
    %1408 = vdwg.mxu0
    %1409 = vmatprep.subr.bf16.mxu0 %v851
    %1410 = vmatpush1.bf16.msra.mxu0 %v850
    %1411 = vmatprep.subr.bf16.mxu0 %v855
    %1412 = vmatpush1.bf16.msra.mxu0 %v854
    %1413 = vmatprep.subr.bf16.mxu0 %v859
    %1414 = vmatpush1.bf16.msra.mxu0 %v858
    %1415 = vmatprep.subr.bf16.mxu0 %v863
    %1416 = vmatpush1.bf16.msra.mxu0 %v862
    %1417 = vmatprep.subr.bf16.mxu0 %v867
    %1418 = vmatpush1.bf16.msra.mxu0 %v866
    %1419 = vmatprep.subr.bf16.mxu0 %v871
    %1420 = vmatpush1.bf16.msra.mxu0 %v870
    %1421 = vmatprep.subr.bf16.mxu0 %v875
    %1422 = vmatpush1.bf16.msra.mxu0 %v874
    %1423 = vmatprep.subr.bf16.mxu0 %v879
    %1424 = vmatpush1.bf16.msra.mxu0 %v878
    %1425 = vmatprep.subr.bf16.mxu0 %v883
    %1426 = vmatpush1.bf16.msra.mxu0 %v882
    %1427 = vmatprep.subr.bf16.mxu0 %v887
    %1428 = vmatpush1.bf16.msra.mxu0 %v886
    %1429 = vmatprep.subr.bf16.mxu0 %v891
    %1430 = vmatpush1.bf16.msra.mxu0 %v890
    %1431 = vmatprep.subr.bf16.mxu0 %v895
    %1432 = vmatpush1.bf16.msra.mxu0 %v894
    %1433 = vmatprep.subr.bf16.mxu0 %v899
    %1434 = vmatpush1.bf16.msra.mxu0 %v898
    %1435 = vmatprep.subr.bf16.mxu0 %v903
    %1436 = vmatpush1.bf16.msra.mxu0 %v902
    %1437 = vmatprep.subr.bf16.mxu0 %v907
    %1438 = vmatpush1.bf16.msra.mxu0 %v906
    %1439 = vmatprep.subr.bf16.mxu0 %v911
    %1440 = vmatpush1.bf16.msra.mxu0 %v910
    %1441 = vmatprep.mubr.bf16.mxu0 %v1367
    %1442 = vmatmul.mubr.bf16.gmra.mrb[0].mxu0 %v1366
    %v1443 = vpop.f32.mrb[0].mxu0
    %v1444 = vadd.f32 %v647, %v1443
    %v1445 = vpop.f32.mrb[0].mxu0
    %v1446 = vadd.f32 %v651, %v1445
    %v1447 = vpop.f32.mrb[0].mxu0
    %v1448 = vpop.f32.mrb[0].mxu0
    %1449 = vdwg.mxu0
    %v1450 = vxor.u32 %v1403, 2147483648
    %v1451 = vxor.u32 %v1405, 2147483648
    %v1452 = vmul.f32 %v1450, 1.442695
    %v1453 = vpow.pop %v1452
    %v1454 = vmul.f32 %v1451, 1.442695
    %v1455 = vpow.pop %v1454
    %v1456 = vadd.f32 %v1453, 1.0
    %v1457 = vadd.f32 %v1455, 1.0
    %v1458 = vrcp.pop %v1456
    %v1459 = vmul.f32 1.0, %v1458
    %v1460 = vrcp.pop %v1457
    %v1461 = vmul.f32 1.0, %v1460
    %v1462 = vtanh.pop %v1444
    %v1463 = vxor.u32 %v1446, 2147483648
    %v1464 = vmul.f32 %v1463, 1.442695
    %v1465 = vpow.pop %v1464
    %v1466 = vadd.f32 %v1465, 1.0
    %v1467 = vrcp.pop %v1466
    %v1468 = vmul.f32 1.0, %v1467
    %v1469 = vmul.f32 %v1461, %v1079
    %v1470 = vmul.f32 %v1459, %v1462
    %v1471 = vadd.f32 %v1469, %v1470
    %v1472 = vtanh.pop %v1471
    %v1473 = vmul.f32 %v1468, %v1472
    %v1474 = vld [vmem:[%s0 + $0x2] sm:$0x1]
    %v1475 = vld [vmem:[%s0 + $0xa] sm:$0x1]
    %v1476 = vld [vmem:[%s0 + $0x12] sm:$0x1]
    %v1477 = vld [vmem:[%s0 + $0x1a] sm:$0x1]
    %v1478 = vld [vmem:[%s0 + $0x22] sm:$0x1]
    %v1479 = vld [vmem:[%s0 + $0x2a] sm:$0x1]
    %v1480 = vld [vmem:[%s0 + $0x32] sm:$0x1]
    %v1481 = vld [vmem:[%s0 + $0x3a] sm:$0x1]
    %1482 = vmatprep.subr.bf16.mxu0 %v199
    %1483 = vmatpush1.bf16.msra.mxu0 %v198
    %1484 = vmatprep.subr.bf16.mxu0 %v203
    %1485 = vmatpush1.bf16.msra.mxu0 %v202
    %1486 = vmatprep.subr.bf16.mxu0 %v207
    %1487 = vmatpush1.bf16.msra.mxu0 %v206
    %1488 = vmatprep.subr.bf16.mxu0 %v211
    %1489 = vmatpush1.bf16.msra.mxu0 %v210
    %1490 = vmatprep.subr.bf16.mxu0 %v215
    %1491 = vmatpush1.bf16.msra.mxu0 %v214
    %1492 = vmatprep.subr.bf16.mxu0 %v219
    %1493 = vmatpush1.bf16.msra.mxu0 %v218
    %1494 = vmatprep.subr.bf16.mxu0 %v223
    %1495 = vmatpush1.bf16.msra.mxu0 %v222
    %1496 = vmatprep.subr.bf16.mxu0 %v227
    %1497 = vmatpush1.bf16.msra.mxu0 %v226
    %1498 = vmatprep.subr.bf16.mxu0 0
    %1499 = vmatpush1.bf16.msra.mxu0 0
    %1500 = vmatprep.subr.bf16.mxu0 0
    %1501 = vmatpush1.bf16.msra.mxu0 0
    %1502 = vmatprep.subr.bf16.mxu0 0
    %1503 = vmatpush1.bf16.msra.mxu0 0
    %1504 = vmatprep.subr.bf16.mxu0 0
    %1505 = vmatpush1.bf16.msra.mxu0 0
    %1506 = vmatprep.subr.bf16.mxu0 0
    %1507 = vmatpush1.bf16.msra.mxu0 0
    %1508 = vmatprep.subr.bf16.mxu0 0
    %1509 = vmatpush1.bf16.msra.mxu0 0
    %1510 = vmatprep.subr.bf16.mxu0 0
    %1511 = vmatpush1.bf16.msra.mxu0 0
    %1512 = vmatprep.subr.bf16.mxu0 0
    %1513 = vmatpush1.bf16.msra.mxu0 0
    %1514 = vmatprep.mubr.bf16.mxu0 0
    %1515 = vmatmul.mubr.bf16.gmra.mrb[0].mxu0 %v1366
    %v1516 = vpop.f32.mrb[0].mxu0
    %v1517 = vadd.f32 0.0, %v1516
    %v1518 = vpop.f32.mrb[0].mxu0
    %v1519 = vadd.f32 0.0, %v1518
    %v1520 = vpop.f32.mrb[0].mxu0
    %v1521 = vpop.f32.mrb[0].mxu0
    %1522 = vdwg.mxu0
    %1523 = vmatprep.subr.bf16.mxu0 %v201
    %1524 = vmatpush1.bf16.msra.mxu0 %v200
    %1525 = vmatprep.subr.bf16.mxu0 %v205
    %1526 = vmatpush1.bf16.msra.mxu0 %v204
    %1527 = vmatprep.subr.bf16.mxu0 %v209
    %1528 = vmatpush1.bf16.msra.mxu0 %v208
    %1529 = vmatprep.subr.bf16.mxu0 %v213
    %1530 = vmatpush1.bf16.msra.mxu0 %v212
    %1531 = vmatprep.subr.bf16.mxu0 %v217
    %1532 = vmatpush1.bf16.msra.mxu0 %v216
    %1533 = vmatprep.subr.bf16.mxu0 %v221
    %1534 = vmatpush1.bf16.msra.mxu0 %v220
    %1535 = vmatprep.subr.bf16.mxu0 %v225
    %1536 = vmatpush1.bf16.msra.mxu0 %v224
    %1537 = vmatprep.subr.bf16.mxu0 %v229
    %1538 = vmatpush1.bf16.msra.mxu0 %v228
    %1539 = vmatprep.subr.bf16.mxu0 0
    %1540 = vmatpush1.bf16.msra.mxu0 0
    %1541 = vmatprep.subr.bf16.mxu0 0
    %1542 = vmatpush1.bf16.msra.mxu0 0
    %1543 = vmatprep.subr.bf16.mxu0 0
    %1544 = vmatpush1.bf16.msra.mxu0 0
    %1545 = vmatprep.subr.bf16.mxu0 0
    %1546 = vmatpush1.bf16.msra.mxu0 0
    %1547 = vmatprep.subr.bf16.mxu0 0
    %1548 = vmatpush1.bf16.msra.mxu0 0
    %1549 = vmatprep.subr.bf16.mxu0 0
    %1550 = vmatpush1.bf16.msra.mxu0 0
    %1551 = vmatprep.subr.bf16.mxu0 0
    %1552 = vmatpush1.bf16.msra.mxu0 0
    %1553 = vmatprep.subr.bf16.mxu0 0
    %1554 = vmatpush1.bf16.msra.mxu0 0
    %1555 = vmatprep.mubr.bf16.mxu0 0
    %1556 = vmatmul.mubr.bf16.gmra.mrb[0].mxu0 %v1366
    %v1557 = vpop.f32.mrb[0].mxu0
    %v1558 = vadd.f32 0.0, %v1557
    %v1559 = vpop.f32.mrb[0].mxu0
    %v1560 = vadd.f32 0.0, %v1559
    %v1561 = vpop.f32.mrb[0].mxu0
    %v1562 = vpop.f32.mrb[0].mxu0
    %1563 = vdwg.mxu0
    %v1572 = vrot.slane %v1475, 7
    %v1573 = vsel %vm353, %v1572, %v1474
    %v1574 = vrot.slane %v1476, 6
    %v1575 = vsel %vm356, %v1574, %v1573
    %v1576 = vrot.slane %v1477, 5
    %v1577 = vsel %vm359, %v1576, %v1575
    %v1578 = vrot.slane %v1478, 4
    %v1579 = vsel %vm362, %v1578, %v1577
    %v1580 = vrot.slane %v1479, 3
    %v1581 = vsel %vm365, %v1580, %v1579
    %v1582 = vrot.slane %v1480, 2
    %v1583 = vsel %vm368, %v1582, %v1581
    %v1584 = vrot.slane %v1481, 1
    %v1585 = vsel %vm371, %v1584, %v1583
    %v1586 = vsel %vm373, %v1585, 0
    %1588 = vmatprep.subr.mxu0 %v67
    %1589 = vmatpush1.msra.mxu0 %v66
    %1590 = vmatprep.subr.mxu0 0.0
    %1591 = vmatpush1.msra.mxu0 0.0
    %1592 = vmatprep.subr.mxu0 0.0
    %1593 = vmatpush1.msra.mxu0 0.0
    %1594 = vmatprep.subr.mxu0 0.0
    %1595 = vmatpush1.msra.mxu0 0.0
    %1596 = vmatprep.subr.mxu0 0.0
    %1597 = vmatpush1.msra.mxu0 0.0
    %1598 = vmatprep.subr.mxu0 0.0
    %1599 = vmatpush1.msra.mxu0 0.0
    %1600 = vmatprep.subr.mxu0 0.0
    %1601 = vmatpush1.msra.mxu0 0.0
    %1602 = vmatprep.subr.mxu0 0.0
    %1603 = vmatpush1.msra.mxu0 0.0
    %1604 = vmatprep.subr.mxu0 0.0
    %1605 = vmatpush1.msra.mxu0 0.0
    %1606 = vmatprep.subr.mxu0 0.0
    %1607 = vmatpush1.msra.mxu0 0.0
    %1608 = vmatprep.subr.mxu0 0.0
    %1609 = vmatpush1.msra.mxu0 0.0
    %1610 = vmatprep.subr.mxu0 0.0
    %1611 = vmatpush1.msra.mxu0 0.0
    %1612 = vmatprep.subr.mxu0 0.0
    %1613 = vmatpush1.msra.mxu0 0.0
    %1614 = vmatprep.subr.mxu0 0.0
    %1615 = vmatpush1.msra.mxu0 0.0
    %1616 = vmatprep.subr.mxu0 0.0
    %1617 = vmatpush1.msra.mxu0 0.0
    %1618 = vmatprep.subr.mxu0 0.0
    %1619 = vmatpush1.msra.mxu0 0.0
    %1620 = vmatprep.subr.mxu0 0.0
    %1621 = vmatpush1.msra.mxu0 0.0
    %1622 = vmatprep.subr.mxu0 0.0
    %1623 = vmatpush1.msra.mxu0 0.0
    %1624 = vmatprep.subr.mxu0 0.0
    %1625 = vmatpush1.msra.mxu0 0.0
    %1626 = vmatprep.subr.mxu0 0.0
    %1627 = vmatpush1.msra.mxu0 0.0
    %1628 = vmatprep.subr.mxu0 0.0
    %1629 = vmatpush1.msra.mxu0 0.0
    %1630 = vmatprep.subr.mxu0 0.0
    %1631 = vmatpush1.msra.mxu0 0.0
    %1632 = vmatprep.subr.mxu0 0.0
    %1633 = vmatpush1.msra.mxu0 0.0
    %1634 = vmatprep.subr.mxu0 0.0
    %1635 = vmatpush1.msra.mxu0 0.0
    %1636 = vmatprep.subr.mxu0 0.0
    %1637 = vmatpush1.msra.mxu0 0.0
    %1638 = vmatprep.subr.mxu0 0.0
    %1639 = vmatpush1.msra.mxu0 0.0
    %1640 = vmatprep.subr.mxu0 0.0
    %1641 = vmatpush1.msra.mxu0 0.0
    %1642 = vmatprep.subr.mxu0 0.0
    %1643 = vmatpush1.msra.mxu0 0.0
    %1644 = vmatprep.subr.mxu0 0.0
    %1645 = vmatpush1.msra.mxu0 0.0
    %1646 = vmatprep.subr.mxu0 0.0
    %1647 = vmatpush1.msra.mxu0 0.0
    %1648 = vmatprep.subr.mxu0 0.0
    %1649 = vmatpush1.msra.mxu0 0.0
    %1650 = vmatprep.subr.mxu0 0.0
    %1651 = vmatpush1.msra.mxu0 0.0
    %1652 = vmatprep.mubr.f32.mxu0 0.0
    %1653 = vmatmul.mubr.f32.gmra.mrb[0].mxu0 %v1586
    %v1654 = vpop.f32.mrb[0].mxu0
    %v1655 = vadd.f32 %v1517, %v1654
    %v1656 = vpop.f32.mrb[0].mxu0
    %v1657 = vadd.f32 %v1519, %v1656
    %1658 = vdwg.mxu0
    %1659 = vmatprep.subr.mxu0 %v69
    %1660 = vmatpush1.msra.mxu0 %v68
    %1661 = vmatprep.subr.mxu0 0.0
    %1662 = vmatpush1.msra.mxu0 0.0
    %1663 = vmatprep.subr.mxu0 0.0
    %1664 = vmatpush1.msra.mxu0 0.0
    %1665 = vmatprep.subr.mxu0 0.0
    %1666 = vmatpush1.msra.mxu0 0.0
    %1667 = vmatprep.subr.mxu0 0.0
    %1668 = vmatpush1.msra.mxu0 0.0
    %1669 = vmatprep.subr.mxu0 0.0
    %1670 = vmatpush1.msra.mxu0 0.0
    %1671 = vmatprep.subr.mxu0 0.0
    %1672 = vmatpush1.msra.mxu0 0.0
    %1673 = vmatprep.subr.mxu0 0.0
    %1674 = vmatpush1.msra.mxu0 0.0
    %1675 = vmatprep.subr.mxu0 0.0
    %1676 = vmatpush1.msra.mxu0 0.0
    %1677 = vmatprep.subr.mxu0 0.0
    %1678 = vmatpush1.msra.mxu0 0.0
    %1679 = vmatprep.subr.mxu0 0.0
    %1680 = vmatpush1.msra.mxu0 0.0
    %1681 = vmatprep.subr.mxu0 0.0
    %1682 = vmatpush1.msra.mxu0 0.0
    %1683 = vmatprep.subr.mxu0 0.0
    %1684 = vmatpush1.msra.mxu0 0.0
    %1685 = vmatprep.subr.mxu0 0.0
    %1686 = vmatpush1.msra.mxu0 0.0
    %1687 = vmatprep.subr.mxu0 0.0
    %1688 = vmatpush1.msra.mxu0 0.0
    %1689 = vmatprep.subr.mxu0 0.0
    %1690 = vmatpush1.msra.mxu0 0.0
    %1691 = vmatprep.subr.mxu0 0.0
    %1692 = vmatpush1.msra.mxu0 0.0
    %1693 = vmatprep.subr.mxu0 0.0
    %1694 = vmatpush1.msra.mxu0 0.0
    %1695 = vmatprep.subr.mxu0 0.0
    %1696 = vmatpush1.msra.mxu0 0.0
    %1697 = vmatprep.subr.mxu0 0.0
    %1698 = vmatpush1.msra.mxu0 0.0
    %1699 = vmatprep.subr.mxu0 0.0
    %1700 = vmatpush1.msra.mxu0 0.0
    %1701 = vmatprep.subr.mxu0 0.0
    %1702 = vmatpush1.msra.mxu0 0.0
    %1703 = vmatprep.subr.mxu0 0.0
    %1704 = vmatpush1.msra.mxu0 0.0
    %1705 = vmatprep.subr.mxu0 0.0
    %1706 = vmatpush1.msra.mxu0 0.0
    %1707 = vmatprep.subr.mxu0 0.0
    %1708 = vmatpush1.msra.mxu0 0.0
    %1709 = vmatprep.subr.mxu0 0.0
    %1710 = vmatpush1.msra.mxu0 0.0
    %1711 = vmatprep.subr.mxu0 0.0
    %1712 = vmatpush1.msra.mxu0 0.0
    %1713 = vmatprep.subr.mxu0 0.0
    %1714 = vmatpush1.msra.mxu0 0.0
    %1715 = vmatprep.subr.mxu0 0.0
    %1716 = vmatpush1.msra.mxu0 0.0
    %1717 = vmatprep.subr.mxu0 0.0
    %1718 = vmatpush1.msra.mxu0 0.0
    %1719 = vmatprep.subr.mxu0 0.0
    %1720 = vmatpush1.msra.mxu0 0.0
    %1721 = vmatprep.subr.mxu0 0.0
    %1722 = vmatpush1.msra.mxu0 0.0
    %1723 = vmatprep.mubr.f32.mxu0 0.0
    %1724 = vmatmul.mubr.f32.gmra.mrb[0].mxu0 %v1586
    %v1725 = vpop.f32.mrb[0].mxu0
    %v1726 = vadd.f32 %v1558, %v1725
    %v1727 = vpop.f32.mrb[0].mxu0
    %v1728 = vadd.f32 %v1560, %v1727
    %1729 = vdwg.mxu0
    %v1730 = vadd.f32 %v1655, %v523
    %v1731 = vadd.f32 %v1657, %v527
    %v1732 = vadd.f32 %v1726, %v531
    %v1733 = vadd.f32 %v1728, %v535
    %v1734 = vxor.u32 %v1730, 2147483648
    %v1735 = vxor.u32 %v1731, 2147483648
    %v1736 = vmul.f32 %v1734, 1.442695
    %v1737 = vpow.pop %v1736
    %v1738 = vmul.f32 %v1735, 1.442695
    %v1739 = vpow.pop %v1738
    %v1740 = vadd.f32 %v1737, 1.0
    %v1741 = vadd.f32 %v1739, 1.0
    %v1742 = vrcp.pop %v1740
    %v1743 = vmul.f32 1.0, %v1742
    %v1744 = vrcp.pop %v1741
    %v1745 = vmul.f32 1.0, %v1744
    %v1746 = vtanh.pop %v1732
    %v1747 = vxor.u32 %v1733, 2147483648
    %v1748 = vmul.f32 %v1747, 1.442695
    %v1749 = vpow.pop %v1748
    %v1750 = vadd.f32 %v1749, 1.0
    %v1751 = vrcp.pop %v1750
    %v1752 = vmul.f32 1.0, %v1751
    %v1753 = vmul.f32 %v1745, %v1363
    %v1754 = vmul.f32 %v1743, %v1746
    %v1755 = vadd.f32 %v1753, %v1754
    %v1756 = vtanh.pop %v1755
    %v1757 = vmul.f32 %v1752, %v1756
    %v1758 = vpack.c.bf16 %v1757, %v1757
    %v1759 = vpack.c.bf16 %v1473, %v1473
    %1760 = vmatprep.subr.bf16.mxu0 %v849
    %1761 = vmatpush1.bf16.msra.mxu0 %v848
    %1762 = vmatprep.subr.bf16.mxu0 %v853
    %1763 = vmatpush1.bf16.msra.mxu0 %v852
    %1764 = vmatprep.subr.bf16.mxu0 %v857
    %1765 = vmatpush1.bf16.msra.mxu0 %v856
    %1766 = vmatprep.subr.bf16.mxu0 %v861
    %1767 = vmatpush1.bf16.msra.mxu0 %v860
    %1768 = vmatprep.subr.bf16.mxu0 %v865
    %1769 = vmatpush1.bf16.msra.mxu0 %v864
    %1770 = vmatprep.subr.bf16.mxu0 %v869
    %1771 = vmatpush1.bf16.msra.mxu0 %v868
    %1772 = vmatprep.subr.bf16.mxu0 %v873
    %1773 = vmatpush1.bf16.msra.mxu0 %v872
    %1774 = vmatprep.subr.bf16.mxu0 %v877
    %1775 = vmatpush1.bf16.msra.mxu0 %v876
    %1776 = vmatprep.subr.bf16.mxu0 %v881
    %1777 = vmatpush1.bf16.msra.mxu0 %v880
    %1778 = vmatprep.subr.bf16.mxu0 %v885
    %1779 = vmatpush1.bf16.msra.mxu0 %v884
    %1780 = vmatprep.subr.bf16.mxu0 %v889
    %1781 = vmatpush1.bf16.msra.mxu0 %v888
    %1782 = vmatprep.subr.bf16.mxu0 %v893
    %1783 = vmatpush1.bf16.msra.mxu0 %v892
    %1784 = vmatprep.subr.bf16.mxu0 %v897
    %1785 = vmatpush1.bf16.msra.mxu0 %v896
    %1786 = vmatprep.subr.bf16.mxu0 %v901
    %1787 = vmatpush1.bf16.msra.mxu0 %v900
    %1788 = vmatprep.subr.bf16.mxu0 %v905
    %1789 = vmatpush1.bf16.msra.mxu0 %v904
    %1790 = vmatprep.subr.bf16.mxu0 %v909
    %1791 = vmatpush1.bf16.msra.mxu0 %v908
    %1792 = vmatprep.mubr.bf16.mxu0 %v1759
    %1793 = vmatmul.mubr.bf16.gmra.mrb[0].mxu0 %v1758
    %v1794 = vpop.f32.mrb[0].mxu0
    %v1795 = vadd.f32 %v639, %v1794
    %v1796 = vpop.f32.mrb[0].mxu0
    %v1797 = vadd.f32 %v643, %v1796
    %v1798 = vpop.f32.mrb[0].mxu0
    %v1799 = vpop.f32.mrb[0].mxu0
    %1800 = vdwg.mxu0
    %1801 = vmatprep.subr.bf16.mxu0 %v851
    %1802 = vmatpush1.bf16.msra.mxu0 %v850
    %1803 = vmatprep.subr.bf16.mxu0 %v855
    %1804 = vmatpush1.bf16.msra.mxu0 %v854
    %1805 = vmatprep.subr.bf16.mxu0 %v859
    %1806 = vmatpush1.bf16.msra.mxu0 %v858
    %1807 = vmatprep.subr.bf16.mxu0 %v863
    %1808 = vmatpush1.bf16.msra.mxu0 %v862
    %1809 = vmatprep.subr.bf16.mxu0 %v867
    %1810 = vmatpush1.bf16.msra.mxu0 %v866
    %1811 = vmatprep.subr.bf16.mxu0 %v871
    %1812 = vmatpush1.bf16.msra.mxu0 %v870
    %1813 = vmatprep.subr.bf16.mxu0 %v875
    %1814 = vmatpush1.bf16.msra.mxu0 %v874
    %1815 = vmatprep.subr.bf16.mxu0 %v879
    %1816 = vmatpush1.bf16.msra.mxu0 %v878
    %1817 = vmatprep.subr.bf16.mxu0 %v883
    %1818 = vmatpush1.bf16.msra.mxu0 %v882
    %1819 = vmatprep.subr.bf16.mxu0 %v887
    %1820 = vmatpush1.bf16.msra.mxu0 %v886
    %1821 = vmatprep.subr.bf16.mxu0 %v891
    %1822 = vmatpush1.bf16.msra.mxu0 %v890
    %1823 = vmatprep.subr.bf16.mxu0 %v895
    %1824 = vmatpush1.bf16.msra.mxu0 %v894
    %1825 = vmatprep.subr.bf16.mxu0 %v899
    %1826 = vmatpush1.bf16.msra.mxu0 %v898
    %1827 = vmatprep.subr.bf16.mxu0 %v903
    %1828 = vmatpush1.bf16.msra.mxu0 %v902
    %1829 = vmatprep.subr.bf16.mxu0 %v907
    %1830 = vmatpush1.bf16.msra.mxu0 %v906
    %1831 = vmatprep.subr.bf16.mxu0 %v911
    %1832 = vmatpush1.bf16.msra.mxu0 %v910
    %1833 = vmatprep.mubr.bf16.mxu0 %v1759
    %1834 = vmatmul.mubr.bf16.gmra.mrb[0].mxu0 %v1758
    %v1835 = vpop.f32.mrb[0].mxu0
    %v1836 = vadd.f32 %v647, %v1835
    %v1837 = vpop.f32.mrb[0].mxu0
    %v1838 = vadd.f32 %v651, %v1837
    %v1839 = vpop.f32.mrb[0].mxu0
    %v1840 = vpop.f32.mrb[0].mxu0
    %1841 = vdwg.mxu0
    %v1842 = vxor.u32 %v1795, 2147483648
    %v1843 = vxor.u32 %v1797, 2147483648
    %v1844 = vmul.f32 %v1842, 1.442695
    %v1845 = vpow.pop %v1844
    %v1846 = vmul.f32 %v1843, 1.442695
    %v1847 = vpow.pop %v1846
    %v1848 = vadd.f32 %v1845, 1.0
    %v1849 = vadd.f32 %v1847, 1.0
    %v1850 = vrcp.pop %v1848
    %v1851 = vmul.f32 1.0, %v1850
    %v1852 = vrcp.pop %v1849
    %v1853 = vmul.f32 1.0, %v1852
    %v1854 = vtanh.pop %v1836
    %v1855 = vxor.u32 %v1838, 2147483648
    %v1856 = vmul.f32 %v1855, 1.442695
    %v1857 = vpow.pop %v1856
    %v1858 = vadd.f32 %v1857, 1.0
    %v1859 = vrcp.pop %v1858
    %v1860 = vmul.f32 1.0, %v1859
    %v1861 = vmul.f32 %v1853, %v1471
    %v1862 = vmul.f32 %v1851, %v1854
    %v1863 = vadd.f32 %v1861, %v1862
    %v1864 = vtanh.pop %v1863
    %v1865 = vmul.f32 %v1860, %v1864
    %v1866 = vld [vmem:[%s0 + $0x3] sm:$0x1]
    %v1867 = vld [vmem:[%s0 + $0xb] sm:$0x1]
    %v1868 = vld [vmem:[%s0 + $0x13] sm:$0x1]
    %v1869 = vld [vmem:[%s0 + $0x1b] sm:$0x1]
    %v1870 = vld [vmem:[%s0 + $0x23] sm:$0x1]
    %v1871 = vld [vmem:[%s0 + $0x2b] sm:$0x1]
    %v1872 = vld [vmem:[%s0 + $0x33] sm:$0x1]
    %v1873 = vld [vmem:[%s0 + $0x3b] sm:$0x1]
    %1874 = vmatprep.subr.bf16.mxu0 %v199
    %1875 = vmatpush1.bf16.msra.mxu0 %v198
    %1876 = vmatprep.subr.bf16.mxu0 %v203
    %1877 = vmatpush1.bf16.msra.mxu0 %v202
    %1878 = vmatprep.subr.bf16.mxu0 %v207
    %1879 = vmatpush1.bf16.msra.mxu0 %v206
    %1880 = vmatprep.subr.bf16.mxu0 %v211
    %1881 = vmatpush1.bf16.msra.mxu0 %v210
    %1882 = vmatprep.subr.bf16.mxu0 %v215
    %1883 = vmatpush1.bf16.msra.mxu0 %v214
    %1884 = vmatprep.subr.bf16.mxu0 %v219
    %1885 = vmatpush1.bf16.msra.mxu0 %v218
    %1886 = vmatprep.subr.bf16.mxu0 %v223
    %1887 = vmatpush1.bf16.msra.mxu0 %v222
    %1888 = vmatprep.subr.bf16.mxu0 %v227
    %1889 = vmatpush1.bf16.msra.mxu0 %v226
    %1890 = vmatprep.subr.bf16.mxu0 0
    %1891 = vmatpush1.bf16.msra.mxu0 0
    %1892 = vmatprep.subr.bf16.mxu0 0
    %1893 = vmatpush1.bf16.msra.mxu0 0
    %1894 = vmatprep.subr.bf16.mxu0 0
    %1895 = vmatpush1.bf16.msra.mxu0 0
    %1896 = vmatprep.subr.bf16.mxu0 0
    %1897 = vmatpush1.bf16.msra.mxu0 0
    %1898 = vmatprep.subr.bf16.mxu0 0
    %1899 = vmatpush1.bf16.msra.mxu0 0
    %1900 = vmatprep.subr.bf16.mxu0 0
    %1901 = vmatpush1.bf16.msra.mxu0 0
    %1902 = vmatprep.subr.bf16.mxu0 0
    %1903 = vmatpush1.bf16.msra.mxu0 0
    %1904 = vmatprep.subr.bf16.mxu0 0
    %1905 = vmatpush1.bf16.msra.mxu0 0
    %1906 = vmatprep.mubr.bf16.mxu0 0
    %1907 = vmatmul.mubr.bf16.gmra.mrb[0].mxu0 %v1758
    %v1908 = vpop.f32.mrb[0].mxu0
    %v1909 = vadd.f32 0.0, %v1908
    %v1910 = vpop.f32.mrb[0].mxu0
    %v1911 = vadd.f32 0.0, %v1910
    %v1912 = vpop.f32.mrb[0].mxu0
    %v1913 = vpop.f32.mrb[0].mxu0
    %1914 = vdwg.mxu0
    %1915 = vmatprep.subr.bf16.mxu0 %v201
    %1916 = vmatpush1.bf16.msra.mxu0 %v200
    %1917 = vmatprep.subr.bf16.mxu0 %v205
    %1918 = vmatpush1.bf16.msra.mxu0 %v204
    %1919 = vmatprep.subr.bf16.mxu0 %v209
    %1920 = vmatpush1.bf16.msra.mxu0 %v208
    %1921 = vmatprep.subr.bf16.mxu0 %v213
    %1922 = vmatpush1.bf16.msra.mxu0 %v212
    %1923 = vmatprep.subr.bf16.mxu0 %v217
    %1924 = vmatpush1.bf16.msra.mxu0 %v216
    %1925 = vmatprep.subr.bf16.mxu0 %v221
    %1926 = vmatpush1.bf16.msra.mxu0 %v220
    %1927 = vmatprep.subr.bf16.mxu0 %v225
    %1928 = vmatpush1.bf16.msra.mxu0 %v224
    %1929 = vmatprep.subr.bf16.mxu0 %v229
    %1930 = vmatpush1.bf16.msra.mxu0 %v228
    %1931 = vmatprep.subr.bf16.mxu0 0
    %1932 = vmatpush1.bf16.msra.mxu0 0
    %1933 = vmatprep.subr.bf16.mxu0 0
    %1934 = vmatpush1.bf16.msra.mxu0 0
    %1935 = vmatprep.subr.bf16.mxu0 0
    %1936 = vmatpush1.bf16.msra.mxu0 0
    %1937 = vmatprep.subr.bf16.mxu0 0
    %1938 = vmatpush1.bf16.msra.mxu0 0
    %1939 = vmatprep.subr.bf16.mxu0 0
    %1940 = vmatpush1.bf16.msra.mxu0 0
    %1941 = vmatprep.subr.bf16.mxu0 0
    %1942 = vmatpush1.bf16.msra.mxu0 0
    %1943 = vmatprep.subr.bf16.mxu0 0
    %1944 = vmatpush1.bf16.msra.mxu0 0
    %1945 = vmatprep.subr.bf16.mxu0 0
    %1946 = vmatpush1.bf16.msra.mxu0 0
    %1947 = vmatprep.mubr.bf16.mxu0 0
    %1948 = vmatmul.mubr.bf16.gmra.mrb[0].mxu0 %v1758
    %v1949 = vpop.f32.mrb[0].mxu0
    %v1950 = vadd.f32 0.0, %v1949
    %v1951 = vpop.f32.mrb[0].mxu0
    %v1952 = vadd.f32 0.0, %v1951
    %v1953 = vpop.f32.mrb[0].mxu0
    %v1954 = vpop.f32.mrb[0].mxu0
    %1955 = vdwg.mxu0
    %v1964 = vrot.slane %v1867, 7
    %v1965 = vsel %vm353, %v1964, %v1866
    %v1966 = vrot.slane %v1868, 6
    %v1967 = vsel %vm356, %v1966, %v1965
    %v1968 = vrot.slane %v1869, 5
    %v1969 = vsel %vm359, %v1968, %v1967
    %v1970 = vrot.slane %v1870, 4
    %v1971 = vsel %vm362, %v1970, %v1969
    %v1972 = vrot.slane %v1871, 3
    %v1973 = vsel %vm365, %v1972, %v1971
    %v1974 = vrot.slane %v1872, 2
    %v1975 = vsel %vm368, %v1974, %v1973
    %v1976 = vrot.slane %v1873, 1
    %v1977 = vsel %vm371, %v1976, %v1975
    %v1978 = vsel %vm373, %v1977, 0
    %1980 = vmatprep.subr.mxu0 %v67
    %1981 = vmatpush1.msra.mxu0 %v66
    %1982 = vmatprep.subr.mxu0 0.0
    %1983 = vmatpush1.msra.mxu0 0.0
    %1984 = vmatprep.subr.mxu0 0.0
    %1985 = vmatpush1.msra.mxu0 0.0
    %1986 = vmatprep.subr.mxu0 0.0
    %1987 = vmatpush1.msra.mxu0 0.0
    %1988 = vmatprep.subr.mxu0 0.0
    %1989 = vmatpush1.msra.mxu0 0.0
    %1990 = vmatprep.subr.mxu0 0.0
    %1991 = vmatpush1.msra.mxu0 0.0
    %1992 = vmatprep.subr.mxu0 0.0
    %1993 = vmatpush1.msra.mxu0 0.0
    %1994 = vmatprep.subr.mxu0 0.0
    %1995 = vmatpush1.msra.mxu0 0.0
    %1996 = vmatprep.subr.mxu0 0.0
    %1997 = vmatpush1.msra.mxu0 0.0
    %1998 = vmatprep.subr.mxu0 0.0
    %1999 = vmatpush1.msra.mxu0 0.0
    %2000 = vmatprep.subr.mxu0 0.0
    %2001 = vmatpush1.msra.mxu0 0.0
    %2002 = vmatprep.subr.mxu0 0.0
    %2003 = vmatpush1.msra.mxu0 0.0
    %2004 = vmatprep.subr.mxu0 0.0
    %2005 = vmatpush1.msra.mxu0 0.0
    %2006 = vmatprep.subr.mxu0 0.0
    %2007 = vmatpush1.msra.mxu0 0.0
    %2008 = vmatprep.subr.mxu0 0.0
    %2009 = vmatpush1.msra.mxu0 0.0
    %2010 = vmatprep.subr.mxu0 0.0
    %2011 = vmatpush1.msra.mxu0 0.0
    %2012 = vmatprep.subr.mxu0 0.0
    %2013 = vmatpush1.msra.mxu0 0.0
    %2014 = vmatprep.subr.mxu0 0.0
    %2015 = vmatpush1.msra.mxu0 0.0
    %2016 = vmatprep.subr.mxu0 0.0
    %2017 = vmatpush1.msra.mxu0 0.0
    %2018 = vmatprep.subr.mxu0 0.0
    %2019 = vmatpush1.msra.mxu0 0.0
    %2020 = vmatprep.subr.mxu0 0.0
    %2021 = vmatpush1.msra.mxu0 0.0
    %2022 = vmatprep.subr.mxu0 0.0
    %2023 = vmatpush1.msra.mxu0 0.0
    %2024 = vmatprep.subr.mxu0 0.0
    %2025 = vmatpush1.msra.mxu0 0.0
    %2026 = vmatprep.subr.mxu0 0.0
    %2027 = vmatpush1.msra.mxu0 0.0
    %2028 = vmatprep.subr.mxu0 0.0
    %2029 = vmatpush1.msra.mxu0 0.0
    %2030 = vmatprep.subr.mxu0 0.0
    %2031 = vmatpush1.msra.mxu0 0.0
    %2032 = vmatprep.subr.mxu0 0.0
    %2033 = vmatpush1.msra.mxu0 0.0
    %2034 = vmatprep.subr.mxu0 0.0
    %2035 = vmatpush1.msra.mxu0 0.0
    %2036 = vmatprep.subr.mxu0 0.0
    %2037 = vmatpush1.msra.mxu0 0.0
    %2038 = vmatprep.subr.mxu0 0.0
    %2039 = vmatpush1.msra.mxu0 0.0
    %2040 = vmatprep.subr.mxu0 0.0
    %2041 = vmatpush1.msra.mxu0 0.0
    %2042 = vmatprep.subr.mxu0 0.0
    %2043 = vmatpush1.msra.mxu0 0.0
    %2044 = vmatprep.mubr.f32.mxu0 0.0
    %2045 = vmatmul.mubr.f32.gmra.mrb[0].mxu0 %v1978
    %v2046 = vpop.f32.mrb[0].mxu0
    %v2047 = vadd.f32 %v1909, %v2046
    %v2048 = vpop.f32.mrb[0].mxu0
    %v2049 = vadd.f32 %v1911, %v2048
    %2050 = vdwg.mxu0
    %2051 = vmatprep.subr.mxu0 %v69
    %2052 = vmatpush1.msra.mxu0 %v68
    %2053 = vmatprep.subr.mxu0 0.0
    %2054 = vmatpush1.msra.mxu0 0.0
    %2055 = vmatprep.subr.mxu0 0.0
    %2056 = vmatpush1.msra.mxu0 0.0
    %2057 = vmatprep.subr.mxu0 0.0
    %2058 = vmatpush1.msra.mxu0 0.0
    %2059 = vmatprep.subr.mxu0 0.0
    %2060 = vmatpush1.msra.mxu0 0.0
    %2061 = vmatprep.subr.mxu0 0.0
    %2062 = vmatpush1.msra.mxu0 0.0
    %2063 = vmatprep.subr.mxu0 0.0
    %2064 = vmatpush1.msra.mxu0 0.0
    %2065 = vmatprep.subr.mxu0 0.0
    %2066 = vmatpush1.msra.mxu0 0.0
    %2067 = vmatprep.subr.mxu0 0.0
    %2068 = vmatpush1.msra.mxu0 0.0
    %2069 = vmatprep.subr.mxu0 0.0
    %2070 = vmatpush1.msra.mxu0 0.0
    %2071 = vmatprep.subr.mxu0 0.0
    %2072 = vmatpush1.msra.mxu0 0.0
    %2073 = vmatprep.subr.mxu0 0.0
    %2074 = vmatpush1.msra.mxu0 0.0
    %2075 = vmatprep.subr.mxu0 0.0
    %2076 = vmatpush1.msra.mxu0 0.0
    %2077 = vmatprep.subr.mxu0 0.0
    %2078 = vmatpush1.msra.mxu0 0.0
    %2079 = vmatprep.subr.mxu0 0.0
    %2080 = vmatpush1.msra.mxu0 0.0
    %2081 = vmatprep.subr.mxu0 0.0
    %2082 = vmatpush1.msra.mxu0 0.0
    %2083 = vmatprep.subr.mxu0 0.0
    %2084 = vmatpush1.msra.mxu0 0.0
    %2085 = vmatprep.subr.mxu0 0.0
    %2086 = vmatpush1.msra.mxu0 0.0
    %2087 = vmatprep.subr.mxu0 0.0
    %2088 = vmatpush1.msra.mxu0 0.0
    %2089 = vmatprep.subr.mxu0 0.0
    %2090 = vmatpush1.msra.mxu0 0.0
    %2091 = vmatprep.subr.mxu0 0.0
    %2092 = vmatpush1.msra.mxu0 0.0
    %2093 = vmatprep.subr.mxu0 0.0
    %2094 = vmatpush1.msra.mxu0 0.0
    %2095 = vmatprep.subr.mxu0 0.0
    %2096 = vmatpush1.msra.mxu0 0.0
    %2097 = vmatprep.subr.mxu0 0.0
    %2098 = vmatpush1.msra.mxu0 0.0
    %2099 = vmatprep.subr.mxu0 0.0
    %2100 = vmatpush1.msra.mxu0 0.0
    %2101 = vmatprep.subr.mxu0 0.0
    %2102 = vmatpush1.msra.mxu0 0.0
    %2103 = vmatprep.subr.mxu0 0.0
    %2104 = vmatpush1.msra.mxu0 0.0
    %2105 = vmatprep.subr.mxu0 0.0
    %2106 = vmatpush1.msra.mxu0 0.0
    %2107 = vmatprep.subr.mxu0 0.0
    %2108 = vmatpush1.msra.mxu0 0.0
    %2109 = vmatprep.subr.mxu0 0.0
    %2110 = vmatpush1.msra.mxu0 0.0
    %2111 = vmatprep.subr.mxu0 0.0
    %2112 = vmatpush1.msra.mxu0 0.0
    %2113 = vmatprep.subr.mxu0 0.0
    %2114 = vmatpush1.msra.mxu0 0.0
    %2115 = vmatprep.mubr.f32.mxu0 0.0
    %2116 = vmatmul.mubr.f32.gmra.mrb[0].mxu0 %v1978
    %v2117 = vpop.f32.mrb[0].mxu0
    %v2118 = vadd.f32 %v1950, %v2117
    %v2119 = vpop.f32.mrb[0].mxu0
    %v2120 = vadd.f32 %v1952, %v2119
    %2121 = vdwg.mxu0
    %v2122 = vadd.f32 %v2047, %v523
    %v2123 = vadd.f32 %v2049, %v527
    %v2124 = vadd.f32 %v2118, %v531
    %v2125 = vadd.f32 %v2120, %v535
    %v2126 = vxor.u32 %v2122, 2147483648
    %v2127 = vxor.u32 %v2123, 2147483648
    %v2128 = vmul.f32 %v2126, 1.442695
    %v2129 = vpow.pop %v2128
    %v2130 = vmul.f32 %v2127, 1.442695
    %v2131 = vpow.pop %v2130
    %v2132 = vadd.f32 %v2129, 1.0
    %v2133 = vadd.f32 %v2131, 1.0
    %v2134 = vrcp.pop %v2132
    %v2135 = vmul.f32 1.0, %v2134
    %v2136 = vrcp.pop %v2133
    %v2137 = vmul.f32 1.0, %v2136
    %v2138 = vtanh.pop %v2124
    %v2139 = vxor.u32 %v2125, 2147483648
    %v2140 = vmul.f32 %v2139, 1.442695
    %v2141 = vpow.pop %v2140
    %v2142 = vadd.f32 %v2141, 1.0
    %v2143 = vrcp.pop %v2142
    %v2144 = vmul.f32 1.0, %v2143
    %v2145 = vmul.f32 %v2137, %v1755
    %v2146 = vmul.f32 %v2135, %v2138
    %v2147 = vadd.f32 %v2145, %v2146
    %v2148 = vtanh.pop %v2147
    %v2149 = vmul.f32 %v2144, %v2148
    %v2150 = vpack.c.bf16 %v2149, %v2149
    %v2151 = vpack.c.bf16 %v1865, %v1865
    %2152 = vmatprep.subr.bf16.mxu0 %v849
    %2153 = vmatpush1.bf16.msra.mxu0 %v848
    %2154 = vmatprep.subr.bf16.mxu0 %v853
    %2155 = vmatpush1.bf16.msra.mxu0 %v852
    %2156 = vmatprep.subr.bf16.mxu0 %v857
    %2157 = vmatpush1.bf16.msra.mxu0 %v856
    %2158 = vmatprep.subr.bf16.mxu0 %v861
    %2159 = vmatpush1.bf16.msra.mxu0 %v860
    %2160 = vmatprep.subr.bf16.mxu0 %v865
    %2161 = vmatpush1.bf16.msra.mxu0 %v864
    %2162 = vmatprep.subr.bf16.mxu0 %v869
    %2163 = vmatpush1.bf16.msra.mxu0 %v868
    %2164 = vmatprep.subr.bf16.mxu0 %v873
    %2165 = vmatpush1.bf16.msra.mxu0 %v872
    %2166 = vmatprep.subr.bf16.mxu0 %v877
    %2167 = vmatpush1.bf16.msra.mxu0 %v876
    %2168 = vmatprep.subr.bf16.mxu0 %v881
    %2169 = vmatpush1.bf16.msra.mxu0 %v880
    %2170 = vmatprep.subr.bf16.mxu0 %v885
    %2171 = vmatpush1.bf16.msra.mxu0 %v884
    %2172 = vmatprep.subr.bf16.mxu0 %v889
    %2173 = vmatpush1.bf16.msra.mxu0 %v888
    %2174 = vmatprep.subr.bf16.mxu0 %v893
    %2175 = vmatpush1.bf16.msra.mxu0 %v892
    %2176 = vmatprep.subr.bf16.mxu0 %v897
    %2177 = vmatpush1.bf16.msra.mxu0 %v896
    %2178 = vmatprep.subr.bf16.mxu0 %v901
    %2179 = vmatpush1.bf16.msra.mxu0 %v900
    %2180 = vmatprep.subr.bf16.mxu0 %v905
    %2181 = vmatpush1.bf16.msra.mxu0 %v904
    %2182 = vmatprep.subr.bf16.mxu0 %v909
    %2183 = vmatpush1.bf16.msra.mxu0 %v908
    %2184 = vmatprep.mubr.bf16.mxu0 %v2151
    %2185 = vmatmul.mubr.bf16.gmra.mrb[0].mxu0 %v2150
    %v2186 = vpop.f32.mrb[0].mxu0
    %v2187 = vadd.f32 %v639, %v2186
    %v2188 = vpop.f32.mrb[0].mxu0
    %v2189 = vadd.f32 %v643, %v2188
    %v2190 = vpop.f32.mrb[0].mxu0
    %v2191 = vpop.f32.mrb[0].mxu0
    %2192 = vdwg.mxu0
    %2193 = vmatprep.subr.bf16.mxu0 %v851
    %2194 = vmatpush1.bf16.msra.mxu0 %v850
    %2195 = vmatprep.subr.bf16.mxu0 %v855
    %2196 = vmatpush1.bf16.msra.mxu0 %v854
    %2197 = vmatprep.subr.bf16.mxu0 %v859
    %2198 = vmatpush1.bf16.msra.mxu0 %v858
    %2199 = vmatprep.subr.bf16.mxu0 %v863
    %2200 = vmatpush1.bf16.msra.mxu0 %v862
    %2201 = vmatprep.subr.bf16.mxu0 %v867
    %2202 = vmatpush1.bf16.msra.mxu0 %v866
    %2203 = vmatprep.subr.bf16.mxu0 %v871
    %2204 = vmatpush1.bf16.msra.mxu0 %v870
    %2205 = vmatprep.subr.bf16.mxu0 %v875
    %2206 = vmatpush1.bf16.msra.mxu0 %v874
    %2207 = vmatprep.subr.bf16.mxu0 %v879
    %2208 = vmatpush1.bf16.msra.mxu0 %v878
    %2209 = vmatprep.subr.bf16.mxu0 %v883
    %2210 = vmatpush1.bf16.msra.mxu0 %v882
    %2211 = vmatprep.subr.bf16.mxu0 %v887
    %2212 = vmatpush1.bf16.msra.mxu0 %v886
    %2213 = vmatprep.subr.bf16.mxu0 %v891
    %2214 = vmatpush1.bf16.msra.mxu0 %v890
    %2215 = vmatprep.subr.bf16.mxu0 %v895
    %2216 = vmatpush1.bf16.msra.mxu0 %v894
    %2217 = vmatprep.subr.bf16.mxu0 %v899
    %2218 = vmatpush1.bf16.msra.mxu0 %v898
    %2219 = vmatprep.subr.bf16.mxu0 %v903
    %2220 = vmatpush1.bf16.msra.mxu0 %v902
    %2221 = vmatprep.subr.bf16.mxu0 %v907
    %2222 = vmatpush1.bf16.msra.mxu0 %v906
    %2223 = vmatprep.subr.bf16.mxu0 %v911
    %2224 = vmatpush1.bf16.msra.mxu0 %v910
    %2225 = vmatprep.mubr.bf16.mxu0 %v2151
    %2226 = vmatmul.mubr.bf16.gmra.mrb[0].mxu0 %v2150
    %v2227 = vpop.f32.mrb[0].mxu0
    %v2228 = vadd.f32 %v647, %v2227
    %v2229 = vpop.f32.mrb[0].mxu0
    %v2230 = vadd.f32 %v651, %v2229
    %v2231 = vpop.f32.mrb[0].mxu0
    %v2232 = vpop.f32.mrb[0].mxu0
    %2233 = vdwg.mxu0
    %v2234 = vxor.u32 %v2187, 2147483648
    %v2235 = vxor.u32 %v2189, 2147483648
    %v2236 = vmul.f32 %v2234, 1.442695
    %v2237 = vpow.pop %v2236
    %v2238 = vmul.f32 %v2235, 1.442695
    %v2239 = vpow.pop %v2238
    %v2240 = vadd.f32 %v2237, 1.0
    %v2241 = vadd.f32 %v2239, 1.0
    %v2242 = vrcp.pop %v2240
    %v2243 = vmul.f32 1.0, %v2242
    %v2244 = vrcp.pop %v2241
    %v2245 = vmul.f32 1.0, %v2244
    %v2246 = vtanh.pop %v2228
    %v2247 = vxor.u32 %v2230, 2147483648
    %v2248 = vmul.f32 %v2247, 1.442695
    %v2249 = vpow.pop %v2248
    %v2250 = vadd.f32 %v2249, 1.0
    %v2251 = vrcp.pop %v2250
    %v2252 = vmul.f32 1.0, %v2251
    %v2253 = vmul.f32 %v2245, %v1863
    %v2254 = vmul.f32 %v2243, %v2246
    %v2255 = vadd.f32 %v2253, %v2254
    %v2256 = vtanh.pop %v2255
    %v2257 = vmul.f32 %v2252, %v2256
    %v2258 = vld [vmem:[%s0 + $0x4] sm:$0x1]
    %v2259 = vld [vmem:[%s0 + $0xc] sm:$0x1]
    %v2260 = vld [vmem:[%s0 + $0x14] sm:$0x1]
    %v2261 = vld [vmem:[%s0 + $0x1c] sm:$0x1]
    %v2262 = vld [vmem:[%s0 + $0x24] sm:$0x1]
    %v2263 = vld [vmem:[%s0 + $0x2c] sm:$0x1]
    %v2264 = vld [vmem:[%s0 + $0x34] sm:$0x1]
    %v2265 = vld [vmem:[%s0 + $0x3c] sm:$0x1]
    %2266 = vmatprep.subr.bf16.mxu0 %v199
    %2267 = vmatpush1.bf16.msra.mxu0 %v198
    %2268 = vmatprep.subr.bf16.mxu0 %v203
    %2269 = vmatpush1.bf16.msra.mxu0 %v202
    %2270 = vmatprep.subr.bf16.mxu0 %v207
    %2271 = vmatpush1.bf16.msra.mxu0 %v206
    %2272 = vmatprep.subr.bf16.mxu0 %v211
    %2273 = vmatpush1.bf16.msra.mxu0 %v210
    %2274 = vmatprep.subr.bf16.mxu0 %v215
    %2275 = vmatpush1.bf16.msra.mxu0 %v214
    %2276 = vmatprep.subr.bf16.mxu0 %v219
    %2277 = vmatpush1.bf16.msra.mxu0 %v218
    %2278 = vmatprep.subr.bf16.mxu0 %v223
    %2279 = vmatpush1.bf16.msra.mxu0 %v222
    %2280 = vmatprep.subr.bf16.mxu0 %v227
    %2281 = vmatpush1.bf16.msra.mxu0 %v226
    %2282 = vmatprep.subr.bf16.mxu0 0
    %2283 = vmatpush1.bf16.msra.mxu0 0
    %2284 = vmatprep.subr.bf16.mxu0 0
    %2285 = vmatpush1.bf16.msra.mxu0 0
    %2286 = vmatprep.subr.bf16.mxu0 0
    %2287 = vmatpush1.bf16.msra.mxu0 0
    %2288 = vmatprep.subr.bf16.mxu0 0
    %2289 = vmatpush1.bf16.msra.mxu0 0
    %2290 = vmatprep.subr.bf16.mxu0 0
    %2291 = vmatpush1.bf16.msra.mxu0 0
    %2292 = vmatprep.subr.bf16.mxu0 0
    %2293 = vmatpush1.bf16.msra.mxu0 0
    %2294 = vmatprep.subr.bf16.mxu0 0
    %2295 = vmatpush1.bf16.msra.mxu0 0
    %2296 = vmatprep.subr.bf16.mxu0 0
    %2297 = vmatpush1.bf16.msra.mxu0 0
    %2298 = vmatprep.mubr.bf16.mxu0 0
    %2299 = vmatmul.mubr.bf16.gmra.mrb[0].mxu0 %v2150
    %v2300 = vpop.f32.mrb[0].mxu0
    %v2301 = vadd.f32 0.0, %v2300
    %v2302 = vpop.f32.mrb[0].mxu0
    %v2303 = vadd.f32 0.0, %v2302
    %v2304 = vpop.f32.mrb[0].mxu0
    %v2305 = vpop.f32.mrb[0].mxu0
    %2306 = vdwg.mxu0
    %2307 = vmatprep.subr.bf16.mxu0 %v201
    %2308 = vmatpush1.bf16.msra.mxu0 %v200
    %2309 = vmatprep.subr.bf16.mxu0 %v205
    %2310 = vmatpush1.bf16.msra.mxu0 %v204
    %2311 = vmatprep.subr.bf16.mxu0 %v209
    %2312 = vmatpush1.bf16.msra.mxu0 %v208
    %2313 = vmatprep.subr.bf16.mxu0 %v213
    %2314 = vmatpush1.bf16.msra.mxu0 %v212
    %2315 = vmatprep.subr.bf16.mxu0 %v217
    %2316 = vmatpush1.bf16.msra.mxu0 %v216
    %2317 = vmatprep.subr.bf16.mxu0 %v221
    %2318 = vmatpush1.bf16.msra.mxu0 %v220
    %2319 = vmatprep.subr.bf16.mxu0 %v225
    %2320 = vmatpush1.bf16.msra.mxu0 %v224
    %2321 = vmatprep.subr.bf16.mxu0 %v229
    %2322 = vmatpush1.bf16.msra.mxu0 %v228
    %2323 = vmatprep.subr.bf16.mxu0 0
    %2324 = vmatpush1.bf16.msra.mxu0 0
    %2325 = vmatprep.subr.bf16.mxu0 0
    %2326 = vmatpush1.bf16.msra.mxu0 0
    %2327 = vmatprep.subr.bf16.mxu0 0
    %2328 = vmatpush1.bf16.msra.mxu0 0
    %2329 = vmatprep.subr.bf16.mxu0 0
    %2330 = vmatpush1.bf16.msra.mxu0 0
    %2331 = vmatprep.subr.bf16.mxu0 0
    %2332 = vmatpush1.bf16.msra.mxu0 0
    %2333 = vmatprep.subr.bf16.mxu0 0
    %2334 = vmatpush1.bf16.msra.mxu0 0
    %2335 = vmatprep.subr.bf16.mxu0 0
    %2336 = vmatpush1.bf16.msra.mxu0 0
    %2337 = vmatprep.subr.bf16.mxu0 0
    %2338 = vmatpush1.bf16.msra.mxu0 0
    %2339 = vmatprep.mubr.bf16.mxu0 0
    %2340 = vmatmul.mubr.bf16.gmra.mrb[0].mxu0 %v2150
    %v2341 = vpop.f32.mrb[0].mxu0
    %v2342 = vadd.f32 0.0, %v2341
    %v2343 = vpop.f32.mrb[0].mxu0
    %v2344 = vadd.f32 0.0, %v2343
    %v2345 = vpop.f32.mrb[0].mxu0
    %v2346 = vpop.f32.mrb[0].mxu0
    %2347 = vdwg.mxu0
    %v2356 = vrot.slane %v2259, 7
    %v2357 = vsel %vm353, %v2356, %v2258
    %v2358 = vrot.slane %v2260, 6
    %v2359 = vsel %vm356, %v2358, %v2357
    %v2360 = vrot.slane %v2261, 5
    %v2361 = vsel %vm359, %v2360, %v2359
    %v2362 = vrot.slane %v2262, 4
    %v2363 = vsel %vm362, %v2362, %v2361
    %v2364 = vrot.slane %v2263, 3
    %v2365 = vsel %vm365, %v2364, %v2363
    %v2366 = vrot.slane %v2264, 2
    %v2367 = vsel %vm368, %v2366, %v2365
    %v2368 = vrot.slane %v2265, 1
    %v2369 = vsel %vm371, %v2368, %v2367
    %v2370 = vsel %vm373, %v2369, 0
    %2372 = vmatprep.subr.mxu0 %v67
    %2373 = vmatpush1.msra.mxu0 %v66
    %2374 = vmatprep.subr.mxu0 0.0
    %2375 = vmatpush1.msra.mxu0 0.0
    %2376 = vmatprep.subr.mxu0 0.0
    %2377 = vmatpush1.msra.mxu0 0.0
    %2378 = vmatprep.subr.mxu0 0.0
    %2379 = vmatpush1.msra.mxu0 0.0
    %2380 = vmatprep.subr.mxu0 0.0
    %2381 = vmatpush1.msra.mxu0 0.0
    %2382 = vmatprep.subr.mxu0 0.0
    %2383 = vmatpush1.msra.mxu0 0.0
    %2384 = vmatprep.subr.mxu0 0.0
    %2385 = vmatpush1.msra.mxu0 0.0
    %2386 = vmatprep.subr.mxu0 0.0
    %2387 = vmatpush1.msra.mxu0 0.0
    %2388 = vmatprep.subr.mxu0 0.0
    %2389 = vmatpush1.msra.mxu0 0.0
    %2390 = vmatprep.subr.mxu0 0.0
    %2391 = vmatpush1.msra.mxu0 0.0
    %2392 = vmatprep.subr.mxu0 0.0
    %2393 = vmatpush1.msra.mxu0 0.0
    %2394 = vmatprep.subr.mxu0 0.0
    %2395 = vmatpush1.msra.mxu0 0.0
    %2396 = vmatprep.subr.mxu0 0.0
    %2397 = vmatpush1.msra.mxu0 0.0
    %2398 = vmatprep.subr.mxu0 0.0
    %2399 = vmatpush1.msra.mxu0 0.0
    %2400 = vmatprep.subr.mxu0 0.0
    %2401 = vmatpush1.msra.mxu0 0.0
    %2402 = vmatprep.subr.mxu0 0.0
    %2403 = vmatpush1.msra.mxu0 0.0
    %2404 = vmatprep.subr.mxu0 0.0
    %2405 = vmatpush1.msra.mxu0 0.0
    %2406 = vmatprep.subr.mxu0 0.0
    %2407 = vmatpush1.msra.mxu0 0.0
    %2408 = vmatprep.subr.mxu0 0.0
    %2409 = vmatpush1.msra.mxu0 0.0
    %2410 = vmatprep.subr.mxu0 0.0
    %2411 = vmatpush1.msra.mxu0 0.0
    %2412 = vmatprep.subr.mxu0 0.0
    %2413 = vmatpush1.msra.mxu0 0.0
    %2414 = vmatprep.subr.mxu0 0.0
    %2415 = vmatpush1.msra.mxu0 0.0
    %2416 = vmatprep.subr.mxu0 0.0
    %2417 = vmatpush1.msra.mxu0 0.0
    %2418 = vmatprep.subr.mxu0 0.0
    %2419 = vmatpush1.msra.mxu0 0.0
    %2420 = vmatprep.subr.mxu0 0.0
    %2421 = vmatpush1.msra.mxu0 0.0
    %2422 = vmatprep.subr.mxu0 0.0
    %2423 = vmatpush1.msra.mxu0 0.0
    %2424 = vmatprep.subr.mxu0 0.0
    %2425 = vmatpush1.msra.mxu0 0.0
    %2426 = vmatprep.subr.mxu0 0.0
    %2427 = vmatpush1.msra.mxu0 0.0
    %2428 = vmatprep.subr.mxu0 0.0
    %2429 = vmatpush1.msra.mxu0 0.0
    %2430 = vmatprep.subr.mxu0 0.0
    %2431 = vmatpush1.msra.mxu0 0.0
    %2432 = vmatprep.subr.mxu0 0.0
    %2433 = vmatpush1.msra.mxu0 0.0
    %2434 = vmatprep.subr.mxu0 0.0
    %2435 = vmatpush1.msra.mxu0 0.0
    %2436 = vmatprep.mubr.f32.mxu0 0.0
    %2437 = vmatmul.mubr.f32.gmra.mrb[0].mxu0 %v2370
    %v2438 = vpop.f32.mrb[0].mxu0
    %v2439 = vadd.f32 %v2301, %v2438
    %v2440 = vpop.f32.mrb[0].mxu0
    %v2441 = vadd.f32 %v2303, %v2440
    %2442 = vdwg.mxu0
    %2443 = vmatprep.subr.mxu0 %v69
    %2444 = vmatpush1.msra.mxu0 %v68
    %2445 = vmatprep.subr.mxu0 0.0
    %2446 = vmatpush1.msra.mxu0 0.0
    %2447 = vmatprep.subr.mxu0 0.0
    %2448 = vmatpush1.msra.mxu0 0.0
    %2449 = vmatprep.subr.mxu0 0.0
    %2450 = vmatpush1.msra.mxu0 0.0
    %2451 = vmatprep.subr.mxu0 0.0
    %2452 = vmatpush1.msra.mxu0 0.0
    %2453 = vmatprep.subr.mxu0 0.0
    %2454 = vmatpush1.msra.mxu0 0.0
    %2455 = vmatprep.subr.mxu0 0.0
    %2456 = vmatpush1.msra.mxu0 0.0
    %2457 = vmatprep.subr.mxu0 0.0
    %2458 = vmatpush1.msra.mxu0 0.0
    %2459 = vmatprep.subr.mxu0 0.0
    %2460 = vmatpush1.msra.mxu0 0.0
    %2461 = vmatprep.subr.mxu0 0.0
    %2462 = vmatpush1.msra.mxu0 0.0
    %2463 = vmatprep.subr.mxu0 0.0
    %2464 = vmatpush1.msra.mxu0 0.0
    %2465 = vmatprep.subr.mxu0 0.0
    %2466 = vmatpush1.msra.mxu0 0.0
    %2467 = vmatprep.subr.mxu0 0.0
    %2468 = vmatpush1.msra.mxu0 0.0
    %2469 = vmatprep.subr.mxu0 0.0
    %2470 = vmatpush1.msra.mxu0 0.0
    %2471 = vmatprep.subr.mxu0 0.0
    %2472 = vmatpush1.msra.mxu0 0.0
    %2473 = vmatprep.subr.mxu0 0.0
    %2474 = vmatpush1.msra.mxu0 0.0
    %2475 = vmatprep.subr.mxu0 0.0
    %2476 = vmatpush1.msra.mxu0 0.0
    %2477 = vmatprep.subr.mxu0 0.0
    %2478 = vmatpush1.msra.mxu0 0.0
    %2479 = vmatprep.subr.mxu0 0.0
    %2480 = vmatpush1.msra.mxu0 0.0
    %2481 = vmatprep.subr.mxu0 0.0
    %2482 = vmatpush1.msra.mxu0 0.0
    %2483 = vmatprep.subr.mxu0 0.0
    %2484 = vmatpush1.msra.mxu0 0.0
    %2485 = vmatprep.subr.mxu0 0.0
    %2486 = vmatpush1.msra.mxu0 0.0
    %2487 = vmatprep.subr.mxu0 0.0
    %2488 = vmatpush1.msra.mxu0 0.0
    %2489 = vmatprep.subr.mxu0 0.0
    %2490 = vmatpush1.msra.mxu0 0.0
    %2491 = vmatprep.subr.mxu0 0.0
    %2492 = vmatpush1.msra.mxu0 0.0
    %2493 = vmatprep.subr.mxu0 0.0
    %2494 = vmatpush1.msra.mxu0 0.0
    %2495 = vmatprep.subr.mxu0 0.0
    %2496 = vmatpush1.msra.mxu0 0.0
    %2497 = vmatprep.subr.mxu0 0.0
    %2498 = vmatpush1.msra.mxu0 0.0
    %2499 = vmatprep.subr.mxu0 0.0
    %2500 = vmatpush1.msra.mxu0 0.0
    %2501 = vmatprep.subr.mxu0 0.0
    %2502 = vmatpush1.msra.mxu0 0.0
    %2503 = vmatprep.subr.mxu0 0.0
    %2504 = vmatpush1.msra.mxu0 0.0
    %2505 = vmatprep.subr.mxu0 0.0
    %2506 = vmatpush1.msra.mxu0 0.0
    %2507 = vmatprep.mubr.f32.mxu0 0.0
    %2508 = vmatmul.mubr.f32.gmra.mrb[0].mxu0 %v2370
    %v2509 = vpop.f32.mrb[0].mxu0
    %v2510 = vadd.f32 %v2342, %v2509
    %v2511 = vpop.f32.mrb[0].mxu0
    %v2512 = vadd.f32 %v2344, %v2511
    %2513 = vdwg.mxu0
    %v2514 = vadd.f32 %v2439, %v523
    %v2515 = vadd.f32 %v2441, %v527
    %v2516 = vadd.f32 %v2510, %v531
    %v2517 = vadd.f32 %v2512, %v535
    %v2518 = vxor.u32 %v2514, 2147483648
    %v2519 = vxor.u32 %v2515, 2147483648
    %v2520 = vmul.f32 %v2518, 1.442695
    %v2521 = vpow.pop %v2520
    %v2522 = vmul.f32 %v2519, 1.442695
    %v2523 = vpow.pop %v2522
    %v2524 = vadd.f32 %v2521, 1.0
    %v2525 = vadd.f32 %v2523, 1.0
    %v2526 = vrcp.pop %v2524
    %v2527 = vmul.f32 1.0, %v2526
    %v2528 = vrcp.pop %v2525
    %v2529 = vmul.f32 1.0, %v2528
    %v2530 = vtanh.pop %v2516
    %v2531 = vxor.u32 %v2517, 2147483648
    %v2532 = vmul.f32 %v2531, 1.442695
    %v2533 = vpow.pop %v2532
    %v2534 = vadd.f32 %v2533, 1.0
    %v2535 = vrcp.pop %v2534
    %v2536 = vmul.f32 1.0, %v2535
    %v2537 = vmul.f32 %v2529, %v2147
    %v2538 = vmul.f32 %v2527, %v2530
    %v2539 = vadd.f32 %v2537, %v2538
    %v2540 = vtanh.pop %v2539
    %v2541 = vmul.f32 %v2536, %v2540
    %v2542 = vpack.c.bf16 %v2541, %v2541
    %v2543 = vpack.c.bf16 %v2257, %v2257
    %2544 = vmatprep.subr.bf16.mxu0 %v849
    %2545 = vmatpush1.bf16.msra.mxu0 %v848
    %2546 = vmatprep.subr.bf16.mxu0 %v853
    %2547 = vmatpush1.bf16.msra.mxu0 %v852
    %2548 = vmatprep.subr.bf16.mxu0 %v857
    %2549 = vmatpush1.bf16.msra.mxu0 %v856
    %2550 = vmatprep.subr.bf16.mxu0 %v861
    %2551 = vmatpush1.bf16.msra.mxu0 %v860
    %2552 = vmatprep.subr.bf16.mxu0 %v865
    %2553 = vmatpush1.bf16.msra.mxu0 %v864
    %2554 = vmatprep.subr.bf16.mxu0 %v869
    %2555 = vmatpush1.bf16.msra.mxu0 %v868
    %2556 = vmatprep.subr.bf16.mxu0 %v873
    %2557 = vmatpush1.bf16.msra.mxu0 %v872
    %2558 = vmatprep.subr.bf16.mxu0 %v877
    %2559 = vmatpush1.bf16.msra.mxu0 %v876
    %2560 = vmatprep.subr.bf16.mxu0 %v881
    %2561 = vmatpush1.bf16.msra.mxu0 %v880
    %2562 = vmatprep.subr.bf16.mxu0 %v885
    %2563 = vmatpush1.bf16.msra.mxu0 %v884
    %2564 = vmatprep.subr.bf16.mxu0 %v889
    %2565 = vmatpush1.bf16.msra.mxu0 %v888
    %2566 = vmatprep.subr.bf16.mxu0 %v893
    %2567 = vmatpush1.bf16.msra.mxu0 %v892
    %2568 = vmatprep.subr.bf16.mxu0 %v897
    %2569 = vmatpush1.bf16.msra.mxu0 %v896
    %2570 = vmatprep.subr.bf16.mxu0 %v901
    %2571 = vmatpush1.bf16.msra.mxu0 %v900
    %2572 = vmatprep.subr.bf16.mxu0 %v905
    %2573 = vmatpush1.bf16.msra.mxu0 %v904
    %2574 = vmatprep.subr.bf16.mxu0 %v909
    %2575 = vmatpush1.bf16.msra.mxu0 %v908
    %2576 = vmatprep.mubr.bf16.mxu0 %v2543
    %2577 = vmatmul.mubr.bf16.gmra.mrb[0].mxu0 %v2542
    %v2578 = vpop.f32.mrb[0].mxu0
    %v2579 = vadd.f32 %v639, %v2578
    %v2580 = vpop.f32.mrb[0].mxu0
    %v2581 = vadd.f32 %v643, %v2580
    %v2582 = vpop.f32.mrb[0].mxu0
    %v2583 = vpop.f32.mrb[0].mxu0
    %2584 = vdwg.mxu0
    %2585 = vmatprep.subr.bf16.mxu0 %v851
    %2586 = vmatpush1.bf16.msra.mxu0 %v850
    %2587 = vmatprep.subr.bf16.mxu0 %v855
    %2588 = vmatpush1.bf16.msra.mxu0 %v854
    %2589 = vmatprep.subr.bf16.mxu0 %v859
    %2590 = vmatpush1.bf16.msra.mxu0 %v858
    %2591 = vmatprep.subr.bf16.mxu0 %v863
    %2592 = vmatpush1.bf16.msra.mxu0 %v862
    %2593 = vmatprep.subr.bf16.mxu0 %v867
    %2594 = vmatpush1.bf16.msra.mxu0 %v866
    %2595 = vmatprep.subr.bf16.mxu0 %v871
    %2596 = vmatpush1.bf16.msra.mxu0 %v870
    %2597 = vmatprep.subr.bf16.mxu0 %v875
    %2598 = vmatpush1.bf16.msra.mxu0 %v874
    %2599 = vmatprep.subr.bf16.mxu0 %v879
    %2600 = vmatpush1.bf16.msra.mxu0 %v878
    %2601 = vmatprep.subr.bf16.mxu0 %v883
    %2602 = vmatpush1.bf16.msra.mxu0 %v882
    %2603 = vmatprep.subr.bf16.mxu0 %v887
    %2604 = vmatpush1.bf16.msra.mxu0 %v886
    %2605 = vmatprep.subr.bf16.mxu0 %v891
    %2606 = vmatpush1.bf16.msra.mxu0 %v890
    %2607 = vmatprep.subr.bf16.mxu0 %v895
    %2608 = vmatpush1.bf16.msra.mxu0 %v894
    %2609 = vmatprep.subr.bf16.mxu0 %v899
    %2610 = vmatpush1.bf16.msra.mxu0 %v898
    %2611 = vmatprep.subr.bf16.mxu0 %v903
    %2612 = vmatpush1.bf16.msra.mxu0 %v902
    %2613 = vmatprep.subr.bf16.mxu0 %v907
    %2614 = vmatpush1.bf16.msra.mxu0 %v906
    %2615 = vmatprep.subr.bf16.mxu0 %v911
    %2616 = vmatpush1.bf16.msra.mxu0 %v910
    %2617 = vmatprep.mubr.bf16.mxu0 %v2543
    %2618 = vmatmul.mubr.bf16.gmra.mrb[0].mxu0 %v2542
    %v2619 = vpop.f32.mrb[0].mxu0
    %v2620 = vadd.f32 %v647, %v2619
    %v2621 = vpop.f32.mrb[0].mxu0
    %v2622 = vadd.f32 %v651, %v2621
    %v2623 = vpop.f32.mrb[0].mxu0
    %v2624 = vpop.f32.mrb[0].mxu0
    %2625 = vdwg.mxu0
    %v2626 = vxor.u32 %v2579, 2147483648
    %v2627 = vxor.u32 %v2581, 2147483648
    %v2628 = vmul.f32 %v2626, 1.442695
    %v2629 = vpow.pop %v2628
    %v2630 = vmul.f32 %v2627, 1.442695
    %v2631 = vpow.pop %v2630
    %v2632 = vadd.f32 %v2629, 1.0
    %v2633 = vadd.f32 %v2631, 1.0
    %v2634 = vrcp.pop %v2632
    %v2635 = vmul.f32 1.0, %v2634
    %v2636 = vrcp.pop %v2633
    %v2637 = vmul.f32 1.0, %v2636
    %v2638 = vtanh.pop %v2620
    %v2639 = vxor.u32 %v2622, 2147483648
    %v2640 = vmul.f32 %v2639, 1.442695
    %v2641 = vpow.pop %v2640
    %v2642 = vadd.f32 %v2641, 1.0
    %v2643 = vrcp.pop %v2642
    %v2644 = vmul.f32 1.0, %v2643
    %v2645 = vmul.f32 %v2637, %v2255
    %v2646 = vmul.f32 %v2635, %v2638
    %v2647 = vadd.f32 %v2645, %v2646
    %v2648 = vtanh.pop %v2647
    %v2649 = vmul.f32 %v2644, %v2648
    %v2650 = vld [vmem:[%s0 + $0x5] sm:$0x1]
    %v2651 = vld [vmem:[%s0 + $0xd] sm:$0x1]
    %v2652 = vld [vmem:[%s0 + $0x15] sm:$0x1]
    %v2653 = vld [vmem:[%s0 + $0x1d] sm:$0x1]
    %v2654 = vld [vmem:[%s0 + $0x25] sm:$0x1]
    %v2655 = vld [vmem:[%s0 + $0x2d] sm:$0x1]
    %v2656 = vld [vmem:[%s0 + $0x35] sm:$0x1]
    %v2657 = vld [vmem:[%s0 + $0x3d] sm:$0x1]
    %2658 = vmatprep.subr.bf16.mxu0 %v199
    %2659 = vmatpush1.bf16.msra.mxu0 %v198
    %2660 = vmatprep.subr.bf16.mxu0 %v203
    %2661 = vmatpush1.bf16.msra.mxu0 %v202
    %2662 = vmatprep.subr.bf16.mxu0 %v207
    %2663 = vmatpush1.bf16.msra.mxu0 %v206
    %2664 = vmatprep.subr.bf16.mxu0 %v211
    %2665 = vmatpush1.bf16.msra.mxu0 %v210
    %2666 = vmatprep.subr.bf16.mxu0 %v215
    %2667 = vmatpush1.bf16.msra.mxu0 %v214
    %2668 = vmatprep.subr.bf16.mxu0 %v219
    %2669 = vmatpush1.bf16.msra.mxu0 %v218
    %2670 = vmatprep.subr.bf16.mxu0 %v223
    %2671 = vmatpush1.bf16.msra.mxu0 %v222
    %2672 = vmatprep.subr.bf16.mxu0 %v227
    %2673 = vmatpush1.bf16.msra.mxu0 %v226
    %2674 = vmatprep.subr.bf16.mxu0 0
    %2675 = vmatpush1.bf16.msra.mxu0 0
    %2676 = vmatprep.subr.bf16.mxu0 0
    %2677 = vmatpush1.bf16.msra.mxu0 0
    %2678 = vmatprep.subr.bf16.mxu0 0
    %2679 = vmatpush1.bf16.msra.mxu0 0
    %2680 = vmatprep.subr.bf16.mxu0 0
    %2681 = vmatpush1.bf16.msra.mxu0 0
    %2682 = vmatprep.subr.bf16.mxu0 0
    %2683 = vmatpush1.bf16.msra.mxu0 0
    %2684 = vmatprep.subr.bf16.mxu0 0
    %2685 = vmatpush1.bf16.msra.mxu0 0
    %2686 = vmatprep.subr.bf16.mxu0 0
    %2687 = vmatpush1.bf16.msra.mxu0 0
    %2688 = vmatprep.subr.bf16.mxu0 0
    %2689 = vmatpush1.bf16.msra.mxu0 0
    %2690 = vmatprep.mubr.bf16.mxu0 0
    %2691 = vmatmul.mubr.bf16.gmra.mrb[0].mxu0 %v2542
    %v2692 = vpop.f32.mrb[0].mxu0
    %v2693 = vadd.f32 0.0, %v2692
    %v2694 = vpop.f32.mrb[0].mxu0
    %v2695 = vadd.f32 0.0, %v2694
    %v2696 = vpop.f32.mrb[0].mxu0
    %v2697 = vpop.f32.mrb[0].mxu0
    %2698 = vdwg.mxu0
    %2699 = vmatprep.subr.bf16.mxu0 %v201
    %2700 = vmatpush1.bf16.msra.mxu0 %v200
    %2701 = vmatprep.subr.bf16.mxu0 %v205
    %2702 = vmatpush1.bf16.msra.mxu0 %v204
    %2703 = vmatprep.subr.bf16.mxu0 %v209
    %2704 = vmatpush1.bf16.msra.mxu0 %v208
    %2705 = vmatprep.subr.bf16.mxu0 %v213
    %2706 = vmatpush1.bf16.msra.mxu0 %v212
    %2707 = vmatprep.subr.bf16.mxu0 %v217
    %2708 = vmatpush1.bf16.msra.mxu0 %v216
    %2709 = vmatprep.subr.bf16.mxu0 %v221
    %2710 = vmatpush1.bf16.msra.mxu0 %v220
    %2711 = vmatprep.subr.bf16.mxu0 %v225
    %2712 = vmatpush1.bf16.msra.mxu0 %v224
    %2713 = vmatprep.subr.bf16.mxu0 %v229
    %2714 = vmatpush1.bf16.msra.mxu0 %v228
    %2715 = vmatprep.subr.bf16.mxu0 0
    %2716 = vmatpush1.bf16.msra.mxu0 0
    %2717 = vmatprep.subr.bf16.mxu0 0
    %2718 = vmatpush1.bf16.msra.mxu0 0
    %2719 = vmatprep.subr.bf16.mxu0 0
    %2720 = vmatpush1.bf16.msra.mxu0 0
    %2721 = vmatprep.subr.bf16.mxu0 0
    %2722 = vmatpush1.bf16.msra.mxu0 0
    %2723 = vmatprep.subr.bf16.mxu0 0
    %2724 = vmatpush1.bf16.msra.mxu0 0
    %2725 = vmatprep.subr.bf16.mxu0 0
    %2726 = vmatpush1.bf16.msra.mxu0 0
    %2727 = vmatprep.subr.bf16.mxu0 0
    %2728 = vmatpush1.bf16.msra.mxu0 0
    %2729 = vmatprep.subr.bf16.mxu0 0
    %2730 = vmatpush1.bf16.msra.mxu0 0
    %2731 = vmatprep.mubr.bf16.mxu0 0
    %2732 = vmatmul.mubr.bf16.gmra.mrb[0].mxu0 %v2542
    %v2733 = vpop.f32.mrb[0].mxu0
    %v2734 = vadd.f32 0.0, %v2733
    %v2735 = vpop.f32.mrb[0].mxu0
    %v2736 = vadd.f32 0.0, %v2735
    %v2737 = vpop.f32.mrb[0].mxu0
    %v2738 = vpop.f32.mrb[0].mxu0
    %2739 = vdwg.mxu0
    %v2748 = vrot.slane %v2651, 7
    %v2749 = vsel %vm353, %v2748, %v2650
    %v2750 = vrot.slane %v2652, 6
    %v2751 = vsel %vm356, %v2750, %v2749
    %v2752 = vrot.slane %v2653, 5
    %v2753 = vsel %vm359, %v2752, %v2751
    %v2754 = vrot.slane %v2654, 4
    %v2755 = vsel %vm362, %v2754, %v2753
    %v2756 = vrot.slane %v2655, 3
    %v2757 = vsel %vm365, %v2756, %v2755
    %v2758 = vrot.slane %v2656, 2
    %v2759 = vsel %vm368, %v2758, %v2757
    %v2760 = vrot.slane %v2657, 1
    %v2761 = vsel %vm371, %v2760, %v2759
    %v2762 = vsel %vm373, %v2761, 0
    %2764 = vmatprep.subr.mxu0 %v67
    %2765 = vmatpush1.msra.mxu0 %v66
    %2766 = vmatprep.subr.mxu0 0.0
    %2767 = vmatpush1.msra.mxu0 0.0
    %2768 = vmatprep.subr.mxu0 0.0
    %2769 = vmatpush1.msra.mxu0 0.0
    %2770 = vmatprep.subr.mxu0 0.0
    %2771 = vmatpush1.msra.mxu0 0.0
    %2772 = vmatprep.subr.mxu0 0.0
    %2773 = vmatpush1.msra.mxu0 0.0
    %2774 = vmatprep.subr.mxu0 0.0
    %2775 = vmatpush1.msra.mxu0 0.0
    %2776 = vmatprep.subr.mxu0 0.0
    %2777 = vmatpush1.msra.mxu0 0.0
    %2778 = vmatprep.subr.mxu0 0.0
    %2779 = vmatpush1.msra.mxu0 0.0
    %2780 = vmatprep.subr.mxu0 0.0
    %2781 = vmatpush1.msra.mxu0 0.0
    %2782 = vmatprep.subr.mxu0 0.0
    %2783 = vmatpush1.msra.mxu0 0.0
    %2784 = vmatprep.subr.mxu0 0.0
    %2785 = vmatpush1.msra.mxu0 0.0
    %2786 = vmatprep.subr.mxu0 0.0
    %2787 = vmatpush1.msra.mxu0 0.0
    %2788 = vmatprep.subr.mxu0 0.0
    %2789 = vmatpush1.msra.mxu0 0.0
    %2790 = vmatprep.subr.mxu0 0.0
    %2791 = vmatpush1.msra.mxu0 0.0
    %2792 = vmatprep.subr.mxu0 0.0
    %2793 = vmatpush1.msra.mxu0 0.0
    %2794 = vmatprep.subr.mxu0 0.0
    %2795 = vmatpush1.msra.mxu0 0.0
    %2796 = vmatprep.subr.mxu0 0.0
    %2797 = vmatpush1.msra.mxu0 0.0
    %2798 = vmatprep.subr.mxu0 0.0
    %2799 = vmatpush1.msra.mxu0 0.0
    %2800 = vmatprep.subr.mxu0 0.0
    %2801 = vmatpush1.msra.mxu0 0.0
    %2802 = vmatprep.subr.mxu0 0.0
    %2803 = vmatpush1.msra.mxu0 0.0
    %2804 = vmatprep.subr.mxu0 0.0
    %2805 = vmatpush1.msra.mxu0 0.0
    %2806 = vmatprep.subr.mxu0 0.0
    %2807 = vmatpush1.msra.mxu0 0.0
    %2808 = vmatprep.subr.mxu0 0.0
    %2809 = vmatpush1.msra.mxu0 0.0
    %2810 = vmatprep.subr.mxu0 0.0
    %2811 = vmatpush1.msra.mxu0 0.0
    %2812 = vmatprep.subr.mxu0 0.0
    %2813 = vmatpush1.msra.mxu0 0.0
    %2814 = vmatprep.subr.mxu0 0.0
    %2815 = vmatpush1.msra.mxu0 0.0
    %2816 = vmatprep.subr.mxu0 0.0
    %2817 = vmatpush1.msra.mxu0 0.0
    %2818 = vmatprep.subr.mxu0 0.0
    %2819 = vmatpush1.msra.mxu0 0.0
    %2820 = vmatprep.subr.mxu0 0.0
    %2821 = vmatpush1.msra.mxu0 0.0
    %2822 = vmatprep.subr.mxu0 0.0
    %2823 = vmatpush1.msra.mxu0 0.0
    %2824 = vmatprep.subr.mxu0 0.0
    %2825 = vmatpush1.msra.mxu0 0.0
    %2826 = vmatprep.subr.mxu0 0.0
    %2827 = vmatpush1.msra.mxu0 0.0
    %2828 = vmatprep.mubr.f32.mxu0 0.0
    %2829 = vmatmul.mubr.f32.gmra.mrb[0].mxu0 %v2762
    %v2830 = vpop.f32.mrb[0].mxu0
    %v2831 = vadd.f32 %v2693, %v2830
    %v2832 = vpop.f32.mrb[0].mxu0
    %v2833 = vadd.f32 %v2695, %v2832
    %2834 = vdwg.mxu0
    %2835 = vmatprep.subr.mxu0 %v69
    %2836 = vmatpush1.msra.mxu0 %v68
    %2837 = vmatprep.subr.mxu0 0.0
    %2838 = vmatpush1.msra.mxu0 0.0
    %2839 = vmatprep.subr.mxu0 0.0
    %2840 = vmatpush1.msra.mxu0 0.0
    %2841 = vmatprep.subr.mxu0 0.0
    %2842 = vmatpush1.msra.mxu0 0.0
    %2843 = vmatprep.subr.mxu0 0.0
    %2844 = vmatpush1.msra.mxu0 0.0
    %2845 = vmatprep.subr.mxu0 0.0
    %2846 = vmatpush1.msra.mxu0 0.0
    %2847 = vmatprep.subr.mxu0 0.0
    %2848 = vmatpush1.msra.mxu0 0.0
    %2849 = vmatprep.subr.mxu0 0.0
    %2850 = vmatpush1.msra.mxu0 0.0
    %2851 = vmatprep.subr.mxu0 0.0
    %2852 = vmatpush1.msra.mxu0 0.0
    %2853 = vmatprep.subr.mxu0 0.0
    %2854 = vmatpush1.msra.mxu0 0.0
    %2855 = vmatprep.subr.mxu0 0.0
    %2856 = vmatpush1.msra.mxu0 0.0
    %2857 = vmatprep.subr.mxu0 0.0
    %2858 = vmatpush1.msra.mxu0 0.0
    %2859 = vmatprep.subr.mxu0 0.0
    %2860 = vmatpush1.msra.mxu0 0.0
    %2861 = vmatprep.subr.mxu0 0.0
    %2862 = vmatpush1.msra.mxu0 0.0
    %2863 = vmatprep.subr.mxu0 0.0
    %2864 = vmatpush1.msra.mxu0 0.0
    %2865 = vmatprep.subr.mxu0 0.0
    %2866 = vmatpush1.msra.mxu0 0.0
    %2867 = vmatprep.subr.mxu0 0.0
    %2868 = vmatpush1.msra.mxu0 0.0
    %2869 = vmatprep.subr.mxu0 0.0
    %2870 = vmatpush1.msra.mxu0 0.0
    %2871 = vmatprep.subr.mxu0 0.0
    %2872 = vmatpush1.msra.mxu0 0.0
    %2873 = vmatprep.subr.mxu0 0.0
    %2874 = vmatpush1.msra.mxu0 0.0
    %2875 = vmatprep.subr.mxu0 0.0
    %2876 = vmatpush1.msra.mxu0 0.0
    %2877 = vmatprep.subr.mxu0 0.0
    %2878 = vmatpush1.msra.mxu0 0.0
    %2879 = vmatprep.subr.mxu0 0.0
    %2880 = vmatpush1.msra.mxu0 0.0
    %2881 = vmatprep.subr.mxu0 0.0
    %2882 = vmatpush1.msra.mxu0 0.0
    %2883 = vmatprep.subr.mxu0 0.0
    %2884 = vmatpush1.msra.mxu0 0.0
    %2885 = vmatprep.subr.mxu0 0.0
    %2886 = vmatpush1.msra.mxu0 0.0
    %2887 = vmatprep.subr.mxu0 0.0
    %2888 = vmatpush1.msra.mxu0 0.0
    %2889 = vmatprep.subr.mxu0 0.0
    %2890 = vmatpush1.msra.mxu0 0.0
    %2891 = vmatprep.subr.mxu0 0.0
    %2892 = vmatpush1.msra.mxu0 0.0
    %2893 = vmatprep.subr.mxu0 0.0
    %2894 = vmatpush1.msra.mxu0 0.0
    %2895 = vmatprep.subr.mxu0 0.0
    %2896 = vmatpush1.msra.mxu0 0.0
    %2897 = vmatprep.subr.mxu0 0.0
    %2898 = vmatpush1.msra.mxu0 0.0
    %2899 = vmatprep.mubr.f32.mxu0 0.0
    %2900 = vmatmul.mubr.f32.gmra.mrb[0].mxu0 %v2762
    %v2901 = vpop.f32.mrb[0].mxu0
    %v2902 = vadd.f32 %v2734, %v2901
    %v2903 = vpop.f32.mrb[0].mxu0
    %v2904 = vadd.f32 %v2736, %v2903
    %2905 = vdwg.mxu0
    %v2906 = vadd.f32 %v2831, %v523
    %v2907 = vadd.f32 %v2833, %v527
    %v2908 = vadd.f32 %v2902, %v531
    %v2909 = vadd.f32 %v2904, %v535
    %v2910 = vxor.u32 %v2906, 2147483648
    %v2911 = vxor.u32 %v2907, 2147483648
    %v2912 = vmul.f32 %v2910, 1.442695
    %v2913 = vpow.pop %v2912
    %v2914 = vmul.f32 %v2911, 1.442695
    %v2915 = vpow.pop %v2914
    %v2916 = vadd.f32 %v2913, 1.0
    %v2917 = vadd.f32 %v2915, 1.0
    %v2918 = vrcp.pop %v2916
    %v2919 = vmul.f32 1.0, %v2918
    %v2920 = vrcp.pop %v2917
    %v2921 = vmul.f32 1.0, %v2920
    %v2922 = vtanh.pop %v2908
    %v2923 = vxor.u32 %v2909, 2147483648
    %v2924 = vmul.f32 %v2923, 1.442695
    %v2925 = vpow.pop %v2924
    %v2926 = vadd.f32 %v2925, 1.0
    %v2927 = vrcp.pop %v2926
    %v2928 = vmul.f32 1.0, %v2927
    %v2929 = vmul.f32 %v2921, %v2539
    %v2930 = vmul.f32 %v2919, %v2922
    %v2931 = vadd.f32 %v2929, %v2930
    %v2932 = vtanh.pop %v2931
    %v2933 = vmul.f32 %v2928, %v2932
    %v2934 = vpack.c.bf16 %v2933, %v2933
    %v2935 = vpack.c.bf16 %v2649, %v2649
    %2936 = vmatprep.subr.bf16.mxu0 %v849
    %2937 = vmatpush1.bf16.msra.mxu0 %v848
    %2938 = vmatprep.subr.bf16.mxu0 %v853
    %2939 = vmatpush1.bf16.msra.mxu0 %v852
    %2940 = vmatprep.subr.bf16.mxu0 %v857
    %2941 = vmatpush1.bf16.msra.mxu0 %v856
    %2942 = vmatprep.subr.bf16.mxu0 %v861
    %2943 = vmatpush1.bf16.msra.mxu0 %v860
    %2944 = vmatprep.subr.bf16.mxu0 %v865
    %2945 = vmatpush1.bf16.msra.mxu0 %v864
    %2946 = vmatprep.subr.bf16.mxu0 %v869
    %2947 = vmatpush1.bf16.msra.mxu0 %v868
    %2948 = vmatprep.subr.bf16.mxu0 %v873
    %2949 = vmatpush1.bf16.msra.mxu0 %v872
    %2950 = vmatprep.subr.bf16.mxu0 %v877
    %2951 = vmatpush1.bf16.msra.mxu0 %v876
    %2952 = vmatprep.subr.bf16.mxu0 %v881
    %2953 = vmatpush1.bf16.msra.mxu0 %v880
    %2954 = vmatprep.subr.bf16.mxu0 %v885
    %2955 = vmatpush1.bf16.msra.mxu0 %v884
    %2956 = vmatprep.subr.bf16.mxu0 %v889
    %2957 = vmatpush1.bf16.msra.mxu0 %v888
    %2958 = vmatprep.subr.bf16.mxu0 %v893
    %2959 = vmatpush1.bf16.msra.mxu0 %v892
    %2960 = vmatprep.subr.bf16.mxu0 %v897
    %2961 = vmatpush1.bf16.msra.mxu0 %v896
    %2962 = vmatprep.subr.bf16.mxu0 %v901
    %2963 = vmatpush1.bf16.msra.mxu0 %v900
    %2964 = vmatprep.subr.bf16.mxu0 %v905
    %2965 = vmatpush1.bf16.msra.mxu0 %v904
    %2966 = vmatprep.subr.bf16.mxu0 %v909
    %2967 = vmatpush1.bf16.msra.mxu0 %v908
    %2968 = vmatprep.mubr.bf16.mxu0 %v2935
    %2969 = vmatmul.mubr.bf16.gmra.mrb[0].mxu0 %v2934
    %v2970 = vpop.f32.mrb[0].mxu0
    %v2971 = vadd.f32 %v639, %v2970
    %v2972 = vpop.f32.mrb[0].mxu0
    %v2973 = vadd.f32 %v643, %v2972
    %v2974 = vpop.f32.mrb[0].mxu0
    %v2975 = vpop.f32.mrb[0].mxu0
    %2976 = vdwg.mxu0
    %2977 = vmatprep.subr.bf16.mxu0 %v851
    %2978 = vmatpush1.bf16.msra.mxu0 %v850
    %2979 = vmatprep.subr.bf16.mxu0 %v855
    %2980 = vmatpush1.bf16.msra.mxu0 %v854
    %2981 = vmatprep.subr.bf16.mxu0 %v859
    %2982 = vmatpush1.bf16.msra.mxu0 %v858
    %2983 = vmatprep.subr.bf16.mxu0 %v863
    %2984 = vmatpush1.bf16.msra.mxu0 %v862
    %2985 = vmatprep.subr.bf16.mxu0 %v867
    %2986 = vmatpush1.bf16.msra.mxu0 %v866
    %2987 = vmatprep.subr.bf16.mxu0 %v871
    %2988 = vmatpush1.bf16.msra.mxu0 %v870
    %2989 = vmatprep.subr.bf16.mxu0 %v875
    %2990 = vmatpush1.bf16.msra.mxu0 %v874
    %2991 = vmatprep.subr.bf16.mxu0 %v879
    %2992 = vmatpush1.bf16.msra.mxu0 %v878
    %2993 = vmatprep.subr.bf16.mxu0 %v883
    %2994 = vmatpush1.bf16.msra.mxu0 %v882
    %2995 = vmatprep.subr.bf16.mxu0 %v887
    %2996 = vmatpush1.bf16.msra.mxu0 %v886
    %2997 = vmatprep.subr.bf16.mxu0 %v891
    %2998 = vmatpush1.bf16.msra.mxu0 %v890
    %2999 = vmatprep.subr.bf16.mxu0 %v895
    %3000 = vmatpush1.bf16.msra.mxu0 %v894
    %3001 = vmatprep.subr.bf16.mxu0 %v899
    %3002 = vmatpush1.bf16.msra.mxu0 %v898
    %3003 = vmatprep.subr.bf16.mxu0 %v903
    %3004 = vmatpush1.bf16.msra.mxu0 %v902
    %3005 = vmatprep.subr.bf16.mxu0 %v907
    %3006 = vmatpush1.bf16.msra.mxu0 %v906
    %3007 = vmatprep.subr.bf16.mxu0 %v911
    %3008 = vmatpush1.bf16.msra.mxu0 %v910
    %3009 = vmatprep.mubr.bf16.mxu0 %v2935
    %3010 = vmatmul.mubr.bf16.gmra.mrb[0].mxu0 %v2934
    %v3011 = vpop.f32.mrb[0].mxu0
    %v3012 = vadd.f32 %v647, %v3011
    %v3013 = vpop.f32.mrb[0].mxu0
    %v3014 = vadd.f32 %v651, %v3013
    %v3015 = vpop.f32.mrb[0].mxu0
    %v3016 = vpop.f32.mrb[0].mxu0
    %3017 = vdwg.mxu0
    %v3018 = vxor.u32 %v2971, 2147483648
    %v3019 = vxor.u32 %v2973, 2147483648
    %v3020 = vmul.f32 %v3018, 1.442695
    %v3021 = vpow.pop %v3020
    %v3022 = vmul.f32 %v3019, 1.442695
    %v3023 = vpow.pop %v3022
    %v3024 = vadd.f32 %v3021, 1.0
    %v3025 = vadd.f32 %v3023, 1.0
    %v3026 = vrcp.pop %v3024
    %v3027 = vmul.f32 1.0, %v3026
    %v3028 = vrcp.pop %v3025
    %v3029 = vmul.f32 1.0, %v3028
    %v3030 = vtanh.pop %v3012
    %v3031 = vxor.u32 %v3014, 2147483648
    %v3032 = vmul.f32 %v3031, 1.442695
    %v3033 = vpow.pop %v3032
    %v3034 = vadd.f32 %v3033, 1.0
    %v3035 = vrcp.pop %v3034
    %v3036 = vmul.f32 1.0, %v3035
    %v3037 = vmul.f32 %v3029, %v2647
    %v3038 = vmul.f32 %v3027, %v3030
    %v3039 = vadd.f32 %v3037, %v3038
    %v3040 = vtanh.pop %v3039
    %v3041 = vmul.f32 %v3036, %v3040
    %v3042 = vld [vmem:[%s0 + $0x6] sm:$0x1]
    %v3043 = vld [vmem:[%s0 + $0xe] sm:$0x1]
    %v3044 = vld [vmem:[%s0 + $0x16] sm:$0x1]
    %v3045 = vld [vmem:[%s0 + $0x1e] sm:$0x1]
    %v3046 = vld [vmem:[%s0 + $0x26] sm:$0x1]
    %v3047 = vld [vmem:[%s0 + $0x2e] sm:$0x1]
    %v3048 = vld [vmem:[%s0 + $0x36] sm:$0x1]
    %v3049 = vld [vmem:[%s0 + $0x3e] sm:$0x1]
    %3050 = vmatprep.subr.bf16.mxu0 %v199
    %3051 = vmatpush1.bf16.msra.mxu0 %v198
    %3052 = vmatprep.subr.bf16.mxu0 %v203
    %3053 = vmatpush1.bf16.msra.mxu0 %v202
    %3054 = vmatprep.subr.bf16.mxu0 %v207
    %3055 = vmatpush1.bf16.msra.mxu0 %v206
    %3056 = vmatprep.subr.bf16.mxu0 %v211
    %3057 = vmatpush1.bf16.msra.mxu0 %v210
    %3058 = vmatprep.subr.bf16.mxu0 %v215
    %3059 = vmatpush1.bf16.msra.mxu0 %v214
    %3060 = vmatprep.subr.bf16.mxu0 %v219
    %3061 = vmatpush1.bf16.msra.mxu0 %v218
    %3062 = vmatprep.subr.bf16.mxu0 %v223
    %3063 = vmatpush1.bf16.msra.mxu0 %v222
    %3064 = vmatprep.subr.bf16.mxu0 %v227
    %3065 = vmatpush1.bf16.msra.mxu0 %v226
    %3066 = vmatprep.subr.bf16.mxu0 0
    %3067 = vmatpush1.bf16.msra.mxu0 0
    %3068 = vmatprep.subr.bf16.mxu0 0
    %3069 = vmatpush1.bf16.msra.mxu0 0
    %3070 = vmatprep.subr.bf16.mxu0 0
    %3071 = vmatpush1.bf16.msra.mxu0 0
    %3072 = vmatprep.subr.bf16.mxu0 0
    %3073 = vmatpush1.bf16.msra.mxu0 0
    %3074 = vmatprep.subr.bf16.mxu0 0
    %3075 = vmatpush1.bf16.msra.mxu0 0
    %3076 = vmatprep.subr.bf16.mxu0 0
    %3077 = vmatpush1.bf16.msra.mxu0 0
    %3078 = vmatprep.subr.bf16.mxu0 0
    %3079 = vmatpush1.bf16.msra.mxu0 0
    %3080 = vmatprep.subr.bf16.mxu0 0
    %3081 = vmatpush1.bf16.msra.mxu0 0
    %3082 = vmatprep.mubr.bf16.mxu0 0
    %3083 = vmatmul.mubr.bf16.gmra.mrb[0].mxu0 %v2934
    %v3084 = vpop.f32.mrb[0].mxu0
    %v3085 = vadd.f32 0.0, %v3084
    %v3086 = vpop.f32.mrb[0].mxu0
    %v3087 = vadd.f32 0.0, %v3086
    %v3088 = vpop.f32.mrb[0].mxu0
    %v3089 = vpop.f32.mrb[0].mxu0
    %3090 = vdwg.mxu0
    %3091 = vmatprep.subr.bf16.mxu0 %v201
    %3092 = vmatpush1.bf16.msra.mxu0 %v200
    %3093 = vmatprep.subr.bf16.mxu0 %v205
    %3094 = vmatpush1.bf16.msra.mxu0 %v204
    %3095 = vmatprep.subr.bf16.mxu0 %v209
    %3096 = vmatpush1.bf16.msra.mxu0 %v208
    %3097 = vmatprep.subr.bf16.mxu0 %v213
    %3098 = vmatpush1.bf16.msra.mxu0 %v212
    %3099 = vmatprep.subr.bf16.mxu0 %v217
    %3100 = vmatpush1.bf16.msra.mxu0 %v216
    %3101 = vmatprep.subr.bf16.mxu0 %v221
    %3102 = vmatpush1.bf16.msra.mxu0 %v220
    %3103 = vmatprep.subr.bf16.mxu0 %v225
    %3104 = vmatpush1.bf16.msra.mxu0 %v224
    %3105 = vmatprep.subr.bf16.mxu0 %v229
    %3106 = vmatpush1.bf16.msra.mxu0 %v228
    %3107 = vmatprep.subr.bf16.mxu0 0
    %3108 = vmatpush1.bf16.msra.mxu0 0
    %3109 = vmatprep.subr.bf16.mxu0 0
    %3110 = vmatpush1.bf16.msra.mxu0 0
    %3111 = vmatprep.subr.bf16.mxu0 0
    %3112 = vmatpush1.bf16.msra.mxu0 0
    %3113 = vmatprep.subr.bf16.mxu0 0
    %3114 = vmatpush1.bf16.msra.mxu0 0
    %3115 = vmatprep.subr.bf16.mxu0 0
    %3116 = vmatpush1.bf16.msra.mxu0 0
    %3117 = vmatprep.subr.bf16.mxu0 0
    %3118 = vmatpush1.bf16.msra.mxu0 0
    %3119 = vmatprep.subr.bf16.mxu0 0
    %3120 = vmatpush1.bf16.msra.mxu0 0
    %3121 = vmatprep.subr.bf16.mxu0 0
    %3122 = vmatpush1.bf16.msra.mxu0 0
    %3123 = vmatprep.mubr.bf16.mxu0 0
    %3124 = vmatmul.mubr.bf16.gmra.mrb[0].mxu0 %v2934
    %v3125 = vpop.f32.mrb[0].mxu0
    %v3126 = vadd.f32 0.0, %v3125
    %v3127 = vpop.f32.mrb[0].mxu0
    %v3128 = vadd.f32 0.0, %v3127
    %v3129 = vpop.f32.mrb[0].mxu0
    %v3130 = vpop.f32.mrb[0].mxu0
    %3131 = vdwg.mxu0
    %v3140 = vrot.slane %v3043, 7
    %v3141 = vsel %vm353, %v3140, %v3042
    %v3142 = vrot.slane %v3044, 6
    %v3143 = vsel %vm356, %v3142, %v3141
    %v3144 = vrot.slane %v3045, 5
    %v3145 = vsel %vm359, %v3144, %v3143
    %v3146 = vrot.slane %v3046, 4
    %v3147 = vsel %vm362, %v3146, %v3145
    %v3148 = vrot.slane %v3047, 3
    %v3149 = vsel %vm365, %v3148, %v3147
    %v3150 = vrot.slane %v3048, 2
    %v3151 = vsel %vm368, %v3150, %v3149
    %v3152 = vrot.slane %v3049, 1
    %v3153 = vsel %vm371, %v3152, %v3151
    %v3154 = vsel %vm373, %v3153, 0
    %3156 = vmatprep.subr.mxu0 %v67
    %3157 = vmatpush1.msra.mxu0 %v66
    %3158 = vmatprep.subr.mxu0 0.0
    %3159 = vmatpush1.msra.mxu0 0.0
    %3160 = vmatprep.subr.mxu0 0.0
    %3161 = vmatpush1.msra.mxu0 0.0
    %3162 = vmatprep.subr.mxu0 0.0
    %3163 = vmatpush1.msra.mxu0 0.0
    %3164 = vmatprep.subr.mxu0 0.0
    %3165 = vmatpush1.msra.mxu0 0.0
    %3166 = vmatprep.subr.mxu0 0.0
    %3167 = vmatpush1.msra.mxu0 0.0
    %3168 = vmatprep.subr.mxu0 0.0
    %3169 = vmatpush1.msra.mxu0 0.0
    %3170 = vmatprep.subr.mxu0 0.0
    %3171 = vmatpush1.msra.mxu0 0.0
    %3172 = vmatprep.subr.mxu0 0.0
    %3173 = vmatpush1.msra.mxu0 0.0
    %3174 = vmatprep.subr.mxu0 0.0
    %3175 = vmatpush1.msra.mxu0 0.0
    %3176 = vmatprep.subr.mxu0 0.0
    %3177 = vmatpush1.msra.mxu0 0.0
    %3178 = vmatprep.subr.mxu0 0.0
    %3179 = vmatpush1.msra.mxu0 0.0
    %3180 = vmatprep.subr.mxu0 0.0
    %3181 = vmatpush1.msra.mxu0 0.0
    %3182 = vmatprep.subr.mxu0 0.0
    %3183 = vmatpush1.msra.mxu0 0.0
    %3184 = vmatprep.subr.mxu0 0.0
    %3185 = vmatpush1.msra.mxu0 0.0
    %3186 = vmatprep.subr.mxu0 0.0
    %3187 = vmatpush1.msra.mxu0 0.0
    %3188 = vmatprep.subr.mxu0 0.0
    %3189 = vmatpush1.msra.mxu0 0.0
    %3190 = vmatprep.subr.mxu0 0.0
    %3191 = vmatpush1.msra.mxu0 0.0
    %3192 = vmatprep.subr.mxu0 0.0
    %3193 = vmatpush1.msra.mxu0 0.0
    %3194 = vmatprep.subr.mxu0 0.0
    %3195 = vmatpush1.msra.mxu0 0.0
    %3196 = vmatprep.subr.mxu0 0.0
    %3197 = vmatpush1.msra.mxu0 0.0
    %3198 = vmatprep.subr.mxu0 0.0
    %3199 = vmatpush1.msra.mxu0 0.0
    %3200 = vmatprep.subr.mxu0 0.0
    %3201 = vmatpush1.msra.mxu0 0.0
    %3202 = vmatprep.subr.mxu0 0.0
    %3203 = vmatpush1.msra.mxu0 0.0
    %3204 = vmatprep.subr.mxu0 0.0
    %3205 = vmatpush1.msra.mxu0 0.0
    %3206 = vmatprep.subr.mxu0 0.0
    %3207 = vmatpush1.msra.mxu0 0.0
    %3208 = vmatprep.subr.mxu0 0.0
    %3209 = vmatpush1.msra.mxu0 0.0
    %3210 = vmatprep.subr.mxu0 0.0
    %3211 = vmatpush1.msra.mxu0 0.0
    %3212 = vmatprep.subr.mxu0 0.0
    %3213 = vmatpush1.msra.mxu0 0.0
    %3214 = vmatprep.subr.mxu0 0.0
    %3215 = vmatpush1.msra.mxu0 0.0
    %3216 = vmatprep.subr.mxu0 0.0
    %3217 = vmatpush1.msra.mxu0 0.0
    %3218 = vmatprep.subr.mxu0 0.0
    %3219 = vmatpush1.msra.mxu0 0.0
    %3220 = vmatprep.mubr.f32.mxu0 0.0
    %3221 = vmatmul.mubr.f32.gmra.mrb[0].mxu0 %v3154
    %v3222 = vpop.f32.mrb[0].mxu0
    %v3223 = vadd.f32 %v3085, %v3222
    %v3224 = vpop.f32.mrb[0].mxu0
    %v3225 = vadd.f32 %v3087, %v3224
    %3226 = vdwg.mxu0
    %3227 = vmatprep.subr.mxu0 %v69
    %3228 = vmatpush1.msra.mxu0 %v68
    %3229 = vmatprep.subr.mxu0 0.0
    %3230 = vmatpush1.msra.mxu0 0.0
    %3231 = vmatprep.subr.mxu0 0.0
    %3232 = vmatpush1.msra.mxu0 0.0
    %3233 = vmatprep.subr.mxu0 0.0
    %3234 = vmatpush1.msra.mxu0 0.0
    %3235 = vmatprep.subr.mxu0 0.0
    %3236 = vmatpush1.msra.mxu0 0.0
    %3237 = vmatprep.subr.mxu0 0.0
    %3238 = vmatpush1.msra.mxu0 0.0
    %3239 = vmatprep.subr.mxu0 0.0
    %3240 = vmatpush1.msra.mxu0 0.0
    %3241 = vmatprep.subr.mxu0 0.0
    %3242 = vmatpush1.msra.mxu0 0.0
    %3243 = vmatprep.subr.mxu0 0.0
    %3244 = vmatpush1.msra.mxu0 0.0
    %3245 = vmatprep.subr.mxu0 0.0
    %3246 = vmatpush1.msra.mxu0 0.0
    %3247 = vmatprep.subr.mxu0 0.0
    %3248 = vmatpush1.msra.mxu0 0.0
    %3249 = vmatprep.subr.mxu0 0.0
    %3250 = vmatpush1.msra.mxu0 0.0
    %3251 = vmatprep.subr.mxu0 0.0
    %3252 = vmatpush1.msra.mxu0 0.0
    %3253 = vmatprep.subr.mxu0 0.0
    %3254 = vmatpush1.msra.mxu0 0.0
    %3255 = vmatprep.subr.mxu0 0.0
    %3256 = vmatpush1.msra.mxu0 0.0
    %3257 = vmatprep.subr.mxu0 0.0
    %3258 = vmatpush1.msra.mxu0 0.0
    %3259 = vmatprep.subr.mxu0 0.0
    %3260 = vmatpush1.msra.mxu0 0.0
    %3261 = vmatprep.subr.mxu0 0.0
    %3262 = vmatpush1.msra.mxu0 0.0
    %3263 = vmatprep.subr.mxu0 0.0
    %3264 = vmatpush1.msra.mxu0 0.0
    %3265 = vmatprep.subr.mxu0 0.0
    %3266 = vmatpush1.msra.mxu0 0.0
    %3267 = vmatprep.subr.mxu0 0.0
    %3268 = vmatpush1.msra.mxu0 0.0
    %3269 = vmatprep.subr.mxu0 0.0
    %3270 = vmatpush1.msra.mxu0 0.0
    %3271 = vmatprep.subr.mxu0 0.0
    %3272 = vmatpush1.msra.mxu0 0.0
    %3273 = vmatprep.subr.mxu0 0.0
    %3274 = vmatpush1.msra.mxu0 0.0
    %3275 = vmatprep.subr.mxu0 0.0
    %3276 = vmatpush1.msra.mxu0 0.0
    %3277 = vmatprep.subr.mxu0 0.0
    %3278 = vmatpush1.msra.mxu0 0.0
    %3279 = vmatprep.subr.mxu0 0.0
    %3280 = vmatpush1.msra.mxu0 0.0
    %3281 = vmatprep.subr.mxu0 0.0
    %3282 = vmatpush1.msra.mxu0 0.0
    %3283 = vmatprep.subr.mxu0 0.0
    %3284 = vmatpush1.msra.mxu0 0.0
    %3285 = vmatprep.subr.mxu0 0.0
    %3286 = vmatpush1.msra.mxu0 0.0
    %3287 = vmatprep.subr.mxu0 0.0
    %3288 = vmatpush1.msra.mxu0 0.0
    %3289 = vmatprep.subr.mxu0 0.0
    %3290 = vmatpush1.msra.mxu0 0.0
    %3291 = vmatprep.mubr.f32.mxu0 0.0
    %3292 = vmatmul.mubr.f32.gmra.mrb[0].mxu0 %v3154
    %v3293 = vpop.f32.mrb[0].mxu0
    %v3294 = vadd.f32 %v3126, %v3293
    %v3295 = vpop.f32.mrb[0].mxu0
    %v3296 = vadd.f32 %v3128, %v3295
    %3297 = vdwg.mxu0
    %v3298 = vadd.f32 %v3223, %v523
    %v3299 = vadd.f32 %v3225, %v527
    %v3300 = vadd.f32 %v3294, %v531
    %v3301 = vadd.f32 %v3296, %v535
    %v3302 = vxor.u32 %v3298, 2147483648
    %v3303 = vxor.u32 %v3299, 2147483648
    %v3304 = vmul.f32 %v3302, 1.442695
    %v3305 = vpow.pop %v3304
    %v3306 = vmul.f32 %v3303, 1.442695
    %v3307 = vpow.pop %v3306
    %v3308 = vadd.f32 %v3305, 1.0
    %v3309 = vadd.f32 %v3307, 1.0
    %v3310 = vrcp.pop %v3308
    %v3311 = vmul.f32 1.0, %v3310
    %v3312 = vrcp.pop %v3309
    %v3313 = vmul.f32 1.0, %v3312
    %v3314 = vtanh.pop %v3300
    %v3315 = vxor.u32 %v3301, 2147483648
    %v3316 = vmul.f32 %v3315, 1.442695
    %v3317 = vpow.pop %v3316
    %v3318 = vadd.f32 %v3317, 1.0
    %v3319 = vrcp.pop %v3318
    %v3320 = vmul.f32 1.0, %v3319
    %v3321 = vmul.f32 %v3313, %v2931
    %v3322 = vmul.f32 %v3311, %v3314
    %v3323 = vadd.f32 %v3321, %v3322
    %v3324 = vtanh.pop %v3323
    %v3325 = vmul.f32 %v3320, %v3324
    %v3326 = vpack.c.bf16 %v3325, %v3325
    %v3327 = vpack.c.bf16 %v3041, %v3041
    %3328 = vmatprep.subr.bf16.mxu0 %v849
    %3329 = vmatpush1.bf16.msra.mxu0 %v848
    %3330 = vmatprep.subr.bf16.mxu0 %v853
    %3331 = vmatpush1.bf16.msra.mxu0 %v852
    %3332 = vmatprep.subr.bf16.mxu0 %v857
    %3333 = vmatpush1.bf16.msra.mxu0 %v856
    %3334 = vmatprep.subr.bf16.mxu0 %v861
    %3335 = vmatpush1.bf16.msra.mxu0 %v860
    %3336 = vmatprep.subr.bf16.mxu0 %v865
    %3337 = vmatpush1.bf16.msra.mxu0 %v864
    %3338 = vmatprep.subr.bf16.mxu0 %v869
    %3339 = vmatpush1.bf16.msra.mxu0 %v868
    %3340 = vmatprep.subr.bf16.mxu0 %v873
    %3341 = vmatpush1.bf16.msra.mxu0 %v872
    %3342 = vmatprep.subr.bf16.mxu0 %v877
    %3343 = vmatpush1.bf16.msra.mxu0 %v876
    %3344 = vmatprep.subr.bf16.mxu0 %v881
    %3345 = vmatpush1.bf16.msra.mxu0 %v880
    %3346 = vmatprep.subr.bf16.mxu0 %v885
    %3347 = vmatpush1.bf16.msra.mxu0 %v884
    %3348 = vmatprep.subr.bf16.mxu0 %v889
    %3349 = vmatpush1.bf16.msra.mxu0 %v888
    %3350 = vmatprep.subr.bf16.mxu0 %v893
    %3351 = vmatpush1.bf16.msra.mxu0 %v892
    %3352 = vmatprep.subr.bf16.mxu0 %v897
    %3353 = vmatpush1.bf16.msra.mxu0 %v896
    %3354 = vmatprep.subr.bf16.mxu0 %v901
    %3355 = vmatpush1.bf16.msra.mxu0 %v900
    %3356 = vmatprep.subr.bf16.mxu0 %v905
    %3357 = vmatpush1.bf16.msra.mxu0 %v904
    %3358 = vmatprep.subr.bf16.mxu0 %v909
    %3359 = vmatpush1.bf16.msra.mxu0 %v908
    %3360 = vmatprep.mubr.bf16.mxu0 %v3327
    %3361 = vmatmul.mubr.bf16.gmra.mrb[0].mxu0 %v3326
    %v3362 = vpop.f32.mrb[0].mxu0
    %v3363 = vadd.f32 %v639, %v3362
    %v3364 = vpop.f32.mrb[0].mxu0
    %v3365 = vadd.f32 %v643, %v3364
    %v3366 = vpop.f32.mrb[0].mxu0
    %v3367 = vpop.f32.mrb[0].mxu0
    %3368 = vdwg.mxu0
    %3369 = vmatprep.subr.bf16.mxu0 %v851
    %3370 = vmatpush1.bf16.msra.mxu0 %v850
    %3371 = vmatprep.subr.bf16.mxu0 %v855
    %3372 = vmatpush1.bf16.msra.mxu0 %v854
    %3373 = vmatprep.subr.bf16.mxu0 %v859
    %3374 = vmatpush1.bf16.msra.mxu0 %v858
    %3375 = vmatprep.subr.bf16.mxu0 %v863
    %3376 = vmatpush1.bf16.msra.mxu0 %v862
    %3377 = vmatprep.subr.bf16.mxu0 %v867
    %3378 = vmatpush1.bf16.msra.mxu0 %v866
    %3379 = vmatprep.subr.bf16.mxu0 %v871
    %3380 = vmatpush1.bf16.msra.mxu0 %v870
    %3381 = vmatprep.subr.bf16.mxu0 %v875
    %3382 = vmatpush1.bf16.msra.mxu0 %v874
    %3383 = vmatprep.subr.bf16.mxu0 %v879
    %3384 = vmatpush1.bf16.msra.mxu0 %v878
    %3385 = vmatprep.subr.bf16.mxu0 %v883
    %3386 = vmatpush1.bf16.msra.mxu0 %v882
    %3387 = vmatprep.subr.bf16.mxu0 %v887
    %3388 = vmatpush1.bf16.msra.mxu0 %v886
    %3389 = vmatprep.subr.bf16.mxu0 %v891
    %3390 = vmatpush1.bf16.msra.mxu0 %v890
    %3391 = vmatprep.subr.bf16.mxu0 %v895
    %3392 = vmatpush1.bf16.msra.mxu0 %v894
    %3393 = vmatprep.subr.bf16.mxu0 %v899
    %3394 = vmatpush1.bf16.msra.mxu0 %v898
    %3395 = vmatprep.subr.bf16.mxu0 %v903
    %3396 = vmatpush1.bf16.msra.mxu0 %v902
    %3397 = vmatprep.subr.bf16.mxu0 %v907
    %3398 = vmatpush1.bf16.msra.mxu0 %v906
    %3399 = vmatprep.subr.bf16.mxu0 %v911
    %3400 = vmatpush1.bf16.msra.mxu0 %v910
    %3401 = vmatprep.mubr.bf16.mxu0 %v3327
    %3402 = vmatmul.mubr.bf16.gmra.mrb[0].mxu0 %v3326
    %v3403 = vpop.f32.mrb[0].mxu0
    %v3404 = vadd.f32 %v647, %v3403
    %v3405 = vpop.f32.mrb[0].mxu0
    %v3406 = vadd.f32 %v651, %v3405
    %v3407 = vpop.f32.mrb[0].mxu0
    %v3408 = vpop.f32.mrb[0].mxu0
    %3409 = vdwg.mxu0
    %v3410 = vxor.u32 %v3363, 2147483648
    %v3411 = vxor.u32 %v3365, 2147483648
    %v3412 = vmul.f32 %v3410, 1.442695
    %v3413 = vpow.pop %v3412
    %v3414 = vmul.f32 %v3411, 1.442695
    %v3415 = vpow.pop %v3414
    %v3416 = vadd.f32 %v3413, 1.0
    %v3417 = vadd.f32 %v3415, 1.0
    %v3418 = vrcp.pop %v3416
    %v3419 = vmul.f32 1.0, %v3418
    %v3420 = vrcp.pop %v3417
    %v3421 = vmul.f32 1.0, %v3420
    %v3422 = vtanh.pop %v3404
    %v3423 = vxor.u32 %v3406, 2147483648
    %v3424 = vmul.f32 %v3423, 1.442695
    %v3425 = vpow.pop %v3424
    %v3426 = vadd.f32 %v3425, 1.0
    %v3427 = vrcp.pop %v3426
    %v3428 = vmul.f32 1.0, %v3427
    %v3429 = vmul.f32 %v3421, %v3039
    %v3430 = vmul.f32 %v3419, %v3422
    %v3431 = vadd.f32 %v3429, %v3430
    %v3432 = vtanh.pop %v3431
    %v3433 = vmul.f32 %v3428, %v3432
    %v3434 = vld [vmem:[%s0 + $0x7] sm:$0x1]
    %v3435 = vld [vmem:[%s0 + $0xf] sm:$0x1]
    %v3436 = vld [vmem:[%s0 + $0x17] sm:$0x1]
    %v3437 = vld [vmem:[%s0 + $0x1f] sm:$0x1]
    %v3438 = vld [vmem:[%s0 + $0x27] sm:$0x1]
    %v3439 = vld [vmem:[%s0 + $0x2f] sm:$0x1]
    %v3440 = vld [vmem:[%s0 + $0x37] sm:$0x1]
    %v3441 = vld [vmem:[%s0 + $0x3f] sm:$0x1]
    %3442 = vmatprep.subr.bf16.mxu0 %v199
    %3443 = vmatpush1.bf16.msra.mxu0 %v198
    %3444 = vmatprep.subr.bf16.mxu0 %v203
    %3445 = vmatpush1.bf16.msra.mxu0 %v202
    %3446 = vmatprep.subr.bf16.mxu0 %v207
    %3447 = vmatpush1.bf16.msra.mxu0 %v206
    %3448 = vmatprep.subr.bf16.mxu0 %v211
    %3449 = vmatpush1.bf16.msra.mxu0 %v210
    %3450 = vmatprep.subr.bf16.mxu0 %v215
    %3451 = vmatpush1.bf16.msra.mxu0 %v214
    %3452 = vmatprep.subr.bf16.mxu0 %v219
    %3453 = vmatpush1.bf16.msra.mxu0 %v218
    %3454 = vmatprep.subr.bf16.mxu0 %v223
    %3455 = vmatpush1.bf16.msra.mxu0 %v222
    %3456 = vmatprep.subr.bf16.mxu0 %v227
    %3457 = vmatpush1.bf16.msra.mxu0 %v226
    %3458 = vmatprep.subr.bf16.mxu0 0
    %3459 = vmatpush1.bf16.msra.mxu0 0
    %3460 = vmatprep.subr.bf16.mxu0 0
    %3461 = vmatpush1.bf16.msra.mxu0 0
    %3462 = vmatprep.subr.bf16.mxu0 0
    %3463 = vmatpush1.bf16.msra.mxu0 0
    %3464 = vmatprep.subr.bf16.mxu0 0
    %3465 = vmatpush1.bf16.msra.mxu0 0
    %3466 = vmatprep.subr.bf16.mxu0 0
    %3467 = vmatpush1.bf16.msra.mxu0 0
    %3468 = vmatprep.subr.bf16.mxu0 0
    %3469 = vmatpush1.bf16.msra.mxu0 0
    %3470 = vmatprep.subr.bf16.mxu0 0
    %3471 = vmatpush1.bf16.msra.mxu0 0
    %3472 = vmatprep.subr.bf16.mxu0 0
    %3473 = vmatpush1.bf16.msra.mxu0 0
    %3474 = vmatprep.mubr.bf16.mxu0 0
    %3475 = vmatmul.mubr.bf16.gmra.mrb[0].mxu0 %v3326
    %v3476 = vpop.f32.mrb[0].mxu0
    %v3477 = vadd.f32 0.0, %v3476
    %v3478 = vpop.f32.mrb[0].mxu0
    %v3479 = vadd.f32 0.0, %v3478
    %v3480 = vpop.f32.mrb[0].mxu0
    %v3481 = vpop.f32.mrb[0].mxu0
    %3482 = vdwg.mxu0
    %3483 = vmatprep.subr.bf16.mxu0 %v201
    %3484 = vmatpush1.bf16.msra.mxu0 %v200
    %3485 = vmatprep.subr.bf16.mxu0 %v205
    %3486 = vmatpush1.bf16.msra.mxu0 %v204
    %3487 = vmatprep.subr.bf16.mxu0 %v209
    %3488 = vmatpush1.bf16.msra.mxu0 %v208
    %3489 = vmatprep.subr.bf16.mxu0 %v213
    %3490 = vmatpush1.bf16.msra.mxu0 %v212
    %3491 = vmatprep.subr.bf16.mxu0 %v217
    %3492 = vmatpush1.bf16.msra.mxu0 %v216
    %3493 = vmatprep.subr.bf16.mxu0 %v221
    %3494 = vmatpush1.bf16.msra.mxu0 %v220
    %3495 = vmatprep.subr.bf16.mxu0 %v225
    %3496 = vmatpush1.bf16.msra.mxu0 %v224
    %3497 = vmatprep.subr.bf16.mxu0 %v229
    %3498 = vmatpush1.bf16.msra.mxu0 %v228
    %3499 = vmatprep.subr.bf16.mxu0 0
    %3500 = vmatpush1.bf16.msra.mxu0 0
    %3501 = vmatprep.subr.bf16.mxu0 0
    %3502 = vmatpush1.bf16.msra.mxu0 0
    %3503 = vmatprep.subr.bf16.mxu0 0
    %3504 = vmatpush1.bf16.msra.mxu0 0
    %3505 = vmatprep.subr.bf16.mxu0 0
    %3506 = vmatpush1.bf16.msra.mxu0 0
    %3507 = vmatprep.subr.bf16.mxu0 0
    %3508 = vmatpush1.bf16.msra.mxu0 0
    %3509 = vmatprep.subr.bf16.mxu0 0
    %3510 = vmatpush1.bf16.msra.mxu0 0
    %3511 = vmatprep.subr.bf16.mxu0 0
    %3512 = vmatpush1.bf16.msra.mxu0 0
    %3513 = vmatprep.subr.bf16.mxu0 0
    %3514 = vmatpush1.bf16.msra.mxu0 0
    %3515 = vmatprep.mubr.bf16.mxu0 0
    %3516 = vmatmul.mubr.bf16.gmra.mrb[0].mxu0 %v3326
    %v3517 = vpop.f32.mrb[0].mxu0
    %v3518 = vadd.f32 0.0, %v3517
    %v3519 = vpop.f32.mrb[0].mxu0
    %v3520 = vadd.f32 0.0, %v3519
    %v3521 = vpop.f32.mrb[0].mxu0
    %v3522 = vpop.f32.mrb[0].mxu0
    %3523 = vdwg.mxu0
    %v3532 = vrot.slane %v3435, 7
    %v3533 = vsel %vm353, %v3532, %v3434
    %v3534 = vrot.slane %v3436, 6
    %v3535 = vsel %vm356, %v3534, %v3533
    %v3536 = vrot.slane %v3437, 5
    %v3537 = vsel %vm359, %v3536, %v3535
    %v3538 = vrot.slane %v3438, 4
    %v3539 = vsel %vm362, %v3538, %v3537
    %v3540 = vrot.slane %v3439, 3
    %v3541 = vsel %vm365, %v3540, %v3539
    %v3542 = vrot.slane %v3440, 2
    %v3543 = vsel %vm368, %v3542, %v3541
    %v3544 = vrot.slane %v3441, 1
    %v3545 = vsel %vm371, %v3544, %v3543
    %v3546 = vsel %vm373, %v3545, 0
    %3548 = vmatprep.subr.mxu0 %v67
    %3549 = vmatpush1.msra.mxu0 %v66
    %3550 = vmatprep.subr.mxu0 0.0
    %3551 = vmatpush1.msra.mxu0 0.0
    %3552 = vmatprep.subr.mxu0 0.0
    %3553 = vmatpush1.msra.mxu0 0.0
    %3554 = vmatprep.subr.mxu0 0.0
    %3555 = vmatpush1.msra.mxu0 0.0
    %3556 = vmatprep.subr.mxu0 0.0
    %3557 = vmatpush1.msra.mxu0 0.0
    %3558 = vmatprep.subr.mxu0 0.0
    %3559 = vmatpush1.msra.mxu0 0.0
    %3560 = vmatprep.subr.mxu0 0.0
    %3561 = vmatpush1.msra.mxu0 0.0
    %3562 = vmatprep.subr.mxu0 0.0
    %3563 = vmatpush1.msra.mxu0 0.0
    %3564 = vmatprep.subr.mxu0 0.0
    %3565 = vmatpush1.msra.mxu0 0.0
    %3566 = vmatprep.subr.mxu0 0.0
    %3567 = vmatpush1.msra.mxu0 0.0
    %3568 = vmatprep.subr.mxu0 0.0
    %3569 = vmatpush1.msra.mxu0 0.0
    %3570 = vmatprep.subr.mxu0 0.0
    %3571 = vmatpush1.msra.mxu0 0.0
    %3572 = vmatprep.subr.mxu0 0.0
    %3573 = vmatpush1.msra.mxu0 0.0
    %3574 = vmatprep.subr.mxu0 0.0
    %3575 = vmatpush1.msra.mxu0 0.0
    %3576 = vmatprep.subr.mxu0 0.0
    %3577 = vmatpush1.msra.mxu0 0.0
    %3578 = vmatprep.subr.mxu0 0.0
    %3579 = vmatpush1.msra.mxu0 0.0
    %3580 = vmatprep.subr.mxu0 0.0
    %3581 = vmatpush1.msra.mxu0 0.0
    %3582 = vmatprep.subr.mxu0 0.0
    %3583 = vmatpush1.msra.mxu0 0.0
    %3584 = vmatprep.subr.mxu0 0.0
    %3585 = vmatpush1.msra.mxu0 0.0
    %3586 = vmatprep.subr.mxu0 0.0
    %3587 = vmatpush1.msra.mxu0 0.0
    %3588 = vmatprep.subr.mxu0 0.0
    %3589 = vmatpush1.msra.mxu0 0.0
    %3590 = vmatprep.subr.mxu0 0.0
    %3591 = vmatpush1.msra.mxu0 0.0
    %3592 = vmatprep.subr.mxu0 0.0
    %3593 = vmatpush1.msra.mxu0 0.0
    %3594 = vmatprep.subr.mxu0 0.0
    %3595 = vmatpush1.msra.mxu0 0.0
    %3596 = vmatprep.subr.mxu0 0.0
    %3597 = vmatpush1.msra.mxu0 0.0
    %3598 = vmatprep.subr.mxu0 0.0
    %3599 = vmatpush1.msra.mxu0 0.0
    %3600 = vmatprep.subr.mxu0 0.0
    %3601 = vmatpush1.msra.mxu0 0.0
    %3602 = vmatprep.subr.mxu0 0.0
    %3603 = vmatpush1.msra.mxu0 0.0
    %3604 = vmatprep.subr.mxu0 0.0
    %3605 = vmatpush1.msra.mxu0 0.0
    %3606 = vmatprep.subr.mxu0 0.0
    %3607 = vmatpush1.msra.mxu0 0.0
    %3608 = vmatprep.subr.mxu0 0.0
    %3609 = vmatpush1.msra.mxu0 0.0
    %3610 = vmatprep.subr.mxu0 0.0
    %3611 = vmatpush1.msra.mxu0 0.0
    %3612 = vmatprep.mubr.f32.mxu0 0.0
    %3613 = vmatmul.mubr.f32.gmra.mrb[0].mxu0 %v3546
    %v3614 = vpop.f32.mrb[0].mxu0
    %v3615 = vadd.f32 %v3477, %v3614
    %v3616 = vpop.f32.mrb[0].mxu0
    %v3617 = vadd.f32 %v3479, %v3616
    %3618 = vdwg.mxu0
    %3619 = vmatprep.subr.mxu0 %v69
    %3620 = vmatpush1.msra.mxu0 %v68
    %3621 = vmatprep.subr.mxu0 0.0
    %3622 = vmatpush1.msra.mxu0 0.0
    %3623 = vmatprep.subr.mxu0 0.0
    %3624 = vmatpush1.msra.mxu0 0.0
    %3625 = vmatprep.subr.mxu0 0.0
    %3626 = vmatpush1.msra.mxu0 0.0
    %3627 = vmatprep.subr.mxu0 0.0
    %3628 = vmatpush1.msra.mxu0 0.0
    %3629 = vmatprep.subr.mxu0 0.0
    %3630 = vmatpush1.msra.mxu0 0.0
    %3631 = vmatprep.subr.mxu0 0.0
    %3632 = vmatpush1.msra.mxu0 0.0
    %3633 = vmatprep.subr.mxu0 0.0
    %3634 = vmatpush1.msra.mxu0 0.0
    %3635 = vmatprep.subr.mxu0 0.0
    %3636 = vmatpush1.msra.mxu0 0.0
    %3637 = vmatprep.subr.mxu0 0.0
    %3638 = vmatpush1.msra.mxu0 0.0
    %3639 = vmatprep.subr.mxu0 0.0
    %3640 = vmatpush1.msra.mxu0 0.0
    %3641 = vmatprep.subr.mxu0 0.0
    %3642 = vmatpush1.msra.mxu0 0.0
    %3643 = vmatprep.subr.mxu0 0.0
    %3644 = vmatpush1.msra.mxu0 0.0
    %3645 = vmatprep.subr.mxu0 0.0
    %3646 = vmatpush1.msra.mxu0 0.0
    %3647 = vmatprep.subr.mxu0 0.0
    %3648 = vmatpush1.msra.mxu0 0.0
    %3649 = vmatprep.subr.mxu0 0.0
    %3650 = vmatpush1.msra.mxu0 0.0
    %3651 = vmatprep.subr.mxu0 0.0
    %3652 = vmatpush1.msra.mxu0 0.0
    %3653 = vmatprep.subr.mxu0 0.0
    %3654 = vmatpush1.msra.mxu0 0.0
    %3655 = vmatprep.subr.mxu0 0.0
    %3656 = vmatpush1.msra.mxu0 0.0
    %3657 = vmatprep.subr.mxu0 0.0
    %3658 = vmatpush1.msra.mxu0 0.0
    %3659 = vmatprep.subr.mxu0 0.0
    %3660 = vmatpush1.msra.mxu0 0.0
    %3661 = vmatprep.subr.mxu0 0.0
    %3662 = vmatpush1.msra.mxu0 0.0
    %3663 = vmatprep.subr.mxu0 0.0
    %3664 = vmatpush1.msra.mxu0 0.0
    %3665 = vmatprep.subr.mxu0 0.0
    %3666 = vmatpush1.msra.mxu0 0.0
    %3667 = vmatprep.subr.mxu0 0.0
    %3668 = vmatpush1.msra.mxu0 0.0
    %3669 = vmatprep.subr.mxu0 0.0
    %3670 = vmatpush1.msra.mxu0 0.0
    %3671 = vmatprep.subr.mxu0 0.0
    %3672 = vmatpush1.msra.mxu0 0.0
    %3673 = vmatprep.subr.mxu0 0.0
    %3674 = vmatpush1.msra.mxu0 0.0
    %3675 = vmatprep.subr.mxu0 0.0
    %3676 = vmatpush1.msra.mxu0 0.0
    %3677 = vmatprep.subr.mxu0 0.0
    %3678 = vmatpush1.msra.mxu0 0.0
    %3679 = vmatprep.subr.mxu0 0.0
    %3680 = vmatpush1.msra.mxu0 0.0
    %3681 = vmatprep.subr.mxu0 0.0
    %3682 = vmatpush1.msra.mxu0 0.0
    %3683 = vmatprep.mubr.f32.mxu0 0.0
    %3684 = vmatmul.mubr.f32.gmra.mrb[0].mxu0 %v3546
    %v3685 = vpop.f32.mrb[0].mxu0
    %v3686 = vadd.f32 %v3518, %v3685
    %v3687 = vpop.f32.mrb[0].mxu0
    %v3688 = vadd.f32 %v3520, %v3687
    %3689 = vdwg.mxu0
    %v3690 = vadd.f32 %v3615, %v523
    %v3691 = vadd.f32 %v3617, %v527
    %v3692 = vadd.f32 %v3686, %v531
    %v3693 = vadd.f32 %v3688, %v535
    %v3694 = vxor.u32 %v3690, 2147483648
    %v3695 = vxor.u32 %v3691, 2147483648
    %v3696 = vmul.f32 %v3694, 1.442695
    %v3697 = vpow.pop %v3696
    %v3698 = vmul.f32 %v3695, 1.442695
    %v3699 = vpow.pop %v3698
    %v3700 = vadd.f32 %v3697, 1.0
    %v3701 = vadd.f32 %v3699, 1.0
    %v3702 = vrcp.pop %v3700
    %v3703 = vmul.f32 1.0, %v3702
    %v3704 = vrcp.pop %v3701
    %v3705 = vmul.f32 1.0, %v3704
    %v3706 = vtanh.pop %v3692
    %v3707 = vxor.u32 %v3693, 2147483648
    %v3708 = vmul.f32 %v3707, 1.442695
    %v3709 = vpow.pop %v3708
    %v3710 = vadd.f32 %v3709, 1.0
    %v3711 = vrcp.pop %v3710
    %v3712 = vmul.f32 1.0, %v3711
    %v3713 = vmul.f32 %v3705, %v3323
    %v3714 = vmul.f32 %v3703, %v3706
    %v3715 = vadd.f32 %v3713, %v3714
    %v3716 = vtanh.pop %v3715
    %v3717 = vmul.f32 %v3712, %v3716
    %v3718 = vpack.c.bf16 %v3717, %v3717
    %v3719 = vpack.c.bf16 %v3433, %v3433
    %3720 = vmatprep.subr.bf16.mxu0 %v849
    %3721 = vmatpush1.bf16.msra.mxu0 %v848
    %3722 = vmatprep.subr.bf16.mxu0 %v853
    %3723 = vmatpush1.bf16.msra.mxu0 %v852
    %3724 = vmatprep.subr.bf16.mxu0 %v857
    %3725 = vmatpush1.bf16.msra.mxu0 %v856
    %3726 = vmatprep.subr.bf16.mxu0 %v861
    %3727 = vmatpush1.bf16.msra.mxu0 %v860
    %3728 = vmatprep.subr.bf16.mxu0 %v865
    %3729 = vmatpush1.bf16.msra.mxu0 %v864
    %3730 = vmatprep.subr.bf16.mxu0 %v869
    %3731 = vmatpush1.bf16.msra.mxu0 %v868
    %3732 = vmatprep.subr.bf16.mxu0 %v873
    %3733 = vmatpush1.bf16.msra.mxu0 %v872
    %3734 = vmatprep.subr.bf16.mxu0 %v877
    %3735 = vmatpush1.bf16.msra.mxu0 %v876
    %3736 = vmatprep.subr.bf16.mxu0 %v881
    %3737 = vmatpush1.bf16.msra.mxu0 %v880
    %3738 = vmatprep.subr.bf16.mxu0 %v885
    %3739 = vmatpush1.bf16.msra.mxu0 %v884
    %3740 = vmatprep.subr.bf16.mxu0 %v889
    %3741 = vmatpush1.bf16.msra.mxu0 %v888
    %3742 = vmatprep.subr.bf16.mxu0 %v893
    %3743 = vmatpush1.bf16.msra.mxu0 %v892
    %3744 = vmatprep.subr.bf16.mxu0 %v897
    %3745 = vmatpush1.bf16.msra.mxu0 %v896
    %3746 = vmatprep.subr.bf16.mxu0 %v901
    %3747 = vmatpush1.bf16.msra.mxu0 %v900
    %3748 = vmatprep.subr.bf16.mxu0 %v905
    %3749 = vmatpush1.bf16.msra.mxu0 %v904
    %3750 = vmatprep.subr.bf16.mxu0 %v909
    %3751 = vmatpush1.bf16.msra.mxu0 %v908
    %3752 = vmatprep.mubr.bf16.mxu0 %v3719
    %3753 = vmatmul.mubr.bf16.gmra.mrb[0].mxu0 %v3718
    %v3754 = vpop.f32.mrb[0].mxu0
    %v3755 = vadd.f32 %v639, %v3754
    %v3756 = vpop.f32.mrb[0].mxu0
    %v3757 = vadd.f32 %v643, %v3756
    %v3758 = vpop.f32.mrb[0].mxu0
    %v3759 = vpop.f32.mrb[0].mxu0
    %3760 = vdwg.mxu0
    %3761 = vmatprep.subr.bf16.mxu0 %v851
    %3762 = vmatpush1.bf16.msra.mxu0 %v850
    %3763 = vmatprep.subr.bf16.mxu0 %v855
    %3764 = vmatpush1.bf16.msra.mxu0 %v854
    %3765 = vmatprep.subr.bf16.mxu0 %v859
    %3766 = vmatpush1.bf16.msra.mxu0 %v858
    %3767 = vmatprep.subr.bf16.mxu0 %v863
    %3768 = vmatpush1.bf16.msra.mxu0 %v862
    %3769 = vmatprep.subr.bf16.mxu0 %v867
    %3770 = vmatpush1.bf16.msra.mxu0 %v866
    %3771 = vmatprep.subr.bf16.mxu0 %v871
    %3772 = vmatpush1.bf16.msra.mxu0 %v870
    %3773 = vmatprep.subr.bf16.mxu0 %v875
    %3774 = vmatpush1.bf16.msra.mxu0 %v874
    %3775 = vmatprep.subr.bf16.mxu0 %v879
    %3776 = vmatpush1.bf16.msra.mxu0 %v878
    %3777 = vmatprep.subr.bf16.mxu0 %v883
    %3778 = vmatpush1.bf16.msra.mxu0 %v882
    %3779 = vmatprep.subr.bf16.mxu0 %v887
    %3780 = vmatpush1.bf16.msra.mxu0 %v886
    %3781 = vmatprep.subr.bf16.mxu0 %v891
    %3782 = vmatpush1.bf16.msra.mxu0 %v890
    %3783 = vmatprep.subr.bf16.mxu0 %v895
    %3784 = vmatpush1.bf16.msra.mxu0 %v894
    %3785 = vmatprep.subr.bf16.mxu0 %v899
    %3786 = vmatpush1.bf16.msra.mxu0 %v898
    %3787 = vmatprep.subr.bf16.mxu0 %v903
    %3788 = vmatpush1.bf16.msra.mxu0 %v902
    %3789 = vmatprep.subr.bf16.mxu0 %v907
    %3790 = vmatpush1.bf16.msra.mxu0 %v906
    %3791 = vmatprep.subr.bf16.mxu0 %v911
    %3792 = vmatpush1.bf16.msra.mxu0 %v910
    %3793 = vmatprep.mubr.bf16.mxu0 %v3719
    %3794 = vmatmul.mubr.bf16.gmra.mrb[0].mxu0 %v3718
    %v3795 = vpop.f32.mrb[0].mxu0
    %v3796 = vadd.f32 %v647, %v3795
    %v3797 = vpop.f32.mrb[0].mxu0
    %v3798 = vadd.f32 %v651, %v3797
    %v3799 = vpop.f32.mrb[0].mxu0
    %v3800 = vpop.f32.mrb[0].mxu0
    %3801 = vdwg.mxu0
    %v3802 = vxor.u32 %v3755, 2147483648
    %v3803 = vxor.u32 %v3757, 2147483648
    %v3804 = vmul.f32 %v3802, 1.442695
    %v3805 = vpow.pop %v3804
    %v3806 = vmul.f32 %v3803, 1.442695
    %v3807 = vpow.pop %v3806
    %v3808 = vadd.f32 %v3805, 1.0
    %v3809 = vadd.f32 %v3807, 1.0
    %v3810 = vrcp.pop %v3808
    %v3811 = vmul.f32 1.0, %v3810
    %v3812 = vrcp.pop %v3809
    %v3813 = vmul.f32 1.0, %v3812
    %v3814 = vtanh.pop %v3796
    %v3815 = vxor.u32 %v3798, 2147483648
    %v3816 = vmul.f32 %v3815, 1.442695
    %v3817 = vpow.pop %v3816
    %v3818 = vadd.f32 %v3817, 1.0
    %v3819 = vrcp.pop %v3818
    %v3820 = vmul.f32 1.0, %v3819
    %v3821 = vmul.f32 %v3813, %v3431
    %v3822 = vmul.f32 %v3811, %v3814
    %v3823 = vadd.f32 %v3821, %v3822
    %v3824 = vtanh.pop %v3823
    %v3825 = vmul.f32 %v3820, %v3824
    %v3826 = vpack.c.bf16 %v3825, %v3825
    %v3827 = vld [vmem:[%s6] sm:$0xf]
    %v3828 = vld [vmem:[%s6 + $0x4] sm:$0xf]
    %v3829 = vld [vmem:[%s6 + $0x8] sm:$0xf]
    %v3830 = vld [vmem:[%s6 + $0xc] sm:$0xf]
    %v3831 = vld [vmem:[%s6 + $0x10] sm:$0xf]
    %v3832 = vld [vmem:[%s6 + $0x14] sm:$0xf]
    %v3833 = vld [vmem:[%s6 + $0x18] sm:$0xf]
    %v3834 = vld [vmem:[%s6 + $0x1c] sm:$0xf]
    %v3835 = vld [vmem:[%s6 + $0x20] sm:$0xf]
    %v3836 = vld [vmem:[%s6 + $0x24] sm:$0xf]
    %v3837 = vld [vmem:[%s6 + $0x28] sm:$0xf]
    %v3838 = vld [vmem:[%s6 + $0x2c] sm:$0xf]
    %v3839 = vld [vmem:[%s6 + $0x30] sm:$0xf]
    %v3840 = vld [vmem:[%s6 + $0x34] sm:$0xf]
    %v3841 = vld [vmem:[%s6 + $0x38] sm:$0xf]
    %v3842 = vld [vmem:[%s6 + $0x3c] sm:$0xf]
    %v3843 = vld [vmem:[%s7] sm:$0x1]
    %v3845 = vlaneseq
    %v3846 = vshrl.u32 %v3845, 7
    %v3847 = vsub.s32 0, %v3846
    %v3848 = vrot.slane %v3843, %v3847
    %v3866 = vunpack.c.l.b16 %v3827
    %v3867 = vunpack.c.l.b16 %v3828
    %v3868 = vunpack.c.l.b16 %v3829
    %v3869 = vunpack.c.l.b16 %v3830
    %v3870 = vunpack.c.l.b16 %v3831
    %v3871 = vunpack.c.l.b16 %v3832
    %v3872 = vunpack.c.l.b16 %v3833
    %v3873 = vunpack.c.l.b16 %v3834
    %v3874 = vunpack.c.l.b16 %v3835
    %v3875 = vunpack.c.l.b16 %v3836
    %v3876 = vunpack.c.l.b16 %v3837
    %v3877 = vunpack.c.l.b16 %v3838
    %v3878 = vunpack.c.l.b16 %v3839
    %v3879 = vunpack.c.l.b16 %v3840
    %v3880 = vunpack.c.l.b16 %v3841
    %v3881 = vunpack.c.l.b16 %v3842
    %v3882 = vpack.c.b16 %v3867, %v3866
    %v3883 = vpack.c.b16 %v3869, %v3868
    %v3884 = vpack.c.b16 %v3871, %v3870
    %v3885 = vpack.c.b16 %v3873, %v3872
    %v3886 = vpack.c.b16 %v3875, %v3874
    %v3887 = vpack.c.b16 %v3877, %v3876
    %v3888 = vpack.c.b16 %v3879, %v3878
    %v3889 = vpack.c.b16 %v3881, %v3880
    %3898 = vmatprep.subr.bf16.mxu0 0
    %3899 = vmatpush1.bf16.msra.mxu0 %v3882
    %3900 = vmatprep.subr.bf16.mxu0 0
    %3901 = vmatpush1.bf16.msra.mxu0 %v3883
    %3902 = vmatprep.subr.bf16.mxu0 0
    %3903 = vmatpush1.bf16.msra.mxu0 %v3884
    %3904 = vmatprep.subr.bf16.mxu0 0
    %3905 = vmatpush1.bf16.msra.mxu0 %v3885
    %3906 = vmatprep.subr.bf16.mxu0 0
    %3907 = vmatpush1.bf16.msra.mxu0 %v3886
    %3908 = vmatprep.subr.bf16.mxu0 0
    %3909 = vmatpush1.bf16.msra.mxu0 %v3887
    %3910 = vmatprep.subr.bf16.mxu0 0
    %3911 = vmatpush1.bf16.msra.mxu0 %v3888
    %3912 = vmatprep.subr.bf16.mxu0 0
    %3913 = vmatpush1.bf16.msra.mxu0 %v3889
    %3914 = vmatprep.subr.bf16.mxu0 0
    %3915 = vmatpush1.bf16.msra.mxu0 0
    %3916 = vmatprep.subr.bf16.mxu0 0
    %3917 = vmatpush1.bf16.msra.mxu0 0
    %3918 = vmatprep.subr.bf16.mxu0 0
    %3919 = vmatpush1.bf16.msra.mxu0 0
    %3920 = vmatprep.subr.bf16.mxu0 0
    %3921 = vmatpush1.bf16.msra.mxu0 0
    %3922 = vmatprep.subr.bf16.mxu0 0
    %3923 = vmatpush1.bf16.msra.mxu0 0
    %3924 = vmatprep.subr.bf16.mxu0 0
    %3925 = vmatpush1.bf16.msra.mxu0 0
    %3926 = vmatprep.subr.bf16.mxu0 0
    %3927 = vmatpush1.bf16.msra.mxu0 0
    %3928 = vmatprep.subr.bf16.mxu0 0
    %3929 = vmatpush1.bf16.msra.mxu0 0
    %3930 = vmatprep.mubr.bf16.mxu0 0
    %3931 = vmatmul.mubr.bf16.gmra.mrb[0].mxu0 %v3826
    %v3932 = vpop.f32.mrb[0].mxu0
    %v3933 = vadd.f32 %v3848, %v3932
    %v3934 = vpop.f32.mrb[0].mxu0
    %v3935 = vpop.f32.mrb[0].mxu0
    %v3936 = vpop.f32.mrb[0].mxu0
    %3937 = vdwg.mxu0
    %3938 = vst [vmem:[%s8] sm:$0xff] %v3933
    // Predicated region
    $region42: #{lstm_model_forward.1} parent=1 // pred_check
      _
    $region43: #{lstm_model_forward.1} parent=1 // pred_check_branch
      %3940 = sbr.rel (0) target = $region45
    $region44: #{lstm_model_forward.1} parent=1 // pred_region
      _
    $region45: #{lstm_model_forward.1} parent=1 // pred_fallthru
      _
    // Predicated region
    $region46: #{lstm_model_forward.1} parent=1 // pred_check
      _
    $region47: #{lstm_model_forward.1} parent=1 // pred_check_branch
      %3942 = sbr.rel (0) target = $region49
    $region48: #{lstm_model_forward.1} parent=1 // pred_region
      _
    $region49: #{lstm_model_forward.1} parent=1 // pred_fallthru
      _
    %3943 = vsyncpa [#allocation3], 1
    %3944 = vsyncpa [#allocation5], 1

</llo_original>
